<compile_context>
chip_gen: v6e
topology: v6e:2x2x1
jax: 0.10.0
libtpu: 0.0.40
codegen_flags: <defaults>
</compile_context>

<pallas_src>
import jax
import jax.numpy as jnp
import jax.scipy.linalg as jsl
from jax.experimental import pallas as pl
from jax.experimental.pallas import tpu as pltpu

TAU = 2.0        # LIF membrane time constant
V_TH = 0.5       # LIF threshold
BN_EPS = 1e-5

LANE = 128       # TPU lane width; channel / memory dims are padded to this
LAG = 128        # padded lag depth of the causal-conv contraction (needs N <= LAG)


# ----------------------------------------------------------------------------
# Pallas kernel: BN -> LIF -> LMU cell (causal conv via one MXU pass) -> LIF
#                -> 1x1 conv (proj_bn folded in),  for one batch tile.
# Layout inside the kernel is time-major: rows are ordered (t, b).
# ----------------------------------------------------------------------------
def slmu_kernel(x_ref,      # (N, tb, Cp)  time-major, lane-padded input
                bn1s_ref,   # (1, Cp)      prev_bn folded scale
                bn1b_ref,   # (1, Cp)      prev_bn folded bias
                wu_ref,     # (1, Cp)      LMU W_u row
                bu_ref,     # (1, 1) SMEM  LMU b_u scalar
                ht_ref,     # (LAG, Mp)    H^T (bf16), rows >= N zero-padded
                whx_ref,    # (Cp, Cp)     W_h x-part, transposed, bf16
                whm_ref,    # (Mp, Cp)     W_h memory-part, transposed, bf16
                bh_ref,     # (1, Cp)      LMU b_h
                wp_ref,     # (Cp, Cp)     proj_conv weight^T with proj_bn folded, bf16
                bp_ref,     # (1, Cp)      proj_conv bias with proj_bn folded
                out_ref,    # (N, tb, Cp)  output block
                loss_ref,   # (1, 1, LANE) act_loss (lane row; 512 B store)
                xsp_ref,    # (N, tb, Cp)  bf16 scratch: prev_lif spikes (reused for f_h spikes)
                u_ref,      # (N, tb, LAG) bf16 scratch: reversed-prefix u-spike rows
                hpre_ref):  # (N, tb, Cp)  f32 scratch: hidden pre-activation
    f32 = jnp.float32
    bf16 = jnp.bfloat16
    N, tb, Cp = x_ref.shape
    lag = u_ref.shape[2]
    inv_tau = 1.0 / TAU

    # Grid-invariant operands: hoist loads + broadcasts out of the time loops
    # (JAX does not CSE broadcast_in_dim).
    bn1s = jnp.broadcast_to(bn1s_ref[...], (tb, Cp))
    bn1b = jnp.broadcast_to(bn1b_ref[...], (tb, Cp))
    wu = jnp.broadcast_to(wu_ref[...], (tb, Cp))
    bu = bu_ref[0, 0]                                            # SMEM scalar
    lane_idx = jax.lax.broadcasted_iota(jnp.int32, (tb, lag), 1)

    # ---- fused pass 1+2: prev_bn -> prev_lif, u = W_u x_spk + b_u -> f_u LIF,
    #      incremental Toeplitz (reversed-prefix) rows.  Spikes go straight to
    #      VMEM scratch; only the LIF state is carried (bounded vreg pressure).
    def step12(t, carry):
        v1, v2, rev, act = carry
        xt = x_ref[t] * bn1s + bn1b                              # prev_bn (eval mode)
        v1 = v1 + (xt - v1) * inv_tau
        sp1 = (v1 >= V_TH).astype(f32)
        v1 = v1 * (1.0 - sp1)                                    # hard reset to 0
        xsp_ref[t] = sp1.astype(bf16)                            # spikes exact in bf16
        act = act + sp1
        u_t = jnp.sum(sp1 * wu, axis=-1, keepdims=True) + bu     # (tb, 1)
        v2 = v2 + (u_t - v2) * inv_tau
        sp2 = (v2 >= V_TH).astype(f32)
        v2 = v2 * (1.0 - sp2)
        # rev[b, k] = u_spk[b, t-k] for k <= t else 0 (valid while N <= lag)
        rev = jnp.where(lane_idx == 0, sp2, pltpu.roll(rev, shift=1, axis=1))
        u_ref[t] = rev.astype(bf16)
        return v1, v2, rev, act

    init12 = (jnp.zeros((tb, Cp), f32), jnp.zeros((tb, 1), f32),
              jnp.zeros((tb, lag), f32), jnp.zeros((tb, Cp), f32))
    _, _, _, act = jax.lax.fori_loop(0, N, step12, init12, unroll=True)
    # act_loss = sum(|prev_lif spikes|); padded lanes never spike (bn scale/bias = 0).
    loss_ref[...] = jnp.full(loss_ref.shape, jnp.sum(act), f32)

    # ---- LTI memory + hidden projection: three bf16 MXU dots, f32 accumulation ----
    xsp = xsp_ref[...].reshape(N * tb, Cp)                       # bf16 0/1 spikes
    U = u_ref[...].reshape(N * tb, lag)                          # bf16 0/1 Toeplitz rows
    # m[b, t, :] = sum_{k<=t} u_spk[b, t-k] * H[:, k]  as a single contraction
    m2d = jnp.dot(U, ht_ref[...], preferred_element_type=f32)    # (N*tb, Mp)
    h_pre = (jnp.dot(xsp, whx_ref[...], preferred_element_type=f32)
             + jnp.dot(m2d.astype(bf16), whm_ref[...], preferred_element_type=f32)
             + bh_ref[...])
    hpre_ref[...] = h_pre.reshape(N, tb, Cp)

    # ---- pass 3: hidden LIF (f_h); spikes overwrite the xsp scratch (already consumed) ----
    def step3(t, v3):
        v3 = v3 + (hpre_ref[t] - v3) * inv_tau
        sp3 = (v3 >= V_TH).astype(f32)
        v3 = v3 * (1.0 - sp3)
        xsp_ref[t] = sp3.astype(bf16)
        return v3

    jax.lax.fori_loop(0, N, step3, jnp.zeros((tb, Cp), f32), unroll=True)

    # ---- proj_conv (1x1 conv == per-position matmul); proj_bn is folded into wp/bp ----
    hsp = xsp_ref[...].reshape(N * tb, Cp)
    y = jnp.dot(hsp, wp_ref[...], preferred_element_type=f32) + bp_ref[...]
    out_ref[...] = y.reshape(N, tb, Cp)


# ----------------------------------------------------------------------------
# Glue: LMU state-space impulse response (parameter setup, plain JAX)
# ----------------------------------------------------------------------------
def lmu_impulse_response(memory_size, theta, seq_len):
    """H[:, k] = Ad^k @ Bd, ZOH discretization (dt=1) of the Legendre delay system."""
    q = jnp.arange(memory_size)
    r = (2.0 * q.astype(jnp.float32) + 1.0) / theta
    i = q[:, None]
    j = q[None, :]
    sign_lower = jnp.where(((i - j + 1) % 2) == 0, 1.0, -1.0)    # (-1)^(i-j+1) for i >= j
    A = r[:, None] * jnp.where(i < j, -1.0, sign_lower)
    Bv = r * jnp.where((q % 2) == 0, 1.0, -1.0)

    Msz = memory_size
    aug = jnp.zeros((Msz + 1, Msz + 1), jnp.float32)
    aug = aug.at[:Msz, :Msz].set(A)
    aug = aug.at[:Msz, Msz].set(Bv)
    e = jsl.expm(aug)                                            # [[Ad, Bd], [0, 1]]
    Ad = e[:Msz, :Msz]
    Bd = e[:Msz, Msz]

    cols = []
    h = Bd
    for _ in range(seq_len):
        cols.append(h)
        h = Ad @ h
    return jnp.stack(cols, axis=1)                               # (M, seq_len)


def _round_up(n, m):
    return ((n + m - 1) // m) * m


def init_params(key, dim, seq_len, theta=128.0):
    """Deterministic synthetic parameters matching SLMUMs.__init__ shapes,
    pre-padded / transposed / folded / dtype-cast into kernel-ready operands."""
    C = dim
    M = int(dim * 2.0)
    Cp = _round_up(C, LANE)
    Mp = _round_up(M, LANE)
    assert seq_len <= LAG, "padded-lag causal conv assumes N <= 128"
    f32 = jnp.float32
    bf16 = jnp.bfloat16
    ks = jax.random.split(key, 13)

    def nrm(k, shape, scale):
        return scale * jax.random.normal(k, shape, f32)

    def bn_fold(kg, kb, km, kv):
        gamma = 1.0 + 0.1 * jax.random.normal(kg, (C,), f32)
        beta = 0.1 * jax.random.normal(kb, (C,), f32)
        mean = 0.1 * jax.random.normal(km, (C,), f32)
        var = 0.5 + jax.random.uniform(kv, (C,), f32)
        s = gamma / jnp.sqrt(var + BN_EPS)
        b = beta - mean * s
        return s, b

    # prev_bn (eval mode); padded channels keep scale=bias=0 so they never spike.
    s1, b1 = bn_fold(ks[0], ks[1], ks[2], ks[3])
    bn1_s = jnp.zeros((1, Cp), f32).at[0, :C].set(s1)
    bn1_b = jnp.zeros((1, Cp), f32).at[0, :C].set(b1)
    # proj_bn (eval mode) -> folded into proj_conv below.
    s2, b2 = bn_fold(ks[4], ks[5], ks[6], ks[7])

    wu = nrm(ks[8], (1, C), 1.0 / jnp.sqrt(C))                   # Linear(C, 1).weight
    wu_p = jnp.zeros((1, Cp), f32).at[0, :C].set(wu[0])
    bu = jnp.full((1, 1), 0.3, f32)                              # Linear(C, 1).bias (SMEM scalar)

    Wh = nrm(ks[9], (C, C + M), 1.0 / jnp.sqrt(C + M))           # Linear(C+M, C).weight
    bh = nrm(ks[10], (1, C), 0.1) + 0.3
    bh_p = jnp.zeros((1, Cp), f32).at[0, :C].set(bh[0])
    whx = jnp.zeros((Cp, Cp), f32).at[:C, :C].set(Wh[:, :C].T).astype(bf16)   # x part
    whm = jnp.zeros((Mp, Cp), f32).at[:M, :C].set(Wh[:, C:].T).astype(bf16)   # memory part

    # proj_conv (1x1) with proj_bn folded: y = (h Wp^T + bp) * s2 + b2
    wp = nrm(ks[11], (C, C), 1.0 / jnp.sqrt(C))                  # Conv1d(C, C, k=1).weight
    bp = nrm(ks[12], (1, C), 0.1)
    wp_fold = wp.T * s2[None, :]
    bp_fold = bp[0] * s2 + b2
    wp_p = jnp.zeros((Cp, Cp), f32).at[:C, :C].set(wp_fold).astype(bf16)
    bp_p = jnp.zeros((1, Cp), f32).at[0, :C].set(bp_fold)

    H = lmu_impulse_response(M, theta, seq_len)                  # (M, N)
    ht_p = jnp.zeros((LAG, Mp), f32).at[:seq_len, :M].set(H.T).astype(bf16)

    return dict(bn1_s=bn1_s, bn1_b=bn1_b, wu=wu_p, bu=bu, ht=ht_p,
                whx=whx, whm=whm, bh=bh_p, wp=wp_p, bp=bp_p)


# ----------------------------------------------------------------------------
# Wrapper
# ----------------------------------------------------------------------------
def _pick_batch_tile(B, N):
    """Batch tile so that tb*N >= 128 MXU rows, tb is a multiple of 8 (full
    (8,128) vregs in the LIF loops) and nb = B/tb >= 2 when possible (both v7x
    TensorCores busy).  Falls back to the full batch for tiny B."""
    target = max(8, (((128 + N - 1) // N) + 7) // 8 * 8)
    cands = [d for d in range(8, min(B, target) + 1, 8) if B % d == 0]
    if not cands:
        return B                     # tiny batch: single block spanning the batch dim
    tb = max(cands)
    if B // tb < 2:
        smaller = [d for d in cands if B // d >= 2]
        if smaller:
            tb = max(smaller)
    return tb


@jax.jit
def slmums_forward(x, params):
    """x: (B, C, N) float32  ->  (out (B, C, N), act_loss scalar)."""
    B, C, N = x.shape
    Cp = params["bn1_s"].shape[1]
    Mp = params["whm"].shape[0]
    lag = params["ht"].shape[0]
    assert N <= lag, "causal-conv lag padding assumes N <= 128"

    # (B, C, N) -> time-major (N, B, Cp); XLA fuses transpose + pad into one copy.
    # TODO(synk): keep the surrounding model time-major / channels-last to drop this relayout.
    x_tm = jnp.transpose(x.astype(jnp.float32), (2, 0, 1))
    x_p = jnp.pad(x_tm, ((0, 0), (0, 0), (0, Cp - C)))

    tb = _pick_batch_tile(B, N)
    nb = B // tb

    xmap = lambda b: (0, b, 0)
    # Constant index maps: Mosaic's pipeline keeps these blocks resident (no re-DMA
    # across grid steps), so no extra Buffered() tuning is needed here.
    wmap = lambda b: (0, 0)

    out_p, loss_p = pl.pallas_call(
        slmu_kernel,
        out_shape=(jax.ShapeDtypeStruct((N, B, Cp), jnp.float32),
                   jax.ShapeDtypeStruct((nb, 1, LANE), jnp.float32)),
        grid_spec=pltpu.PrefetchScalarGridSpec(
            num_scalar_prefetch=0,
            grid=(nb,),
            in_specs=[
                pl.BlockSpec((N, tb, Cp), xmap),                 # x (time-major)
                pl.BlockSpec((1, Cp), wmap),                     # bn1 scale
                pl.BlockSpec((1, Cp), wmap),                     # bn1 bias
                pl.BlockSpec((1, Cp), wmap),                     # W_u
                pl.BlockSpec(memory_space=pltpu.MemorySpace.SMEM),  # b_u (scalar)
                pl.BlockSpec((lag, Mp), wmap),                   # H^T (bf16)
                pl.BlockSpec((Cp, Cp), wmap),                    # W_h x-part (bf16)
                pl.BlockSpec((Mp, Cp), wmap),                    # W_h memory-part (bf16)
                pl.BlockSpec((1, Cp), wmap),                     # b_h
                pl.BlockSpec((Cp, Cp), wmap),                    # proj weight (bn folded, bf16)
                pl.BlockSpec((1, Cp), wmap),                     # proj bias (bn folded)
            ],
            out_specs=(pl.BlockSpec((N, tb, Cp), xmap),
                       pl.BlockSpec((1, 1, LANE), lambda b: (b, 0, 0))),
            scratch_shapes=[
                pltpu.VMEM((N, tb, Cp), jnp.bfloat16),           # spike scratch (reused)
                pltpu.VMEM((N, tb, LAG), jnp.bfloat16),          # Toeplitz u-spike rows
                pltpu.VMEM((N, tb, Cp), jnp.float32),            # hidden pre-activation
            ]),
        compiler_params=pltpu.CompilerParams(
            dimension_semantics=("parallel",),   # shard batch grid over v7x's two TCs
            # ~0.7 MiB used at demo shapes; re-derive against v7x's 64 MiB before
            # raising tb or real channel counts.
            vmem_limit_bytes=32 << 20),
    )(x_p, params["bn1_s"], params["bn1_b"], params["wu"], params["bu"],
      params["ht"], params["whx"], params["whm"], params["bh"],
      params["wp"], params["bp"])

    out = jnp.transpose(out_p[:, :, :C], (1, 2, 0))              # back to (B, C, N)
    act_loss = jnp.sum(loss_p[:, 0, 0])                          # per-block partial sums
    return out, act_loss


if __name__ == "__main__":
    # dim must be divisible by num_heads=8 -> dim=32; memory_size=64; seq N=8.
    # Batch 32 -> batch tile 16 (tb*N = 128 MXU rows), nb=2 grid steps.
    B, C, N = 32, 32, 8
    key = jax.random.PRNGKey(0)
    kx, kp = jax.random.split(key)

    x = jax.random.normal(kx, (B, C, N), jnp.float32)
    params = init_params(kp, dim=C, seq_len=N, theta=128.0)

    out, act_loss = slmums_forward(x, params)
    out = jax.block_until_ready(out)
    act_loss = jax.block_until_ready(act_loss)

    assert out.shape == (B, C, N), out.shape
    assert bool(jnp.all(jnp.isfinite(out)))
    assert bool(jnp.isfinite(act_loss))
    print("KERNEL_OK")
</pallas_src>

<mosaic_0001>
module attributes {stable_mosaic.version = 11 : i64} {
  func.func @slmu_kernel(%arg0: i32, %arg1: memref<8x16x128xf32, #tpu.memory_space<vmem>>, %arg2: memref<1x128xf32, #tpu.memory_space<vmem>>, %arg3: memref<1x128xf32, #tpu.memory_space<vmem>>, %arg4: memref<1x128xf32, #tpu.memory_space<vmem>>, %arg5: memref<1x1xf32, #tpu.memory_space<smem>>, %arg6: memref<128x128xbf16, #tpu.memory_space<vmem>>, %arg7: memref<128x128xbf16, #tpu.memory_space<vmem>>, %arg8: memref<128x128xbf16, #tpu.memory_space<vmem>>, %arg9: memref<1x128xf32, #tpu.memory_space<vmem>>, %arg10: memref<128x128xbf16, #tpu.memory_space<vmem>>, %arg11: memref<1x128xf32, #tpu.memory_space<vmem>>, %arg12: memref<8x16x128xf32, #tpu.memory_space<vmem>>, %arg13: memref<1x1x128xf32, #tpu.memory_space<vmem>>, %arg14: memref<8x16x128xbf16, #tpu.memory_space<vmem>>, %arg15: memref<8x16x128xbf16, #tpu.memory_space<vmem>>, %arg16: memref<8x16x128xf32, #tpu.memory_space<vmem>>) attributes {dimension_semantics = [#tpu.dimension_semantics<parallel>], iteration_bounds = array<i64: 2>, scalar_prefetch = 0 : i64, scratch_operands = 3 : i64, tpu.core_type = #tpu.core_type<tc>, window_params = [{transform_indices = @transform_0, window_bounds = array<i64: 8, 16, 128>}, {pipeline_mode = #tpu.pipeline_mode<synchronous>, transform_indices = @transform_1, window_bounds = array<i64: 1, 128>}, {pipeline_mode = #tpu.pipeline_mode<synchronous>, transform_indices = @transform_2, window_bounds = array<i64: 1, 128>}, {pipeline_mode = #tpu.pipeline_mode<synchronous>, transform_indices = @transform_3, window_bounds = array<i64: 1, 128>}, {transform_indices = @transform_4, window_bounds = array<i64: 1, 1>}, {pipeline_mode = #tpu.pipeline_mode<synchronous>, transform_indices = @transform_5, window_bounds = array<i64: 128, 128>}, {pipeline_mode = #tpu.pipeline_mode<synchronous>, transform_indices = @transform_6, window_bounds = array<i64: 128, 128>}, {pipeline_mode = #tpu.pipeline_mode<synchronous>, transform_indices = @transform_7, window_bounds = array<i64: 128, 128>}, {pipeline_mode = #tpu.pipeline_mode<synchronous>, transform_indices = @transform_8, window_bounds = array<i64: 1, 128>}, {pipeline_mode = #tpu.pipeline_mode<synchronous>, transform_indices = @transform_9, window_bounds = array<i64: 128, 128>}, {pipeline_mode = #tpu.pipeline_mode<synchronous>, transform_indices = @transform_10, window_bounds = array<i64: 1, 128>}, {transform_indices = @transform_11, window_bounds = array<i64: 8, 16, 128>}, {transform_indices = @transform_12, window_bounds = array<i64: 1, 1, 128>}]} {
    %c0 = arith.constant 0 : index
    %c0_0 = arith.constant 0 : index
    %0 = vector.load %arg2[%c0, %c0_0] : memref<1x128xf32, #tpu.memory_space<vmem>>, vector<1x128xf32>
    %1 = vector.shape_cast %0 : vector<1x128xf32> to vector<1x128xf32>
    %2 = vector.broadcast %1 : vector<1x128xf32> to vector<16x128xf32>
    %c0_1 = arith.constant 0 : index
    %c0_2 = arith.constant 0 : index
    %3 = vector.load %arg3[%c0_1, %c0_2] : memref<1x128xf32, #tpu.memory_space<vmem>>, vector<1x128xf32>
    %4 = vector.shape_cast %3 : vector<1x128xf32> to vector<1x128xf32>
    %5 = vector.broadcast %4 : vector<1x128xf32> to vector<16x128xf32>
    %c0_3 = arith.constant 0 : index
    %c0_4 = arith.constant 0 : index
    %6 = vector.load %arg4[%c0_3, %c0_4] : memref<1x128xf32, #tpu.memory_space<vmem>>, vector<1x128xf32>
    %7 = vector.shape_cast %6 : vector<1x128xf32> to vector<1x128xf32>
    %8 = vector.broadcast %7 : vector<1x128xf32> to vector<16x128xf32>
    %c0_5 = arith.constant 0 : index
    %c0_6 = arith.constant 0 : index
    %9 = memref.load %arg5[%c0_5, %c0_6] : memref<1x1xf32, #tpu.memory_space<smem>>
    %10 = tpu.iota {dimensions = array<i32: 1>} : vector<16x128xi32>
    %cst = arith.constant 0.000000e+00 : f32
    %11 = vector.broadcast %cst : f32 to vector<16x128xf32>
    %cst_7 = arith.constant 0.000000e+00 : f32
    %12 = vector.broadcast %cst_7 : f32 to vector<16x1xf32>
    %cst_8 = arith.constant 0.000000e+00 : f32
    %13 = vector.broadcast %cst_8 : f32 to vector<16x128xf32>
    %cst_9 = arith.constant 0.000000e+00 : f32
    %14 = vector.broadcast %cst_9 : f32 to vector<16x128xf32>
    %c0_i32 = arith.constant 0 : i32
    %15 = arith.index_cast %c0_i32 : i32 to index
    %c0_10 = arith.constant 0 : index
    %c0_11 = arith.constant 0 : index
    %16 = vector.load %arg1[%15, %c0_10, %c0_11] : memref<8x16x128xf32, #tpu.memory_space<vmem>>, vector<1x16x128xf32>
    %17 = vector.shape_cast %16 : vector<1x16x128xf32> to vector<16x128xf32>
    %18 = arith.mulf %17, %2 : vector<16x128xf32>
    %19 = arith.addf %18, %5 : vector<16x128xf32>
    %20 = arith.subf %19, %11 : vector<16x128xf32>
    %cst_12 = arith.constant 5.000000e-01 : f32
    %21 = vector.broadcast %cst_12 : f32 to vector<16x128xf32>
    %22 = arith.mulf %20, %21 : vector<16x128xf32>
    %23 = arith.addf %11, %22 : vector<16x128xf32>
    %cst_13 = arith.constant 5.000000e-01 : f32
    %24 = vector.broadcast %cst_13 : f32 to vector<16x128xf32>
    %25 = arith.cmpf oge, %23, %24 : vector<16x128xf32>
    %26 = arith.extui %25 : vector<16x128xi1> to vector<16x128xi32>
    %27 = arith.sitofp %26 : vector<16x128xi32> to vector<16x128xf32>
    %cst_14 = arith.constant 1.000000e+00 : f32
    %28 = vector.broadcast %cst_14 : f32 to vector<16x128xf32>
    %29 = arith.subf %28, %27 : vector<16x128xf32>
    %30 = arith.mulf %23, %29 : vector<16x128xf32>
    %31 = arith.truncf %27 : vector<16x128xf32> to vector<16x128xbf16>
    %32 = arith.index_cast %c0_i32 : i32 to index
    %c0_15 = arith.constant 0 : index
    %c0_16 = arith.constant 0 : index
    %33 = vector.load %arg14[%32, %c0_15, %c0_16] : memref<8x16x128xbf16, #tpu.memory_space<vmem>>, vector<1x16x128xbf16>
    %34 = vector.shape_cast %33 : vector<1x16x128xbf16> to vector<16x128xbf16>
    %35 = vector.shape_cast %31 : vector<16x128xbf16> to vector<1x16x128xbf16>
    tpu.vector_store %arg14[%32, %c0_15, %c0_16], %35 {strides = array<i32>} : memref<8x16x128xbf16, #tpu.memory_space<vmem>>, vector<1x16x128xbf16>,
    %36 = arith.addf %14, %27 : vector<16x128xf32>
    %37 = arith.mulf %27, %8 : vector<16x128xf32>
    %cst_17 = arith.constant dense<0.000000e+00> : vector<16xf32>
    %38 = vector.multi_reduction <add>, %37, %cst_17 [1] : vector<16x128xf32> to vector<16xf32>
    %39 = vector.shape_cast %38 : vector<16xf32> to vector<16x1xf32>
    %40 = vector.broadcast %9 : f32 to vector<16x1xf32>
    %41 = arith.addf %39, %40 : vector<16x1xf32>
    %42 = arith.subf %41, %12 : vector<16x1xf32>
    %cst_18 = arith.constant 5.000000e-01 : f32
    %43 = vector.broadcast %cst_18 : f32 to vector<16x1xf32>
    %44 = arith.mulf %42, %43 : vector<16x1xf32>
    %45 = arith.addf %12, %44 : vector<16x1xf32>
    %cst_19 = arith.constant 5.000000e-01 : f32
    %46 = vector.broadcast %cst_19 : f32 to vector<16x1xf32>
    %47 = arith.cmpf oge, %45, %46 : vector<16x1xf32>
    %48 = arith.extui %47 : vector<16x1xi1> to vector<16x1xi32>
    %49 = arith.sitofp %48 : vector<16x1xi32> to vector<16x1xf32>
    %cst_20 = arith.constant 1.000000e+00 : f32
    %50 = vector.broadcast %cst_20 : f32 to vector<16x1xf32>
    %51 = arith.subf %50, %49 : vector<16x1xf32>
    %52 = arith.mulf %45, %51 : vector<16x1xf32>
    %c0_i32_21 = arith.constant 0 : i32
    %53 = vector.broadcast %c0_i32_21 : i32 to vector<16x128xi32>
    %54 = arith.cmpi eq, %10, %53 : vector<16x128xi32>
    %c1_i32 = arith.constant 1 : i32
    %55 = tpu.dynamic_rotate %13 by %c1_i32 dim 1 : vector<16x128xf32>, i32 -> vector<16x128xf32>
    %56 = vector.shape_cast %49 : vector<16x1xf32> to vector<16x1xf32>
    %57 = vector.broadcast %56 : vector<16x1xf32> to vector<16x128xf32>
    %58 = arith.select %54, %57, %55 : vector<16x128xi1>, vector<16x128xf32>
    %59 = arith.truncf %58 : vector<16x128xf32> to vector<16x128xbf16>
    %60 = arith.index_cast %c0_i32 : i32 to index
    %c0_22 = arith.constant 0 : index
    %c0_23 = arith.constant 0 : index
    %61 = vector.load %arg15[%60, %c0_22, %c0_23] : memref<8x16x128xbf16, #tpu.memory_space<vmem>>, vector<1x16x128xbf16>
    %62 = vector.shape_cast %61 : vector<1x16x128xbf16> to vector<16x128xbf16>
    %63 = vector.shape_cast %59 : vector<16x128xbf16> to vector<1x16x128xbf16>
    tpu.vector_store %arg15[%60, %c0_22, %c0_23], %63 {strides = array<i32>} : memref<8x16x128xbf16, #tpu.memory_space<vmem>>, vector<1x16x128xbf16>,
    %c1_i32_24 = arith.constant 1 : i32
    %64 = arith.index_cast %c1_i32_24 : i32 to index
    %c0_25 = arith.constant 0 : index
    %c0_26 = arith.constant 0 : index
    %65 = vector.load %arg1[%64, %c0_25, %c0_26] : memref<8x16x128xf32, #tpu.memory_space<vmem>>, vector<1x16x128xf32>
    %66 = vector.shape_cast %65 : vector<1x16x128xf32> to vector<16x128xf32>
    %67 = arith.mulf %66, %2 : vector<16x128xf32>
    %68 = arith.addf %67, %5 : vector<16x128xf32>
    %69 = arith.subf %68, %30 : vector<16x128xf32>
    %cst_27 = arith.constant 5.000000e-01 : f32
    %70 = vector.broadcast %cst_27 : f32 to vector<16x128xf32>
    %71 = arith.mulf %69, %70 : vector<16x128xf32>
    %72 = arith.addf %30, %71 : vector<16x128xf32>
    %cst_28 = arith.constant 5.000000e-01 : f32
    %73 = vector.broadcast %cst_28 : f32 to vector<16x128xf32>
    %74 = arith.cmpf oge, %72, %73 : vector<16x128xf32>
    %75 = arith.extui %74 : vector<16x128xi1> to vector<16x128xi32>
    %76 = arith.sitofp %75 : vector<16x128xi32> to vector<16x128xf32>
    %cst_29 = arith.constant 1.000000e+00 : f32
    %77 = vector.broadcast %cst_29 : f32 to vector<16x128xf32>
    %78 = arith.subf %77, %76 : vector<16x128xf32>
    %79 = arith.mulf %72, %78 : vector<16x128xf32>
    %80 = arith.truncf %76 : vector<16x128xf32> to vector<16x128xbf16>
    %81 = arith.index_cast %c1_i32_24 : i32 to index
    %c0_30 = arith.constant 0 : index
    %c0_31 = arith.constant 0 : index
    %82 = vector.load %arg14[%81, %c0_30, %c0_31] : memref<8x16x128xbf16, #tpu.memory_space<vmem>>, vector<1x16x128xbf16>
    %83 = vector.shape_cast %82 : vector<1x16x128xbf16> to vector<16x128xbf16>
    %84 = vector.shape_cast %80 : vector<16x128xbf16> to vector<1x16x128xbf16>
    tpu.vector_store %arg14[%81, %c0_30, %c0_31], %84 {strides = array<i32>} : memref<8x16x128xbf16, #tpu.memory_space<vmem>>, vector<1x16x128xbf16>,
    %85 = arith.addf %36, %76 : vector<16x128xf32>
    %86 = arith.mulf %76, %8 : vector<16x128xf32>
    %cst_32 = arith.constant dense<0.000000e+00> : vector<16xf32>
    %87 = vector.multi_reduction <add>, %86, %cst_32 [1] : vector<16x128xf32> to vector<16xf32>
    %88 = vector.shape_cast %87 : vector<16xf32> to vector<16x1xf32>
    %89 = vector.broadcast %9 : f32 to vector<16x1xf32>
    %90 = arith.addf %88, %89 : vector<16x1xf32>
    %91 = arith.subf %90, %52 : vector<16x1xf32>
    %cst_33 = arith.constant 5.000000e-01 : f32
    %92 = vector.broadcast %cst_33 : f32 to vector<16x1xf32>
    %93 = arith.mulf %91, %92 : vector<16x1xf32>
    %94 = arith.addf %52, %93 : vector<16x1xf32>
    %cst_34 = arith.constant 5.000000e-01 : f32
    %95 = vector.broadcast %cst_34 : f32 to vector<16x1xf32>
    %96 = arith.cmpf oge, %94, %95 : vector<16x1xf32>
    %97 = arith.extui %96 : vector<16x1xi1> to vector<16x1xi32>
    %98 = arith.sitofp %97 : vector<16x1xi32> to vector<16x1xf32>
    %cst_35 = arith.constant 1.000000e+00 : f32
    %99 = vector.broadcast %cst_35 : f32 to vector<16x1xf32>
    %100 = arith.subf %99, %98 : vector<16x1xf32>
    %101 = arith.mulf %94, %100 : vector<16x1xf32>
    %c0_i32_36 = arith.constant 0 : i32
    %102 = vector.broadcast %c0_i32_36 : i32 to vector<16x128xi32>
    %103 = arith.cmpi eq, %10, %102 : vector<16x128xi32>
    %c1_i32_37 = arith.constant 1 : i32
    %104 = tpu.dynamic_rotate %58 by %c1_i32_37 dim 1 : vector<16x128xf32>, i32 -> vector<16x128xf32>
    %105 = vector.shape_cast %98 : vector<16x1xf32> to vector<16x1xf32>
    %106 = vector.broadcast %105 : vector<16x1xf32> to vector<16x128xf32>
    %107 = arith.select %103, %106, %104 : vector<16x128xi1>, vector<16x128xf32>
    %108 = arith.truncf %107 : vector<16x128xf32> to vector<16x128xbf16>
    %109 = arith.index_cast %c1_i32_24 : i32 to index
    %c0_38 = arith.constant 0 : index
    %c0_39 = arith.constant 0 : index
    %110 = vector.load %arg15[%109, %c0_38, %c0_39] : memref<8x16x128xbf16, #tpu.memory_space<vmem>>, vector<1x16x128xbf16>
    %111 = vector.shape_cast %110 : vector<1x16x128xbf16> to vector<16x128xbf16>
    %112 = vector.shape_cast %108 : vector<16x128xbf16> to vector<1x16x128xbf16>
    tpu.vector_store %arg15[%109, %c0_38, %c0_39], %112 {strides = array<i32>} : memref<8x16x128xbf16, #tpu.memory_space<vmem>>, vector<1x16x128xbf16>,
    %c2_i32 = arith.constant 2 : i32
    %113 = arith.index_cast %c2_i32 : i32 to index
    %c0_40 = arith.constant 0 : index
    %c0_41 = arith.constant 0 : index
    %114 = vector.load %arg1[%113, %c0_40, %c0_41] : memref<8x16x128xf32, #tpu.memory_space<vmem>>, vector<1x16x128xf32>
    %115 = vector.shape_cast %114 : vector<1x16x128xf32> to vector<16x128xf32>
    %116 = arith.mulf %115, %2 : vector<16x128xf32>
    %117 = arith.addf %116, %5 : vector<16x128xf32>
    %118 = arith.subf %117, %79 : vector<16x128xf32>
    %cst_42 = arith.constant 5.000000e-01 : f32
    %119 = vector.broadcast %cst_42 : f32 to vector<16x128xf32>
    %120 = arith.mulf %118, %119 : vector<16x128xf32>
    %121 = arith.addf %79, %120 : vector<16x128xf32>
    %cst_43 = arith.constant 5.000000e-01 : f32
    %122 = vector.broadcast %cst_43 : f32 to vector<16x128xf32>
    %123 = arith.cmpf oge, %121, %122 : vector<16x128xf32>
    %124 = arith.extui %123 : vector<16x128xi1> to vector<16x128xi32>
    %125 = arith.sitofp %124 : vector<16x128xi32> to vector<16x128xf32>
    %cst_44 = arith.constant 1.000000e+00 : f32
    %126 = vector.broadcast %cst_44 : f32 to vector<16x128xf32>
    %127 = arith.subf %126, %125 : vector<16x128xf32>
    %128 = arith.mulf %121, %127 : vector<16x128xf32>
    %129 = arith.truncf %125 : vector<16x128xf32> to vector<16x128xbf16>
    %130 = arith.index_cast %c2_i32 : i32 to index
    %c0_45 = arith.constant 0 : index
    %c0_46 = arith.constant 0 : index
    %131 = vector.load %arg14[%130, %c0_45, %c0_46] : memref<8x16x128xbf16, #tpu.memory_space<vmem>>, vector<1x16x128xbf16>
    %132 = vector.shape_cast %131 : vector<1x16x128xbf16> to vector<16x128xbf16>
    %133 = vector.shape_cast %129 : vector<16x128xbf16> to vector<1x16x128xbf16>
    tpu.vector_store %arg14[%130, %c0_45, %c0_46], %133 {strides = array<i32>} : memref<8x16x128xbf16, #tpu.memory_space<vmem>>, vector<1x16x128xbf16>,
    %134 = arith.addf %85, %125 : vector<16x128xf32>
    %135 = arith.mulf %125, %8 : vector<16x128xf32>
    %cst_47 = arith.constant dense<0.000000e+00> : vector<16xf32>
    %136 = vector.multi_reduction <add>, %135, %cst_47 [1] : vector<16x128xf32> to vector<16xf32>
    %137 = vector.shape_cast %136 : vector<16xf32> to vector<16x1xf32>
    %138 = vector.broadcast %9 : f32 to vector<16x1xf32>
    %139 = arith.addf %137, %138 : vector<16x1xf32>
    %140 = arith.subf %139, %101 : vector<16x1xf32>
    %cst_48 = arith.constant 5.000000e-01 : f32
    %141 = vector.broadcast %cst_48 : f32 to vector<16x1xf32>
    %142 = arith.mulf %140, %141 : vector<16x1xf32>
    %143 = arith.addf %101, %142 : vector<16x1xf32>
    %cst_49 = arith.constant 5.000000e-01 : f32
    %144 = vector.broadcast %cst_49 : f32 to vector<16x1xf32>
    %145 = arith.cmpf oge, %143, %144 : vector<16x1xf32>
    %146 = arith.extui %145 : vector<16x1xi1> to vector<16x1xi32>
    %147 = arith.sitofp %146 : vector<16x1xi32> to vector<16x1xf32>
    %cst_50 = arith.constant 1.000000e+00 : f32
    %148 = vector.broadcast %cst_50 : f32 to vector<16x1xf32>
    %149 = arith.subf %148, %147 : vector<16x1xf32>
    %150 = arith.mulf %143, %149 : vector<16x1xf32>
    %c0_i32_51 = arith.constant 0 : i32
    %151 = vector.broadcast %c0_i32_51 : i32 to vector<16x128xi32>
    %152 = arith.cmpi eq, %10, %151 : vector<16x128xi32>
    %c1_i32_52 = arith.constant 1 : i32
    %153 = tpu.dynamic_rotate %107 by %c1_i32_52 dim 1 : vector<16x128xf32>, i32 -> vector<16x128xf32>
    %154 = vector.shape_cast %147 : vector<16x1xf32> to vector<16x1xf32>
    %155 = vector.broadcast %154 : vector<16x1xf32> to vector<16x128xf32>
    %156 = arith.select %152, %155, %153 : vector<16x128xi1>, vector<16x128xf32>
    %157 = arith.truncf %156 : vector<16x128xf32> to vector<16x128xbf16>
    %158 = arith.index_cast %c2_i32 : i32 to index
    %c0_53 = arith.constant 0 : index
    %c0_54 = arith.constant 0 : index
    %159 = vector.load %arg15[%158, %c0_53, %c0_54] : memref<8x16x128xbf16, #tpu.memory_space<vmem>>, vector<1x16x128xbf16>
    %160 = vector.shape_cast %159 : vector<1x16x128xbf16> to vector<16x128xbf16>
    %161 = vector.shape_cast %157 : vector<16x128xbf16> to vector<1x16x128xbf16>
    tpu.vector_store %arg15[%158, %c0_53, %c0_54], %161 {strides = array<i32>} : memref<8x16x128xbf16, #tpu.memory_space<vmem>>, vector<1x16x128xbf16>,
    %c3_i32 = arith.constant 3 : i32
    %162 = arith.index_cast %c3_i32 : i32 to index
    %c0_55 = arith.constant 0 : index
    %c0_56 = arith.constant 0 : index
    %163 = vector.load %arg1[%162, %c0_55, %c0_56] : memref<8x16x128xf32, #tpu.memory_space<vmem>>, vector<1x16x128xf32>
    %164 = vector.shape_cast %163 : vector<1x16x128xf32> to vector<16x128xf32>
    %165 = arith.mulf %164, %2 : vector<16x128xf32>
    %166 = arith.addf %165, %5 : vector<16x128xf32>
    %167 = arith.subf %166, %128 : vector<16x128xf32>
    %cst_57 = arith.constant 5.000000e-01 : f32
    %168 = vector.broadcast %cst_57 : f32 to vector<16x128xf32>
    %169 = arith.mulf %167, %168 : vector<16x128xf32>
    %170 = arith.addf %128, %169 : vector<16x128xf32>
    %cst_58 = arith.constant 5.000000e-01 : f32
    %171 = vector.broadcast %cst_58 : f32 to vector<16x128xf32>
    %172 = arith.cmpf oge, %170, %171 : vector<16x128xf32>
    %173 = arith.extui %172 : vector<16x128xi1> to vector<16x128xi32>
    %174 = arith.sitofp %173 : vector<16x128xi32> to vector<16x128xf32>
    %cst_59 = arith.constant 1.000000e+00 : f32
    %175 = vector.broadcast %cst_59 : f32 to vector<16x128xf32>
    %176 = arith.subf %175, %174 : vector<16x128xf32>
    %177 = arith.mulf %170, %176 : vector<16x128xf32>
    %178 = arith.truncf %174 : vector<16x128xf32> to vector<16x128xbf16>
    %179 = arith.index_cast %c3_i32 : i32 to index
    %c0_60 = arith.constant 0 : index
    %c0_61 = arith.constant 0 : index
    %180 = vector.load %arg14[%179, %c0_60, %c0_61] : memref<8x16x128xbf16, #tpu.memory_space<vmem>>, vector<1x16x128xbf16>
    %181 = vector.shape_cast %180 : vector<1x16x128xbf16> to vector<16x128xbf16>
    %182 = vector.shape_cast %178 : vector<16x128xbf16> to vector<1x16x128xbf16>
    tpu.vector_store %arg14[%179, %c0_60, %c0_61], %182 {strides = array<i32>} : memref<8x16x128xbf16, #tpu.memory_space<vmem>>, vector<1x16x128xbf16>,
    %183 = arith.addf %134, %174 : vector<16x128xf32>
    %184 = arith.mulf %174, %8 : vector<16x128xf32>
    %cst_62 = arith.constant dense<0.000000e+00> : vector<16xf32>
    %185 = vector.multi_reduction <add>, %184, %cst_62 [1] : vector<16x128xf32> to vector<16xf32>
    %186 = vector.shape_cast %185 : vector<16xf32> to vector<16x1xf32>
    %187 = vector.broadcast %9 : f32 to vector<16x1xf32>
    %188 = arith.addf %186, %187 : vector<16x1xf32>
    %189 = arith.subf %188, %150 : vector<16x1xf32>
    %cst_63 = arith.constant 5.000000e-01 : f32
    %190 = vector.broadcast %cst_63 : f32 to vector<16x1xf32>
    %191 = arith.mulf %189, %190 : vector<16x1xf32>
    %192 = arith.addf %150, %191 : vector<16x1xf32>
    %cst_64 = arith.constant 5.000000e-01 : f32
    %193 = vector.broadcast %cst_64 : f32 to vector<16x1xf32>
    %194 = arith.cmpf oge, %192, %193 : vector<16x1xf32>
    %195 = arith.extui %194 : vector<16x1xi1> to vector<16x1xi32>
    %196 = arith.sitofp %195 : vector<16x1xi32> to vector<16x1xf32>
    %cst_65 = arith.constant 1.000000e+00 : f32
    %197 = vector.broadcast %cst_65 : f32 to vector<16x1xf32>
    %198 = arith.subf %197, %196 : vector<16x1xf32>
    %199 = arith.mulf %192, %198 : vector<16x1xf32>
    %c0_i32_66 = arith.constant 0 : i32
    %200 = vector.broadcast %c0_i32_66 : i32 to vector<16x128xi32>
    %201 = arith.cmpi eq, %10, %200 : vector<16x128xi32>
    %c1_i32_67 = arith.constant 1 : i32
    %202 = tpu.dynamic_rotate %156 by %c1_i32_67 dim 1 : vector<16x128xf32>, i32 -> vector<16x128xf32>
    %203 = vector.shape_cast %196 : vector<16x1xf32> to vector<16x1xf32>
    %204 = vector.broadcast %203 : vector<16x1xf32> to vector<16x128xf32>
    %205 = arith.select %201, %204, %202 : vector<16x128xi1>, vector<16x128xf32>
    %206 = arith.truncf %205 : vector<16x128xf32> to vector<16x128xbf16>
    %207 = arith.index_cast %c3_i32 : i32 to index
    %c0_68 = arith.constant 0 : index
    %c0_69 = arith.constant 0 : index
    %208 = vector.load %arg15[%207, %c0_68, %c0_69] : memref<8x16x128xbf16, #tpu.memory_space<vmem>>, vector<1x16x128xbf16>
    %209 = vector.shape_cast %208 : vector<1x16x128xbf16> to vector<16x128xbf16>
    %210 = vector.shape_cast %206 : vector<16x128xbf16> to vector<1x16x128xbf16>
    tpu.vector_store %arg15[%207, %c0_68, %c0_69], %210 {strides = array<i32>} : memref<8x16x128xbf16, #tpu.memory_space<vmem>>, vector<1x16x128xbf16>,
    %c4_i32 = arith.constant 4 : i32
    %211 = arith.index_cast %c4_i32 : i32 to index
    %c0_70 = arith.constant 0 : index
    %c0_71 = arith.constant 0 : index
    %212 = vector.load %arg1[%211, %c0_70, %c0_71] : memref<8x16x128xf32, #tpu.memory_space<vmem>>, vector<1x16x128xf32>
    %213 = vector.shape_cast %212 : vector<1x16x128xf32> to vector<16x128xf32>
    %214 = arith.mulf %213, %2 : vector<16x128xf32>
    %215 = arith.addf %214, %5 : vector<16x128xf32>
    %216 = arith.subf %215, %177 : vector<16x128xf32>
    %cst_72 = arith.constant 5.000000e-01 : f32
    %217 = vector.broadcast %cst_72 : f32 to vector<16x128xf32>
    %218 = arith.mulf %216, %217 : vector<16x128xf32>
    %219 = arith.addf %177, %218 : vector<16x128xf32>
    %cst_73 = arith.constant 5.000000e-01 : f32
    %220 = vector.broadcast %cst_73 : f32 to vector<16x128xf32>
    %221 = arith.cmpf oge, %219, %220 : vector<16x128xf32>
    %222 = arith.extui %221 : vector<16x128xi1> to vector<16x128xi32>
    %223 = arith.sitofp %222 : vector<16x128xi32> to vector<16x128xf32>
    %cst_74 = arith.constant 1.000000e+00 : f32
    %224 = vector.broadcast %cst_74 : f32 to vector<16x128xf32>
    %225 = arith.subf %224, %223 : vector<16x128xf32>
    %226 = arith.mulf %219, %225 : vector<16x128xf32>
    %227 = arith.truncf %223 : vector<16x128xf32> to vector<16x128xbf16>
    %228 = arith.index_cast %c4_i32 : i32 to index
    %c0_75 = arith.constant 0 : index
    %c0_76 = arith.constant 0 : index
    %229 = vector.load %arg14[%228, %c0_75, %c0_76] : memref<8x16x128xbf16, #tpu.memory_space<vmem>>, vector<1x16x128xbf16>
    %230 = vector.shape_cast %229 : vector<1x16x128xbf16> to vector<16x128xbf16>
    %231 = vector.shape_cast %227 : vector<16x128xbf16> to vector<1x16x128xbf16>
    tpu.vector_store %arg14[%228, %c0_75, %c0_76], %231 {strides = array<i32>} : memref<8x16x128xbf16, #tpu.memory_space<vmem>>, vector<1x16x128xbf16>,
    %232 = arith.addf %183, %223 : vector<16x128xf32>
    %233 = arith.mulf %223, %8 : vector<16x128xf32>
    %cst_77 = arith.constant dense<0.000000e+00> : vector<16xf32>
    %234 = vector.multi_reduction <add>, %233, %cst_77 [1] : vector<16x128xf32> to vector<16xf32>
    %235 = vector.shape_cast %234 : vector<16xf32> to vector<16x1xf32>
    %236 = vector.broadcast %9 : f32 to vector<16x1xf32>
    %237 = arith.addf %235, %236 : vector<16x1xf32>
    %238 = arith.subf %237, %199 : vector<16x1xf32>
    %cst_78 = arith.constant 5.000000e-01 : f32
    %239 = vector.broadcast %cst_78 : f32 to vector<16x1xf32>
    %240 = arith.mulf %238, %239 : vector<16x1xf32>
    %241 = arith.addf %199, %240 : vector<16x1xf32>
    %cst_79 = arith.constant 5.000000e-01 : f32
    %242 = vector.broadcast %cst_79 : f32 to vector<16x1xf32>
    %243 = arith.cmpf oge, %241, %242 : vector<16x1xf32>
    %244 = arith.extui %243 : vector<16x1xi1> to vector<16x1xi32>
    %245 = arith.sitofp %244 : vector<16x1xi32> to vector<16x1xf32>
    %cst_80 = arith.constant 1.000000e+00 : f32
    %246 = vector.broadcast %cst_80 : f32 to vector<16x1xf32>
    %247 = arith.subf %246, %245 : vector<16x1xf32>
    %248 = arith.mulf %241, %247 : vector<16x1xf32>
    %c0_i32_81 = arith.constant 0 : i32
    %249 = vector.broadcast %c0_i32_81 : i32 to vector<16x128xi32>
    %250 = arith.cmpi eq, %10, %249 : vector<16x128xi32>
    %c1_i32_82 = arith.constant 1 : i32
    %251 = tpu.dynamic_rotate %205 by %c1_i32_82 dim 1 : vector<16x128xf32>, i32 -> vector<16x128xf32>
    %252 = vector.shape_cast %245 : vector<16x1xf32> to vector<16x1xf32>
    %253 = vector.broadcast %252 : vector<16x1xf32> to vector<16x128xf32>
    %254 = arith.select %250, %253, %251 : vector<16x128xi1>, vector<16x128xf32>
    %255 = arith.truncf %254 : vector<16x128xf32> to vector<16x128xbf16>
    %256 = arith.index_cast %c4_i32 : i32 to index
    %c0_83 = arith.constant 0 : index
    %c0_84 = arith.constant 0 : index
    %257 = vector.load %arg15[%256, %c0_83, %c0_84] : memref<8x16x128xbf16, #tpu.memory_space<vmem>>, vector<1x16x128xbf16>
    %258 = vector.shape_cast %257 : vector<1x16x128xbf16> to vector<16x128xbf16>
    %259 = vector.shape_cast %255 : vector<16x128xbf16> to vector<1x16x128xbf16>
    tpu.vector_store %arg15[%256, %c0_83, %c0_84], %259 {strides = array<i32>} : memref<8x16x128xbf16, #tpu.memory_space<vmem>>, vector<1x16x128xbf16>,
    %c5_i32 = arith.constant 5 : i32
    %260 = arith.index_cast %c5_i32 : i32 to index
    %c0_85 = arith.constant 0 : index
    %c0_86 = arith.constant 0 : index
    %261 = vector.load %arg1[%260, %c0_85, %c0_86] : memref<8x16x128xf32, #tpu.memory_space<vmem>>, vector<1x16x128xf32>
    %262 = vector.shape_cast %261 : vector<1x16x128xf32> to vector<16x128xf32>
    %263 = arith.mulf %262, %2 : vector<16x128xf32>
    %264 = arith.addf %263, %5 : vector<16x128xf32>
    %265 = arith.subf %264, %226 : vector<16x128xf32>
    %cst_87 = arith.constant 5.000000e-01 : f32
    %266 = vector.broadcast %cst_87 : f32 to vector<16x128xf32>
    %267 = arith.mulf %265, %266 : vector<16x128xf32>
    %268 = arith.addf %226, %267 : vector<16x128xf32>
    %cst_88 = arith.constant 5.000000e-01 : f32
    %269 = vector.broadcast %cst_88 : f32 to vector<16x128xf32>
    %270 = arith.cmpf oge, %268, %269 : vector<16x128xf32>
    %271 = arith.extui %270 : vector<16x128xi1> to vector<16x128xi32>
    %272 = arith.sitofp %271 : vector<16x128xi32> to vector<16x128xf32>
    %cst_89 = arith.constant 1.000000e+00 : f32
    %273 = vector.broadcast %cst_89 : f32 to vector<16x128xf32>
    %274 = arith.subf %273, %272 : vector<16x128xf32>
    %275 = arith.mulf %268, %274 : vector<16x128xf32>
    %276 = arith.truncf %272 : vector<16x128xf32> to vector<16x128xbf16>
    %277 = arith.index_cast %c5_i32 : i32 to index
    %c0_90 = arith.constant 0 : index
    %c0_91 = arith.constant 0 : index
    %278 = vector.load %arg14[%277, %c0_90, %c0_91] : memref<8x16x128xbf16, #tpu.memory_space<vmem>>, vector<1x16x128xbf16>
    %279 = vector.shape_cast %278 : vector<1x16x128xbf16> to vector<16x128xbf16>
    %280 = vector.shape_cast %276 : vector<16x128xbf16> to vector<1x16x128xbf16>
    tpu.vector_store %arg14[%277, %c0_90, %c0_91], %280 {strides = array<i32>} : memref<8x16x128xbf16, #tpu.memory_space<vmem>>, vector<1x16x128xbf16>,
    %281 = arith.addf %232, %272 : vector<16x128xf32>
    %282 = arith.mulf %272, %8 : vector<16x128xf32>
    %cst_92 = arith.constant dense<0.000000e+00> : vector<16xf32>
    %283 = vector.multi_reduction <add>, %282, %cst_92 [1] : vector<16x128xf32> to vector<16xf32>
    %284 = vector.shape_cast %283 : vector<16xf32> to vector<16x1xf32>
    %285 = vector.broadcast %9 : f32 to vector<16x1xf32>
    %286 = arith.addf %284, %285 : vector<16x1xf32>
    %287 = arith.subf %286, %248 : vector<16x1xf32>
    %cst_93 = arith.constant 5.000000e-01 : f32
    %288 = vector.broadcast %cst_93 : f32 to vector<16x1xf32>
    %289 = arith.mulf %287, %288 : vector<16x1xf32>
    %290 = arith.addf %248, %289 : vector<16x1xf32>
    %cst_94 = arith.constant 5.000000e-01 : f32
    %291 = vector.broadcast %cst_94 : f32 to vector<16x1xf32>
    %292 = arith.cmpf oge, %290, %291 : vector<16x1xf32>
    %293 = arith.extui %292 : vector<16x1xi1> to vector<16x1xi32>
    %294 = arith.sitofp %293 : vector<16x1xi32> to vector<16x1xf32>
    %cst_95 = arith.constant 1.000000e+00 : f32
    %295 = vector.broadcast %cst_95 : f32 to vector<16x1xf32>
    %296 = arith.subf %295, %294 : vector<16x1xf32>
    %297 = arith.mulf %290, %296 : vector<16x1xf32>
    %c0_i32_96 = arith.constant 0 : i32
    %298 = vector.broadcast %c0_i32_96 : i32 to vector<16x128xi32>
    %299 = arith.cmpi eq, %10, %298 : vector<16x128xi32>
    %c1_i32_97 = arith.constant 1 : i32
    %300 = tpu.dynamic_rotate %254 by %c1_i32_97 dim 1 : vector<16x128xf32>, i32 -> vector<16x128xf32>
    %301 = vector.shape_cast %294 : vector<16x1xf32> to vector<16x1xf32>
    %302 = vector.broadcast %301 : vector<16x1xf32> to vector<16x128xf32>
    %303 = arith.select %299, %302, %300 : vector<16x128xi1>, vector<16x128xf32>
    %304 = arith.truncf %303 : vector<16x128xf32> to vector<16x128xbf16>
    %305 = arith.index_cast %c5_i32 : i32 to index
    %c0_98 = arith.constant 0 : index
    %c0_99 = arith.constant 0 : index
    %306 = vector.load %arg15[%305, %c0_98, %c0_99] : memref<8x16x128xbf16, #tpu.memory_space<vmem>>, vector<1x16x128xbf16>
    %307 = vector.shape_cast %306 : vector<1x16x128xbf16> to vector<16x128xbf16>
    %308 = vector.shape_cast %304 : vector<16x128xbf16> to vector<1x16x128xbf16>
    tpu.vector_store %arg15[%305, %c0_98, %c0_99], %308 {strides = array<i32>} : memref<8x16x128xbf16, #tpu.memory_space<vmem>>, vector<1x16x128xbf16>,
    %c6_i32 = arith.constant 6 : i32
    %309 = arith.index_cast %c6_i32 : i32 to index
    %c0_100 = arith.constant 0 : index
    %c0_101 = arith.constant 0 : index
    %310 = vector.load %arg1[%309, %c0_100, %c0_101] : memref<8x16x128xf32, #tpu.memory_space<vmem>>, vector<1x16x128xf32>
    %311 = vector.shape_cast %310 : vector<1x16x128xf32> to vector<16x128xf32>
    %312 = arith.mulf %311, %2 : vector<16x128xf32>
    %313 = arith.addf %312, %5 : vector<16x128xf32>
    %314 = arith.subf %313, %275 : vector<16x128xf32>
    %cst_102 = arith.constant 5.000000e-01 : f32
    %315 = vector.broadcast %cst_102 : f32 to vector<16x128xf32>
    %316 = arith.mulf %314, %315 : vector<16x128xf32>
    %317 = arith.addf %275, %316 : vector<16x128xf32>
    %cst_103 = arith.constant 5.000000e-01 : f32
    %318 = vector.broadcast %cst_103 : f32 to vector<16x128xf32>
    %319 = arith.cmpf oge, %317, %318 : vector<16x128xf32>
    %320 = arith.extui %319 : vector<16x128xi1> to vector<16x128xi32>
    %321 = arith.sitofp %320 : vector<16x128xi32> to vector<16x128xf32>
    %cst_104 = arith.constant 1.000000e+00 : f32
    %322 = vector.broadcast %cst_104 : f32 to vector<16x128xf32>
    %323 = arith.subf %322, %321 : vector<16x128xf32>
    %324 = arith.mulf %317, %323 : vector<16x128xf32>
    %325 = arith.truncf %321 : vector<16x128xf32> to vector<16x128xbf16>
    %326 = arith.index_cast %c6_i32 : i32 to index
    %c0_105 = arith.constant 0 : index
    %c0_106 = arith.constant 0 : index
    %327 = vector.load %arg14[%326, %c0_105, %c0_106] : memref<8x16x128xbf16, #tpu.memory_space<vmem>>, vector<1x16x128xbf16>
    %328 = vector.shape_cast %327 : vector<1x16x128xbf16> to vector<16x128xbf16>
    %329 = vector.shape_cast %325 : vector<16x128xbf16> to vector<1x16x128xbf16>
    tpu.vector_store %arg14[%326, %c0_105, %c0_106], %329 {strides = array<i32>} : memref<8x16x128xbf16, #tpu.memory_space<vmem>>, vector<1x16x128xbf16>,
    %330 = arith.addf %281, %321 : vector<16x128xf32>
    %331 = arith.mulf %321, %8 : vector<16x128xf32>
    %cst_107 = arith.constant dense<0.000000e+00> : vector<16xf32>
    %332 = vector.multi_reduction <add>, %331, %cst_107 [1] : vector<16x128xf32> to vector<16xf32>
    %333 = vector.shape_cast %332 : vector<16xf32> to vector<16x1xf32>
    %334 = vector.broadcast %9 : f32 to vector<16x1xf32>
    %335 = arith.addf %333, %334 : vector<16x1xf32>
    %336 = arith.subf %335, %297 : vector<16x1xf32>
    %cst_108 = arith.constant 5.000000e-01 : f32
    %337 = vector.broadcast %cst_108 : f32 to vector<16x1xf32>
    %338 = arith.mulf %336, %337 : vector<16x1xf32>
    %339 = arith.addf %297, %338 : vector<16x1xf32>
    %cst_109 = arith.constant 5.000000e-01 : f32
    %340 = vector.broadcast %cst_109 : f32 to vector<16x1xf32>
    %341 = arith.cmpf oge, %339, %340 : vector<16x1xf32>
    %342 = arith.extui %341 : vector<16x1xi1> to vector<16x1xi32>
    %343 = arith.sitofp %342 : vector<16x1xi32> to vector<16x1xf32>
    %cst_110 = arith.constant 1.000000e+00 : f32
    %344 = vector.broadcast %cst_110 : f32 to vector<16x1xf32>
    %345 = arith.subf %344, %343 : vector<16x1xf32>
    %346 = arith.mulf %339, %345 : vector<16x1xf32>
    %c0_i32_111 = arith.constant 0 : i32
    %347 = vector.broadcast %c0_i32_111 : i32 to vector<16x128xi32>
    %348 = arith.cmpi eq, %10, %347 : vector<16x128xi32>
    %c1_i32_112 = arith.constant 1 : i32
    %349 = tpu.dynamic_rotate %303 by %c1_i32_112 dim 1 : vector<16x128xf32>, i32 -> vector<16x128xf32>
    %350 = vector.shape_cast %343 : vector<16x1xf32> to vector<16x1xf32>
    %351 = vector.broadcast %350 : vector<16x1xf32> to vector<16x128xf32>
    %352 = arith.select %348, %351, %349 : vector<16x128xi1>, vector<16x128xf32>
    %353 = arith.truncf %352 : vector<16x128xf32> to vector<16x128xbf16>
    %354 = arith.index_cast %c6_i32 : i32 to index
    %c0_113 = arith.constant 0 : index
    %c0_114 = arith.constant 0 : index
    %355 = vector.load %arg15[%354, %c0_113, %c0_114] : memref<8x16x128xbf16, #tpu.memory_space<vmem>>, vector<1x16x128xbf16>
    %356 = vector.shape_cast %355 : vector<1x16x128xbf16> to vector<16x128xbf16>
    %357 = vector.shape_cast %353 : vector<16x128xbf16> to vector<1x16x128xbf16>
    tpu.vector_store %arg15[%354, %c0_113, %c0_114], %357 {strides = array<i32>} : memref<8x16x128xbf16, #tpu.memory_space<vmem>>, vector<1x16x128xbf16>,
    %c7_i32 = arith.constant 7 : i32
    %358 = arith.index_cast %c7_i32 : i32 to index
    %c0_115 = arith.constant 0 : index
    %c0_116 = arith.constant 0 : index
    %359 = vector.load %arg1[%358, %c0_115, %c0_116] : memref<8x16x128xf32, #tpu.memory_space<vmem>>, vector<1x16x128xf32>
    %360 = vector.shape_cast %359 : vector<1x16x128xf32> to vector<16x128xf32>
    %361 = arith.mulf %360, %2 : vector<16x128xf32>
    %362 = arith.addf %361, %5 : vector<16x128xf32>
    %363 = arith.subf %362, %324 : vector<16x128xf32>
    %cst_117 = arith.constant 5.000000e-01 : f32
    %364 = vector.broadcast %cst_117 : f32 to vector<16x128xf32>
    %365 = arith.mulf %363, %364 : vector<16x128xf32>
    %366 = arith.addf %324, %365 : vector<16x128xf32>
    %cst_118 = arith.constant 5.000000e-01 : f32
    %367 = vector.broadcast %cst_118 : f32 to vector<16x128xf32>
    %368 = arith.cmpf oge, %366, %367 : vector<16x128xf32>
    %369 = arith.extui %368 : vector<16x128xi1> to vector<16x128xi32>
    %370 = arith.sitofp %369 : vector<16x128xi32> to vector<16x128xf32>
    %cst_119 = arith.constant 1.000000e+00 : f32
    %371 = vector.broadcast %cst_119 : f32 to vector<16x128xf32>
    %372 = arith.subf %371, %370 : vector<16x128xf32>
    %373 = arith.mulf %366, %372 : vector<16x128xf32>
    %374 = arith.truncf %370 : vector<16x128xf32> to vector<16x128xbf16>
    %375 = arith.index_cast %c7_i32 : i32 to index
    %c0_120 = arith.constant 0 : index
    %c0_121 = arith.constant 0 : index
    %376 = vector.load %arg14[%375, %c0_120, %c0_121] : memref<8x16x128xbf16, #tpu.memory_space<vmem>>, vector<1x16x128xbf16>
    %377 = vector.shape_cast %376 : vector<1x16x128xbf16> to vector<16x128xbf16>
    %378 = vector.shape_cast %374 : vector<16x128xbf16> to vector<1x16x128xbf16>
    tpu.vector_store %arg14[%375, %c0_120, %c0_121], %378 {strides = array<i32>} : memref<8x16x128xbf16, #tpu.memory_space<vmem>>, vector<1x16x128xbf16>,
    %379 = arith.addf %330, %370 : vector<16x128xf32>
    %380 = arith.mulf %370, %8 : vector<16x128xf32>
    %cst_122 = arith.constant dense<0.000000e+00> : vector<16xf32>
    %381 = vector.multi_reduction <add>, %380, %cst_122 [1] : vector<16x128xf32> to vector<16xf32>
    %382 = vector.shape_cast %381 : vector<16xf32> to vector<16x1xf32>
    %383 = vector.broadcast %9 : f32 to vector<16x1xf32>
    %384 = arith.addf %382, %383 : vector<16x1xf32>
    %385 = arith.subf %384, %346 : vector<16x1xf32>
    %cst_123 = arith.constant 5.000000e-01 : f32
    %386 = vector.broadcast %cst_123 : f32 to vector<16x1xf32>
    %387 = arith.mulf %385, %386 : vector<16x1xf32>
    %388 = arith.addf %346, %387 : vector<16x1xf32>
    %cst_124 = arith.constant 5.000000e-01 : f32
    %389 = vector.broadcast %cst_124 : f32 to vector<16x1xf32>
    %390 = arith.cmpf oge, %388, %389 : vector<16x1xf32>
    %391 = arith.extui %390 : vector<16x1xi1> to vector<16x1xi32>
    %392 = arith.sitofp %391 : vector<16x1xi32> to vector<16x1xf32>
    %cst_125 = arith.constant 1.000000e+00 : f32
    %393 = vector.broadcast %cst_125 : f32 to vector<16x1xf32>
    %394 = arith.subf %393, %392 : vector<16x1xf32>
    %395 = arith.mulf %388, %394 : vector<16x1xf32>
    %c0_i32_126 = arith.constant 0 : i32
    %396 = vector.broadcast %c0_i32_126 : i32 to vector<16x128xi32>
    %397 = arith.cmpi eq, %10, %396 : vector<16x128xi32>
    %c1_i32_127 = arith.constant 1 : i32
    %398 = tpu.dynamic_rotate %352 by %c1_i32_127 dim 1 : vector<16x128xf32>, i32 -> vector<16x128xf32>
    %399 = vector.shape_cast %392 : vector<16x1xf32> to vector<16x1xf32>
    %400 = vector.broadcast %399 : vector<16x1xf32> to vector<16x128xf32>
    %401 = arith.select %397, %400, %398 : vector<16x128xi1>, vector<16x128xf32>
    %402 = arith.truncf %401 : vector<16x128xf32> to vector<16x128xbf16>
    %403 = arith.index_cast %c7_i32 : i32 to index
    %c0_128 = arith.constant 0 : index
    %c0_129 = arith.constant 0 : index
    %404 = vector.load %arg15[%403, %c0_128, %c0_129] : memref<8x16x128xbf16, #tpu.memory_space<vmem>>, vector<1x16x128xbf16>
    %405 = vector.shape_cast %404 : vector<1x16x128xbf16> to vector<16x128xbf16>
    %406 = vector.shape_cast %402 : vector<16x128xbf16> to vector<1x16x128xbf16>
    tpu.vector_store %arg15[%403, %c0_128, %c0_129], %406 {strides = array<i32>} : memref<8x16x128xbf16, #tpu.memory_space<vmem>>, vector<1x16x128xbf16>,
    %c8_i32 = arith.constant 8 : i32
    %407 = vector.shape_cast %379 : vector<16x128xf32> to vector<1x16x128xf32>
    %cst_130 = arith.constant dense<0.000000e+00> : vector<1xf32>
    %408 = vector.multi_reduction <add>, %407, %cst_130 [1, 2] : vector<1x16x128xf32> to vector<1xf32>
    %409 = vector.shape_cast %408 : vector<1xf32> to vector<1x1x1xf32>
    %410 = vector.extract %409[0, 0, 0] : f32 from vector<1x1x1xf32>
    %411 = vector.broadcast %410 : f32 to vector<1x1x128xf32>
    %c0_131 = arith.constant 0 : index
    %c0_132 = arith.constant 0 : index
    %c0_133 = arith.constant 0 : index
    %412 = vector.load %arg13[%c0_131, %c0_132, %c0_133] : memref<1x1x128xf32, #tpu.memory_space<vmem>>, vector<1x1x128xf32>
    tpu.vector_store %arg13[%c0_131, %c0_132, %c0_133], %411 {strides = array<i32>} : memref<1x1x128xf32, #tpu.memory_space<vmem>>, vector<1x1x128xf32>,
    %c0_134 = arith.constant 0 : index
    %c0_135 = arith.constant 0 : index
    %c0_136 = arith.constant 0 : index
    %413 = vector.load %arg14[%c0_134, %c0_135, %c0_136] : memref<8x16x128xbf16, #tpu.memory_space<vmem>>, vector<8x16x128xbf16>
    %414 = vector.shape_cast %413 : vector<8x16x128xbf16> to vector<128x128xbf16>
    %c0_137 = arith.constant 0 : index
    %c0_138 = arith.constant 0 : index
    %c0_139 = arith.constant 0 : index
    %415 = vector.load %arg15[%c0_137, %c0_138, %c0_139] : memref<8x16x128xbf16, #tpu.memory_space<vmem>>, vector<8x16x128xbf16>
    %416 = vector.shape_cast %415 : vector<8x16x128xbf16> to vector<128x128xbf16>
    %c0_140 = arith.constant 0 : index
    %c0_141 = arith.constant 0 : index
    %417 = vector.load %arg6[%c0_140, %c0_141] : memref<128x128xbf16, #tpu.memory_space<vmem>>, vector<128x128xbf16>
    %cst_142 = arith.constant dense<0.000000e+00> : vector<128x128xf32>
    %418 = tpu.matmul %416, %417, %cst_142 {dimension_numbers = #tpu.dot_dimension_numbers<[1], [0], [0], [1], [0, 0, 1, 1], [], []>} : vector<128x128xbf16>, vector<128x128xbf16>, vector<128x128xf32> -> vector<128x128xf32>
    %c0_143 = arith.constant 0 : index
    %c0_144 = arith.constant 0 : index
    %419 = vector.load %arg7[%c0_143, %c0_144] : memref<128x128xbf16, #tpu.memory_space<vmem>>, vector<128x128xbf16>
    %cst_145 = arith.constant dense<0.000000e+00> : vector<128x128xf32>
    %420 = tpu.matmul %414, %419, %cst_145 {dimension_numbers = #tpu.dot_dimension_numbers<[1], [0], [0], [1], [0, 0, 1, 1], [], []>} : vector<128x128xbf16>, vector<128x128xbf16>, vector<128x128xf32> -> vector<128x128xf32>
    %421 = arith.truncf %418 : vector<128x128xf32> to vector<128x128xbf16>
    %c0_146 = arith.constant 0 : index
    %c0_147 = arith.constant 0 : index
    %422 = vector.load %arg8[%c0_146, %c0_147] : memref<128x128xbf16, #tpu.memory_space<vmem>>, vector<128x128xbf16>
    %cst_148 = arith.constant dense<0.000000e+00> : vector<128x128xf32>
    %423 = tpu.matmul %421, %422, %cst_148 {dimension_numbers = #tpu.dot_dimension_numbers<[1], [0], [0], [1], [0, 0, 1, 1], [], []>} : vector<128x128xbf16>, vector<128x128xbf16>, vector<128x128xf32> -> vector<128x128xf32>
    %424 = arith.addf %420, %423 : vector<128x128xf32>
    %c0_149 = arith.constant 0 : index
    %c0_150 = arith.constant 0 : index
    %425 = vector.load %arg9[%c0_149, %c0_150] : memref<1x128xf32, #tpu.memory_space<vmem>>, vector<1x128xf32>
    %426 = vector.broadcast %425 : vector<1x128xf32> to vector<128x128xf32>
    %427 = arith.addf %424, %426 : vector<128x128xf32>
    %428 = vector.shape_cast %427 : vector<128x128xf32> to vector<8x16x128xf32>
    %c0_151 = arith.constant 0 : index
    %c0_152 = arith.constant 0 : index
    %c0_153 = arith.constant 0 : index
    %429 = vector.load %arg16[%c0_151, %c0_152, %c0_153] : memref<8x16x128xf32, #tpu.memory_space<vmem>>, vector<8x16x128xf32>
    tpu.vector_store %arg16[%c0_151, %c0_152, %c0_153], %428 {strides = array<i32>} : memref<8x16x128xf32, #tpu.memory_space<vmem>>, vector<8x16x128xf32>,
    %cst_154 = arith.constant 0.000000e+00 : f32
    %430 = vector.broadcast %cst_154 : f32 to vector<16x128xf32>
    %c0_i32_155 = arith.constant 0 : i32
    %431 = arith.index_cast %c0_i32_155 : i32 to index
    %c0_156 = arith.constant 0 : index
    %c0_157 = arith.constant 0 : index
    %432 = vector.load %arg16[%431, %c0_156, %c0_157] : memref<8x16x128xf32, #tpu.memory_space<vmem>>, vector<1x16x128xf32>
    %433 = vector.shape_cast %432 : vector<1x16x128xf32> to vector<16x128xf32>
    %434 = arith.subf %433, %430 : vector<16x128xf32>
    %cst_158 = arith.constant 5.000000e-01 : f32
    %435 = vector.broadcast %cst_158 : f32 to vector<16x128xf32>
    %436 = arith.mulf %434, %435 : vector<16x128xf32>
    %437 = arith.addf %430, %436 : vector<16x128xf32>
    %cst_159 = arith.constant 5.000000e-01 : f32
    %438 = vector.broadcast %cst_159 : f32 to vector<16x128xf32>
    %439 = arith.cmpf oge, %437, %438 : vector<16x128xf32>
    %440 = arith.extui %439 : vector<16x128xi1> to vector<16x128xi32>
    %441 = arith.sitofp %440 : vector<16x128xi32> to vector<16x128xf32>
    %cst_160 = arith.constant 1.000000e+00 : f32
    %442 = vector.broadcast %cst_160 : f32 to vector<16x128xf32>
    %443 = arith.subf %442, %441 : vector<16x128xf32>
    %444 = arith.mulf %437, %443 : vector<16x128xf32>
    %445 = arith.truncf %441 : vector<16x128xf32> to vector<16x128xbf16>
    %446 = arith.index_cast %c0_i32_155 : i32 to index
    %c0_161 = arith.constant 0 : index
    %c0_162 = arith.constant 0 : index
    %447 = vector.load %arg14[%446, %c0_161, %c0_162] : memref<8x16x128xbf16, #tpu.memory_space<vmem>>, vector<1x16x128xbf16>
    %448 = vector.shape_cast %447 : vector<1x16x128xbf16> to vector<16x128xbf16>
    %449 = vector.shape_cast %445 : vector<16x128xbf16> to vector<1x16x128xbf16>
    tpu.vector_store %arg14[%446, %c0_161, %c0_162], %449 {strides = array<i32>} : memref<8x16x128xbf16, #tpu.memory_space<vmem>>, vector<1x16x128xbf16>,
    %c1_i32_163 = arith.constant 1 : i32
    %450 = arith.index_cast %c1_i32_163 : i32 to index
    %c0_164 = arith.constant 0 : index
    %c0_165 = arith.constant 0 : index
    %451 = vector.load %arg16[%450, %c0_164, %c0_165] : memref<8x16x128xf32, #tpu.memory_space<vmem>>, vector<1x16x128xf32>
    %452 = vector.shape_cast %451 : vector<1x16x128xf32> to vector<16x128xf32>
    %453 = arith.subf %452, %444 : vector<16x128xf32>
    %cst_166 = arith.constant 5.000000e-01 : f32
    %454 = vector.broadcast %cst_166 : f32 to vector<16x128xf32>
    %455 = arith.mulf %453, %454 : vector<16x128xf32>
    %456 = arith.addf %444, %455 : vector<16x128xf32>
    %cst_167 = arith.constant 5.000000e-01 : f32
    %457 = vector.broadcast %cst_167 : f32 to vector<16x128xf32>
    %458 = arith.cmpf oge, %456, %457 : vector<16x128xf32>
    %459 = arith.extui %458 : vector<16x128xi1> to vector<16x128xi32>
    %460 = arith.sitofp %459 : vector<16x128xi32> to vector<16x128xf32>
    %cst_168 = arith.constant 1.000000e+00 : f32
    %461 = vector.broadcast %cst_168 : f32 to vector<16x128xf32>
    %462 = arith.subf %461, %460 : vector<16x128xf32>
    %463 = arith.mulf %456, %462 : vector<16x128xf32>
    %464 = arith.truncf %460 : vector<16x128xf32> to vector<16x128xbf16>
    %465 = arith.index_cast %c1_i32_163 : i32 to index
    %c0_169 = arith.constant 0 : index
    %c0_170 = arith.constant 0 : index
    %466 = vector.load %arg14[%465, %c0_169, %c0_170] : memref<8x16x128xbf16, #tpu.memory_space<vmem>>, vector<1x16x128xbf16>
    %467 = vector.shape_cast %466 : vector<1x16x128xbf16> to vector<16x128xbf16>
    %468 = vector.shape_cast %464 : vector<16x128xbf16> to vector<1x16x128xbf16>
    tpu.vector_store %arg14[%465, %c0_169, %c0_170], %468 {strides = array<i32>} : memref<8x16x128xbf16, #tpu.memory_space<vmem>>, vector<1x16x128xbf16>,
    %c2_i32_171 = arith.constant 2 : i32
    %469 = arith.index_cast %c2_i32_171 : i32 to index
    %c0_172 = arith.constant 0 : index
    %c0_173 = arith.constant 0 : index
    %470 = vector.load %arg16[%469, %c0_172, %c0_173] : memref<8x16x128xf32, #tpu.memory_space<vmem>>, vector<1x16x128xf32>
    %471 = vector.shape_cast %470 : vector<1x16x128xf32> to vector<16x128xf32>
    %472 = arith.subf %471, %463 : vector<16x128xf32>
    %cst_174 = arith.constant 5.000000e-01 : f32
    %473 = vector.broadcast %cst_174 : f32 to vector<16x128xf32>
    %474 = arith.mulf %472, %473 : vector<16x128xf32>
    %475 = arith.addf %463, %474 : vector<16x128xf32>
    %cst_175 = arith.constant 5.000000e-01 : f32
    %476 = vector.broadcast %cst_175 : f32 to vector<16x128xf32>
    %477 = arith.cmpf oge, %475, %476 : vector<16x128xf32>
    %478 = arith.extui %477 : vector<16x128xi1> to vector<16x128xi32>
    %479 = arith.sitofp %478 : vector<16x128xi32> to vector<16x128xf32>
    %cst_176 = arith.constant 1.000000e+00 : f32
    %480 = vector.broadcast %cst_176 : f32 to vector<16x128xf32>
    %481 = arith.subf %480, %479 : vector<16x128xf32>
    %482 = arith.mulf %475, %481 : vector<16x128xf32>
    %483 = arith.truncf %479 : vector<16x128xf32> to vector<16x128xbf16>
    %484 = arith.index_cast %c2_i32_171 : i32 to index
    %c0_177 = arith.constant 0 : index
    %c0_178 = arith.constant 0 : index
    %485 = vector.load %arg14[%484, %c0_177, %c0_178] : memref<8x16x128xbf16, #tpu.memory_space<vmem>>, vector<1x16x128xbf16>
    %486 = vector.shape_cast %485 : vector<1x16x128xbf16> to vector<16x128xbf16>
    %487 = vector.shape_cast %483 : vector<16x128xbf16> to vector<1x16x128xbf16>
    tpu.vector_store %arg14[%484, %c0_177, %c0_178], %487 {strides = array<i32>} : memref<8x16x128xbf16, #tpu.memory_space<vmem>>, vector<1x16x128xbf16>,
    %c3_i32_179 = arith.constant 3 : i32
    %488 = arith.index_cast %c3_i32_179 : i32 to index
    %c0_180 = arith.constant 0 : index
    %c0_181 = arith.constant 0 : index
    %489 = vector.load %arg16[%488, %c0_180, %c0_181] : memref<8x16x128xf32, #tpu.memory_space<vmem>>, vector<1x16x128xf32>
    %490 = vector.shape_cast %489 : vector<1x16x128xf32> to vector<16x128xf32>
    %491 = arith.subf %490, %482 : vector<16x128xf32>
    %cst_182 = arith.constant 5.000000e-01 : f32
    %492 = vector.broadcast %cst_182 : f32 to vector<16x128xf32>
    %493 = arith.mulf %491, %492 : vector<16x128xf32>
    %494 = arith.addf %482, %493 : vector<16x128xf32>
    %cst_183 = arith.constant 5.000000e-01 : f32
    %495 = vector.broadcast %cst_183 : f32 to vector<16x128xf32>
    %496 = arith.cmpf oge, %494, %495 : vector<16x128xf32>
    %497 = arith.extui %496 : vector<16x128xi1> to vector<16x128xi32>
    %498 = arith.sitofp %497 : vector<16x128xi32> to vector<16x128xf32>
    %cst_184 = arith.constant 1.000000e+00 : f32
    %499 = vector.broadcast %cst_184 : f32 to vector<16x128xf32>
    %500 = arith.subf %499, %498 : vector<16x128xf32>
    %501 = arith.mulf %494, %500 : vector<16x128xf32>
    %502 = arith.truncf %498 : vector<16x128xf32> to vector<16x128xbf16>
    %503 = arith.index_cast %c3_i32_179 : i32 to index
    %c0_185 = arith.constant 0 : index
    %c0_186 = arith.constant 0 : index
    %504 = vector.load %arg14[%503, %c0_185, %c0_186] : memref<8x16x128xbf16, #tpu.memory_space<vmem>>, vector<1x16x128xbf16>
    %505 = vector.shape_cast %504 : vector<1x16x128xbf16> to vector<16x128xbf16>
    %506 = vector.shape_cast %502 : vector<16x128xbf16> to vector<1x16x128xbf16>
    tpu.vector_store %arg14[%503, %c0_185, %c0_186], %506 {strides = array<i32>} : memref<8x16x128xbf16, #tpu.memory_space<vmem>>, vector<1x16x128xbf16>,
    %c4_i32_187 = arith.constant 4 : i32
    %507 = arith.index_cast %c4_i32_187 : i32 to index
    %c0_188 = arith.constant 0 : index
    %c0_189 = arith.constant 0 : index
    %508 = vector.load %arg16[%507, %c0_188, %c0_189] : memref<8x16x128xf32, #tpu.memory_space<vmem>>, vector<1x16x128xf32>
    %509 = vector.shape_cast %508 : vector<1x16x128xf32> to vector<16x128xf32>
    %510 = arith.subf %509, %501 : vector<16x128xf32>
    %cst_190 = arith.constant 5.000000e-01 : f32
    %511 = vector.broadcast %cst_190 : f32 to vector<16x128xf32>
    %512 = arith.mulf %510, %511 : vector<16x128xf32>
    %513 = arith.addf %501, %512 : vector<16x128xf32>
    %cst_191 = arith.constant 5.000000e-01 : f32
    %514 = vector.broadcast %cst_191 : f32 to vector<16x128xf32>
    %515 = arith.cmpf oge, %513, %514 : vector<16x128xf32>
    %516 = arith.extui %515 : vector<16x128xi1> to vector<16x128xi32>
    %517 = arith.sitofp %516 : vector<16x128xi32> to vector<16x128xf32>
    %cst_192 = arith.constant 1.000000e+00 : f32
    %518 = vector.broadcast %cst_192 : f32 to vector<16x128xf32>
    %519 = arith.subf %518, %517 : vector<16x128xf32>
    %520 = arith.mulf %513, %519 : vector<16x128xf32>
    %521 = arith.truncf %517 : vector<16x128xf32> to vector<16x128xbf16>
    %522 = arith.index_cast %c4_i32_187 : i32 to index
    %c0_193 = arith.constant 0 : index
    %c0_194 = arith.constant 0 : index
    %523 = vector.load %arg14[%522, %c0_193, %c0_194] : memref<8x16x128xbf16, #tpu.memory_space<vmem>>, vector<1x16x128xbf16>
    %524 = vector.shape_cast %523 : vector<1x16x128xbf16> to vector<16x128xbf16>
    %525 = vector.shape_cast %521 : vector<16x128xbf16> to vector<1x16x128xbf16>
    tpu.vector_store %arg14[%522, %c0_193, %c0_194], %525 {strides = array<i32>} : memref<8x16x128xbf16, #tpu.memory_space<vmem>>, vector<1x16x128xbf16>,
    %c5_i32_195 = arith.constant 5 : i32
    %526 = arith.index_cast %c5_i32_195 : i32 to index
    %c0_196 = arith.constant 0 : index
    %c0_197 = arith.constant 0 : index
    %527 = vector.load %arg16[%526, %c0_196, %c0_197] : memref<8x16x128xf32, #tpu.memory_space<vmem>>, vector<1x16x128xf32>
    %528 = vector.shape_cast %527 : vector<1x16x128xf32> to vector<16x128xf32>
    %529 = arith.subf %528, %520 : vector<16x128xf32>
    %cst_198 = arith.constant 5.000000e-01 : f32
    %530 = vector.broadcast %cst_198 : f32 to vector<16x128xf32>
    %531 = arith.mulf %529, %530 : vector<16x128xf32>
    %532 = arith.addf %520, %531 : vector<16x128xf32>
    %cst_199 = arith.constant 5.000000e-01 : f32
    %533 = vector.broadcast %cst_199 : f32 to vector<16x128xf32>
    %534 = arith.cmpf oge, %532, %533 : vector<16x128xf32>
    %535 = arith.extui %534 : vector<16x128xi1> to vector<16x128xi32>
    %536 = arith.sitofp %535 : vector<16x128xi32> to vector<16x128xf32>
    %cst_200 = arith.constant 1.000000e+00 : f32
    %537 = vector.broadcast %cst_200 : f32 to vector<16x128xf32>
    %538 = arith.subf %537, %536 : vector<16x128xf32>
    %539 = arith.mulf %532, %538 : vector<16x128xf32>
    %540 = arith.truncf %536 : vector<16x128xf32> to vector<16x128xbf16>
    %541 = arith.index_cast %c5_i32_195 : i32 to index
    %c0_201 = arith.constant 0 : index
    %c0_202 = arith.constant 0 : index
    %542 = vector.load %arg14[%541, %c0_201, %c0_202] : memref<8x16x128xbf16, #tpu.memory_space<vmem>>, vector<1x16x128xbf16>
    %543 = vector.shape_cast %542 : vector<1x16x128xbf16> to vector<16x128xbf16>
    %544 = vector.shape_cast %540 : vector<16x128xbf16> to vector<1x16x128xbf16>
    tpu.vector_store %arg14[%541, %c0_201, %c0_202], %544 {strides = array<i32>} : memref<8x16x128xbf16, #tpu.memory_space<vmem>>, vector<1x16x128xbf16>,
    %c6_i32_203 = arith.constant 6 : i32
    %545 = arith.index_cast %c6_i32_203 : i32 to index
    %c0_204 = arith.constant 0 : index
    %c0_205 = arith.constant 0 : index
    %546 = vector.load %arg16[%545, %c0_204, %c0_205] : memref<8x16x128xf32, #tpu.memory_space<vmem>>, vector<1x16x128xf32>
    %547 = vector.shape_cast %546 : vector<1x16x128xf32> to vector<16x128xf32>
    %548 = arith.subf %547, %539 : vector<16x128xf32>
    %cst_206 = arith.constant 5.000000e-01 : f32
    %549 = vector.broadcast %cst_206 : f32 to vector<16x128xf32>
    %550 = arith.mulf %548, %549 : vector<16x128xf32>
    %551 = arith.addf %539, %550 : vector<16x128xf32>
    %cst_207 = arith.constant 5.000000e-01 : f32
    %552 = vector.broadcast %cst_207 : f32 to vector<16x128xf32>
    %553 = arith.cmpf oge, %551, %552 : vector<16x128xf32>
    %554 = arith.extui %553 : vector<16x128xi1> to vector<16x128xi32>
    %555 = arith.sitofp %554 : vector<16x128xi32> to vector<16x128xf32>
    %cst_208 = arith.constant 1.000000e+00 : f32
    %556 = vector.broadcast %cst_208 : f32 to vector<16x128xf32>
    %557 = arith.subf %556, %555 : vector<16x128xf32>
    %558 = arith.mulf %551, %557 : vector<16x128xf32>
    %559 = arith.truncf %555 : vector<16x128xf32> to vector<16x128xbf16>
    %560 = arith.index_cast %c6_i32_203 : i32 to index
    %c0_209 = arith.constant 0 : index
    %c0_210 = arith.constant 0 : index
    %561 = vector.load %arg14[%560, %c0_209, %c0_210] : memref<8x16x128xbf16, #tpu.memory_space<vmem>>, vector<1x16x128xbf16>
    %562 = vector.shape_cast %561 : vector<1x16x128xbf16> to vector<16x128xbf16>
    %563 = vector.shape_cast %559 : vector<16x128xbf16> to vector<1x16x128xbf16>
    tpu.vector_store %arg14[%560, %c0_209, %c0_210], %563 {strides = array<i32>} : memref<8x16x128xbf16, #tpu.memory_space<vmem>>, vector<1x16x128xbf16>,
    %c7_i32_211 = arith.constant 7 : i32
    %564 = arith.index_cast %c7_i32_211 : i32 to index
    %c0_212 = arith.constant 0 : index
    %c0_213 = arith.constant 0 : index
    %565 = vector.load %arg16[%564, %c0_212, %c0_213] : memref<8x16x128xf32, #tpu.memory_space<vmem>>, vector<1x16x128xf32>
    %566 = vector.shape_cast %565 : vector<1x16x128xf32> to vector<16x128xf32>
    %567 = arith.subf %566, %558 : vector<16x128xf32>
    %cst_214 = arith.constant 5.000000e-01 : f32
    %568 = vector.broadcast %cst_214 : f32 to vector<16x128xf32>
    %569 = arith.mulf %567, %568 : vector<16x128xf32>
    %570 = arith.addf %558, %569 : vector<16x128xf32>
    %cst_215 = arith.constant 5.000000e-01 : f32
    %571 = vector.broadcast %cst_215 : f32 to vector<16x128xf32>
    %572 = arith.cmpf oge, %570, %571 : vector<16x128xf32>
    %573 = arith.extui %572 : vector<16x128xi1> to vector<16x128xi32>
    %574 = arith.sitofp %573 : vector<16x128xi32> to vector<16x128xf32>
    %cst_216 = arith.constant 1.000000e+00 : f32
    %575 = vector.broadcast %cst_216 : f32 to vector<16x128xf32>
    %576 = arith.subf %575, %574 : vector<16x128xf32>
    %577 = arith.mulf %570, %576 : vector<16x128xf32>
    %578 = arith.truncf %574 : vector<16x128xf32> to vector<16x128xbf16>
    %579 = arith.index_cast %c7_i32_211 : i32 to index
    %c0_217 = arith.constant 0 : index
    %c0_218 = arith.constant 0 : index
    %580 = vector.load %arg14[%579, %c0_217, %c0_218] : memref<8x16x128xbf16, #tpu.memory_space<vmem>>, vector<1x16x128xbf16>
    %581 = vector.shape_cast %580 : vector<1x16x128xbf16> to vector<16x128xbf16>
    %582 = vector.shape_cast %578 : vector<16x128xbf16> to vector<1x16x128xbf16>
    tpu.vector_store %arg14[%579, %c0_217, %c0_218], %582 {strides = array<i32>} : memref<8x16x128xbf16, #tpu.memory_space<vmem>>, vector<1x16x128xbf16>,
    %c8_i32_219 = arith.constant 8 : i32
    %c0_220 = arith.constant 0 : index
    %c0_221 = arith.constant 0 : index
    %c0_222 = arith.constant 0 : index
    %583 = vector.load %arg14[%c0_220, %c0_221, %c0_222] : memref<8x16x128xbf16, #tpu.memory_space<vmem>>, vector<8x16x128xbf16>
    %584 = vector.shape_cast %583 : vector<8x16x128xbf16> to vector<128x128xbf16>
    %c0_223 = arith.constant 0 : index
    %c0_224 = arith.constant 0 : index
    %585 = vector.load %arg10[%c0_223, %c0_224] : memref<128x128xbf16, #tpu.memory_space<vmem>>, vector<128x128xbf16>
    %cst_225 = arith.constant dense<0.000000e+00> : vector<128x128xf32>
    %586 = tpu.matmul %584, %585, %cst_225 {dimension_numbers = #tpu.dot_dimension_numbers<[1], [0], [0], [1], [0, 0, 1, 1], [], []>} : vector<128x128xbf16>, vector<128x128xbf16>, vector<128x128xf32> -> vector<128x128xf32>
    %c0_226 = arith.constant 0 : index
    %c0_227 = arith.constant 0 : index
    %587 = vector.load %arg11[%c0_226, %c0_227] : memref<1x128xf32, #tpu.memory_space<vmem>>, vector<1x128xf32>
    %588 = vector.broadcast %587 : vector<1x128xf32> to vector<128x128xf32>
    %589 = arith.addf %586, %588 : vector<128x128xf32>
    %590 = vector.shape_cast %589 : vector<128x128xf32> to vector<8x16x128xf32>
    %c0_228 = arith.constant 0 : index
    %c0_229 = arith.constant 0 : index
    %c0_230 = arith.constant 0 : index
    %591 = vector.load %arg12[%c0_228, %c0_229, %c0_230] : memref<8x16x128xf32, #tpu.memory_space<vmem>>, vector<8x16x128xf32>
    tpu.vector_store %arg12[%c0_228, %c0_229, %c0_230], %590 {strides = array<i32>} : memref<8x16x128xf32, #tpu.memory_space<vmem>>, vector<8x16x128xf32>,
    return
  }
  func.func @transform_0(%arg0: i32) -> (i32, i32, i32) {
    %c0_i32 = arith.constant 0 : i32
    %c0_i32_0 = arith.constant 0 : i32
    %c0_i32_1 = arith.constant 0 : i32
    return %c0_i32, %arg0, %c0_i32_0 : i32, i32, i32
  }
  func.func @transform_1(%arg0: i32) -> (i32, i32) {
    %c0_i32 = arith.constant 0 : i32
    %c0_i32_0 = arith.constant 0 : i32
    %c0_i32_1 = arith.constant 0 : i32
    return %c0_i32, %c0_i32_0 : i32, i32
  }
  func.func @transform_2(%arg0: i32) -> (i32, i32) {
    %c0_i32 = arith.constant 0 : i32
    %c0_i32_0 = arith.constant 0 : i32
    %c0_i32_1 = arith.constant 0 : i32
    return %c0_i32, %c0_i32_0 : i32, i32
  }
  func.func @transform_3(%arg0: i32) -> (i32, i32) {
    %c0_i32 = arith.constant 0 : i32
    %c0_i32_0 = arith.constant 0 : i32
    %c0_i32_1 = arith.constant 0 : i32
    return %c0_i32, %c0_i32_0 : i32, i32
  }
  func.func @transform_4(%arg0: i32) -> (i32, i32) {
    %c0_i32 = arith.constant 0 : i32
    %c0_i32_0 = arith.constant 0 : i32
    %c0_i32_1 = arith.constant 0 : i32
    return %c0_i32, %c0_i32_0 : i32, i32
  }
  func.func @transform_5(%arg0: i32) -> (i32, i32) {
    %c0_i32 = arith.constant 0 : i32
    %c0_i32_0 = arith.constant 0 : i32
    %c0_i32_1 = arith.constant 0 : i32
    return %c0_i32, %c0_i32_0 : i32, i32
  }
  func.func @transform_6(%arg0: i32) -> (i32, i32) {
    %c0_i32 = arith.constant 0 : i32
    %c0_i32_0 = arith.constant 0 : i32
    %c0_i32_1 = arith.constant 0 : i32
    return %c0_i32, %c0_i32_0 : i32, i32
  }
  func.func @transform_7(%arg0: i32) -> (i32, i32) {
    %c0_i32 = arith.constant 0 : i32
    %c0_i32_0 = arith.constant 0 : i32
    %c0_i32_1 = arith.constant 0 : i32
    return %c0_i32, %c0_i32_0 : i32, i32
  }
  func.func @transform_8(%arg0: i32) -> (i32, i32) {
    %c0_i32 = arith.constant 0 : i32
    %c0_i32_0 = arith.constant 0 : i32
    %c0_i32_1 = arith.constant 0 : i32
    return %c0_i32, %c0_i32_0 : i32, i32
  }
  func.func @transform_9(%arg0: i32) -> (i32, i32) {
    %c0_i32 = arith.constant 0 : i32
    %c0_i32_0 = arith.constant 0 : i32
    %c0_i32_1 = arith.constant 0 : i32
    return %c0_i32, %c0_i32_0 : i32, i32
  }
  func.func @transform_10(%arg0: i32) -> (i32, i32) {
    %c0_i32 = arith.constant 0 : i32
    %c0_i32_0 = arith.constant 0 : i32
    %c0_i32_1 = arith.constant 0 : i32
    return %c0_i32, %c0_i32_0 : i32, i32
  }
  func.func @transform_11(%arg0: i32) -> (i32, i32, i32) {
    %c0_i32 = arith.constant 0 : i32
    %c0_i32_0 = arith.constant 0 : i32
    %c0_i32_1 = arith.constant 0 : i32
    return %c0_i32, %arg0, %c0_i32_0 : i32, i32, i32
  }
  func.func @transform_12(%arg0: i32) -> (i32, i32, i32) {
    %c0_i32 = arith.constant 0 : i32
    %c0_i32_0 = arith.constant 0 : i32
    %c0_i32_1 = arith.constant 0 : i32
    return %arg0, %c0_i32, %c0_i32_0 : i32, i32, i32
  }
}

</mosaic_0001>

<llo_original>
// kernel: slmums_forward.1
$region0: #{slmums_forward.1}
  #allocation0 [shape = 'u32[]', space=smem, size = 0x4, offset = 0x4, fixed_abs, tag = 'smem constant byte address 0x4 - core index']
  #allocation1 [shape = 'u32[144,128]{1,0:T(1,128)}', space=vmem, size = 0x12000, scoped, tag = 'internal scratch']
  #allocation2 [shape = 'bf16[8,16,128]{2,1,0:T(8,128)(2,1)}', space=vmem, size = 0x8000, scoped, tag = 'scratch operand']
  #allocation3 [shape = 'bf16[8,16,128]{2,1,0:T(8,128)(2,1)}', space=vmem, size = 0x8000, scoped, tag = 'scratch operand']
  #allocation4 [shape = 'f32[8,16,128]{2,1,0:T(8,128)}', space=vmem, size = 0x10000, scoped, tag = 'scratch operand']
  #allocation5 [shape = 'f32[1,1]{1,0:T(1,128)S(6)}', space=smem, size = 0x200, scoped, tag = 'scoped memory for slmums_forward.1']
  %s0 = inlined_call_operand.vmem [shape: f32[8,32,128], index: 0, kind: input, shape index: {}]
  %s1 = inlined_call_operand.vmem [shape: f32[1,128], index: 1, kind: input, shape index: {}]
  %s2 = inlined_call_operand.vmem [shape: f32[1,128], index: 2, kind: input, shape index: {}]
  %s3 = inlined_call_operand.vmem [shape: f32[1,128], index: 3, kind: input, shape index: {}]
  %s4 = inlined_call_operand.<no memory space> [shape: f32[1,1], index: 4, kind: input, shape index: {}]
  %s5 = inlined_call_operand.vmem [shape: bf16[128,128], index: 5, kind: input, shape index: {}]
  %s6 = inlined_call_operand.vmem [shape: bf16[128,128], index: 6, kind: input, shape index: {}]
  %s7 = inlined_call_operand.vmem [shape: bf16[128,128], index: 7, kind: input, shape index: {}]
  %s8 = inlined_call_operand.vmem [shape: f32[1,128], index: 8, kind: input, shape index: {}]
  %s9 = inlined_call_operand.vmem [shape: bf16[128,128], index: 9, kind: input, shape index: {}]
  %s10 = inlined_call_operand.vmem [shape: f32[1,128], index: 10, kind: input, shape index: {}]
  %s11 = inlined_call_operand.vmem [shape: f32[8,32,128], index: 11, kind: output, shape index: {0}]
  %s12 = inlined_call_operand.vmem [shape: f32[2,1,128], index: 12, kind: output, shape index: {1}]
  %13 = xla_tuple %s11, %s12
  %s14 = sld [smem:[#allocation0]]
  $region157: #{slmums_forward.1} parent=0
    _
  %s16 = ssub.s32 1, %s14
  %s17 = scalar_select 0, %s16, %s14
  %18 = sst [smem:[#allocation5]] %s4
  $region1: #{slmums_forward.1} parent=0
    #allocation6 [shape = 'u8[131072]{0}', space=vmem, size = 0x20000, scoped, tag = 'input window, operand 0']
    #allocation7 [shape = 'u8[131072]{0}', space=vmem, size = 0x20000, scoped, tag = 'output window, operand 0']
    loop: start=0, step=1, limit=4
    $region2: #{slmums_forward.1} parent=1 // loop_pre_header
      _
    $region3: #{slmums_forward.1} parent=1 // loop_header
      %s20 = sphi 0, %s24
      %p21 = scmp.ge.s32.totalorder %s20, 4
      %s30 = sphi 0, %s32
      %s33 = sphi 0, %s30
      %s34 = sphi 0, %s33
      %s50 = sphi 0, %s34
      %s54 = sphi 0, %s54
      %s56 = sphi 0, %s54
      %s57 = sphi 0, %s56
      %s71 = sphi 0, %s57
      %s75 = sphi 0, %s75
      %s77 = sphi 0, %s75
      %s78 = sphi 0, %s77
      %s92 = sphi 0, %s78
      %s96 = sphi 0, %s96
      %s98 = sphi 0, %s96
      %s99 = sphi 0, %s98
      %s113 = sphi 0, %s99
      %s117 = sphi 0, %s117
      %s119 = sphi 0, %s117
      %s120 = sphi 0, %s119
      %s134 = sphi 0, %s120
      %s138 = sphi 0, %s138
      %s140 = sphi 0, %s138
      %s141 = sphi 0, %s140
      %s155 = sphi 0, %s141
      %s159 = sphi 0, %s159
      %s161 = sphi 0, %s159
      %s162 = sphi 0, %s161
      %s176 = sphi 0, %s162
      %s180 = sphi 0, %s180
      %s182 = sphi 0, %s180
      %s183 = sphi 0, %s182
      %s197 = sphi 0, %s183
      %s201 = sphi 0, %s201
      %s203 = sphi 0, %s201
      %s204 = sphi 0, %s203
      %s218 = sphi 0, %s204
      %s222 = sphi 0, %s222
      %s224 = sphi 0, %s222
      %s225 = sphi 0, %s224
      %s239 = sphi 0, %s225
      %s243 = sphi 0, %s243
      %s245 = sphi 0, %s243
      %s246 = sphi 0, %s245
      %s260 = sphi 0, %s246
      %s266 = sphi 0, %s268
      %s269 = sphi 0, %s266
      %s270 = sphi 0, %s269
      %s286 = sphi 0, %s270
      %s292 = sphi 0, %s294
      %s295 = sphi 0, %s292
      %s296 = sphi 0, %s295
      %s312 = sphi 0, %s296
    $region4: #{slmums_forward.1} parent=1 // loop_header_branch
      %23 = sbr.rel (%p21) target = $region8
    $region5: #{slmums_forward.1} parent=1 // loop_body
      %s25 = ssub.s32 %s20, 1
      %s26 = ssub.s32 %s20, 2
      %s27 = sadd.s32 %s20, 1
      %s28 = ssub.s32 %s20, %s27
      %p29 = scmp.eq.s32.totalorder %s28, 0
      %s31 = sadd.s32 %s30, 1
      %s32 = scalar_select %p29, %s30, %s31
      %p35 = pneg %p29
      %p36 = scmp.eq.s32.totalorder %s20, 1
      %p37 = por %p35, %p36
      %p38 = scmp.ne.s32.totalorder %s30, %s33
      %p39 = scmp.eq.s32.totalorder %s20, 0
      %p40 = por %p38, %p39
      %p41 = scmp.ne.s32.totalorder %s30, %s33
      %p42 = scmp.eq.s32.totalorder %s25, 1
      %p43 = por %p41, %p42
      %p44 = scmp.ne.s32.totalorder %s33, %s34
      %p45 = scmp.eq.s32.totalorder %s25, 0
      %p46 = por %p44, %p45
      %p47 = scmp.ne.s32.totalorder %s33, %s34
      %p48 = scmp.eq.s32.totalorder %s26, 1
      %p49 = por %p47, %p48
      %p51 = scmp.ne.s32.totalorder %s34, %s50
      %p52 = scmp.eq.s32.totalorder %s26, 0
      %p53 = por %p51, %p52
      %s55 = sadd.s32 %s54, 1
      %p58 = scmp.eq.s32.totalorder %s20, 1
      %p59 = scmp.ne.s32.totalorder %s54, %s56
      %p60 = scmp.eq.s32.totalorder %s20, 0
      %p61 = por %p59, %p60
      %p62 = scmp.ne.s32.totalorder %s54, %s56
      %p63 = scmp.eq.s32.totalorder %s25, 1
      %p64 = por %p62, %p63
      %p65 = scmp.ne.s32.totalorder %s56, %s57
      %p66 = scmp.eq.s32.totalorder %s25, 0
      %p67 = por %p65, %p66
      %p68 = scmp.ne.s32.totalorder %s56, %s57
      %p69 = scmp.eq.s32.totalorder %s26, 1
      %p70 = por %p68, %p69
      %p72 = scmp.ne.s32.totalorder %s57, %s71
      %p73 = scmp.eq.s32.totalorder %s26, 0
      %p74 = por %p72, %p73
      %s76 = sadd.s32 %s75, 1
      %p79 = scmp.eq.s32.totalorder %s20, 1
      %p80 = scmp.ne.s32.totalorder %s75, %s77
      %p81 = scmp.eq.s32.totalorder %s20, 0
      %p82 = por %p80, %p81
      %p83 = scmp.ne.s32.totalorder %s75, %s77
      %p84 = scmp.eq.s32.totalorder %s25, 1
      %p85 = por %p83, %p84
      %p86 = scmp.ne.s32.totalorder %s77, %s78
      %p87 = scmp.eq.s32.totalorder %s25, 0
      %p88 = por %p86, %p87
      %p89 = scmp.ne.s32.totalorder %s77, %s78
      %p90 = scmp.eq.s32.totalorder %s26, 1
      %p91 = por %p89, %p90
      %p93 = scmp.ne.s32.totalorder %s78, %s92
      %p94 = scmp.eq.s32.totalorder %s26, 0
      %p95 = por %p93, %p94
      %s97 = sadd.s32 %s96, 1
      %p100 = scmp.eq.s32.totalorder %s20, 1
      %p101 = scmp.ne.s32.totalorder %s96, %s98
      %p102 = scmp.eq.s32.totalorder %s20, 0
      %p103 = por %p101, %p102
      %p104 = scmp.ne.s32.totalorder %s96, %s98
      %p105 = scmp.eq.s32.totalorder %s25, 1
      %p106 = por %p104, %p105
      %p107 = scmp.ne.s32.totalorder %s98, %s99
      %p108 = scmp.eq.s32.totalorder %s25, 0
      %p109 = por %p107, %p108
      %p110 = scmp.ne.s32.totalorder %s98, %s99
      %p111 = scmp.eq.s32.totalorder %s26, 1
      %p112 = por %p110, %p111
      %p114 = scmp.ne.s32.totalorder %s99, %s113
      %p115 = scmp.eq.s32.totalorder %s26, 0
      %p116 = por %p114, %p115
      %s118 = sadd.s32 %s117, 1
      %p121 = scmp.eq.s32.totalorder %s20, 1
      %p122 = scmp.ne.s32.totalorder %s117, %s119
      %p123 = scmp.eq.s32.totalorder %s20, 0
      %p124 = por %p122, %p123
      %p125 = scmp.ne.s32.totalorder %s117, %s119
      %p126 = scmp.eq.s32.totalorder %s25, 1
      %p127 = por %p125, %p126
      %p128 = scmp.ne.s32.totalorder %s119, %s120
      %p129 = scmp.eq.s32.totalorder %s25, 0
      %p130 = por %p128, %p129
      %p131 = scmp.ne.s32.totalorder %s119, %s120
      %p132 = scmp.eq.s32.totalorder %s26, 1
      %p133 = por %p131, %p132
      %p135 = scmp.ne.s32.totalorder %s120, %s134
      %p136 = scmp.eq.s32.totalorder %s26, 0
      %p137 = por %p135, %p136
      %s139 = sadd.s32 %s138, 1
      %p142 = scmp.eq.s32.totalorder %s20, 1
      %p143 = scmp.ne.s32.totalorder %s138, %s140
      %p144 = scmp.eq.s32.totalorder %s20, 0
      %p145 = por %p143, %p144
      %p146 = scmp.ne.s32.totalorder %s138, %s140
      %p147 = scmp.eq.s32.totalorder %s25, 1
      %p148 = por %p146, %p147
      %p149 = scmp.ne.s32.totalorder %s140, %s141
      %p150 = scmp.eq.s32.totalorder %s25, 0
      %p151 = por %p149, %p150
      %p152 = scmp.ne.s32.totalorder %s140, %s141
      %p153 = scmp.eq.s32.totalorder %s26, 1
      %p154 = por %p152, %p153
      %p156 = scmp.ne.s32.totalorder %s141, %s155
      %p157 = scmp.eq.s32.totalorder %s26, 0
      %p158 = por %p156, %p157
      %s160 = sadd.s32 %s159, 1
      %p163 = scmp.eq.s32.totalorder %s20, 1
      %p164 = scmp.ne.s32.totalorder %s159, %s161
      %p165 = scmp.eq.s32.totalorder %s20, 0
      %p166 = por %p164, %p165
      %p167 = scmp.ne.s32.totalorder %s159, %s161
      %p168 = scmp.eq.s32.totalorder %s25, 1
      %p169 = por %p167, %p168
      %p170 = scmp.ne.s32.totalorder %s161, %s162
      %p171 = scmp.eq.s32.totalorder %s25, 0
      %p172 = por %p170, %p171
      %p173 = scmp.ne.s32.totalorder %s161, %s162
      %p174 = scmp.eq.s32.totalorder %s26, 1
      %p175 = por %p173, %p174
      %p177 = scmp.ne.s32.totalorder %s162, %s176
      %p178 = scmp.eq.s32.totalorder %s26, 0
      %p179 = por %p177, %p178
      %s181 = sadd.s32 %s180, 1
      %p184 = scmp.eq.s32.totalorder %s20, 1
      %p185 = scmp.ne.s32.totalorder %s180, %s182
      %p186 = scmp.eq.s32.totalorder %s20, 0
      %p187 = por %p185, %p186
      %p188 = scmp.ne.s32.totalorder %s180, %s182
      %p189 = scmp.eq.s32.totalorder %s25, 1
      %p190 = por %p188, %p189
      %p191 = scmp.ne.s32.totalorder %s182, %s183
      %p192 = scmp.eq.s32.totalorder %s25, 0
      %p193 = por %p191, %p192
      %p194 = scmp.ne.s32.totalorder %s182, %s183
      %p195 = scmp.eq.s32.totalorder %s26, 1
      %p196 = por %p194, %p195
      %p198 = scmp.ne.s32.totalorder %s183, %s197
      %p199 = scmp.eq.s32.totalorder %s26, 0
      %p200 = por %p198, %p199
      %s202 = sadd.s32 %s201, 1
      %p205 = scmp.eq.s32.totalorder %s20, 1
      %p206 = scmp.ne.s32.totalorder %s201, %s203
      %p207 = scmp.eq.s32.totalorder %s20, 0
      %p208 = por %p206, %p207
      %p209 = scmp.ne.s32.totalorder %s201, %s203
      %p210 = scmp.eq.s32.totalorder %s25, 1
      %p211 = por %p209, %p210
      %p212 = scmp.ne.s32.totalorder %s203, %s204
      %p213 = scmp.eq.s32.totalorder %s25, 0
      %p214 = por %p212, %p213
      %p215 = scmp.ne.s32.totalorder %s203, %s204
      %p216 = scmp.eq.s32.totalorder %s26, 1
      %p217 = por %p215, %p216
      %p219 = scmp.ne.s32.totalorder %s204, %s218
      %p220 = scmp.eq.s32.totalorder %s26, 0
      %p221 = por %p219, %p220
      %s223 = sadd.s32 %s222, 1
      %p226 = scmp.eq.s32.totalorder %s20, 1
      %p227 = scmp.ne.s32.totalorder %s222, %s224
      %p228 = scmp.eq.s32.totalorder %s20, 0
      %p229 = por %p227, %p228
      %p230 = scmp.ne.s32.totalorder %s222, %s224
      %p231 = scmp.eq.s32.totalorder %s25, 1
      %p232 = por %p230, %p231
      %p233 = scmp.ne.s32.totalorder %s224, %s225
      %p234 = scmp.eq.s32.totalorder %s25, 0
      %p235 = por %p233, %p234
      %p236 = scmp.ne.s32.totalorder %s224, %s225
      %p237 = scmp.eq.s32.totalorder %s26, 1
      %p238 = por %p236, %p237
      %p240 = scmp.ne.s32.totalorder %s225, %s239
      %p241 = scmp.eq.s32.totalorder %s26, 0
      %p242 = por %p240, %p241
      %s244 = sadd.s32 %s243, 1
      %p247 = scmp.eq.s32.totalorder %s20, 1
      %p248 = scmp.ne.s32.totalorder %s243, %s245
      %p249 = scmp.eq.s32.totalorder %s20, 0
      %p250 = por %p248, %p249
      %p251 = scmp.ne.s32.totalorder %s243, %s245
      %p252 = scmp.eq.s32.totalorder %s25, 1
      %p253 = por %p251, %p252
      %p254 = scmp.ne.s32.totalorder %s245, %s246
      %p255 = scmp.eq.s32.totalorder %s25, 0
      %p256 = por %p254, %p255
      %p257 = scmp.ne.s32.totalorder %s245, %s246
      %p258 = scmp.eq.s32.totalorder %s26, 1
      %p259 = por %p257, %p258
      %p261 = scmp.ne.s32.totalorder %s246, %s260
      %p262 = scmp.eq.s32.totalorder %s26, 0
      %p263 = por %p261, %p262
      %s264 = ssub.s32 %s20, %s27
      %p265 = scmp.eq.s32.totalorder %s264, 0
      %s267 = sadd.s32 %s266, 1
      %s268 = scalar_select %p265, %s266, %s267
      %p271 = pneg %p265
      %p272 = scmp.eq.s32.totalorder %s20, 1
      %p273 = por %p271, %p272
      %p274 = scmp.ne.s32.totalorder %s266, %s269
      %p275 = scmp.eq.s32.totalorder %s20, 0
      %p276 = por %p274, %p275
      %p277 = scmp.ne.s32.totalorder %s266, %s269
      %p278 = scmp.eq.s32.totalorder %s25, 1
      %p279 = por %p277, %p278
      %p280 = scmp.ne.s32.totalorder %s269, %s270
      %p281 = scmp.eq.s32.totalorder %s25, 0
      %p282 = por %p280, %p281
      %p283 = scmp.ne.s32.totalorder %s269, %s270
      %p284 = scmp.eq.s32.totalorder %s26, 1
      %p285 = por %p283, %p284
      %p287 = scmp.ne.s32.totalorder %s270, %s286
      %p288 = scmp.eq.s32.totalorder %s26, 0
      %p289 = por %p287, %p288
      %s290 = ssub.s32 %s20, %s27
      %p291 = scmp.eq.s32.totalorder %s290, 0
      %s293 = sadd.s32 %s292, 1
      %s294 = scalar_select %p291, %s292, %s293
      %p297 = pneg %p291
      %p298 = scmp.eq.s32.totalorder %s20, 1
      %p299 = por %p297, %p298
      %p300 = scmp.ne.s32.totalorder %s292, %s295
      %p301 = scmp.eq.s32.totalorder %s20, 0
      %p302 = por %p300, %p301
      %p303 = scmp.ne.s32.totalorder %s292, %s295
      %p304 = scmp.eq.s32.totalorder %s25, 1
      %p305 = por %p303, %p304
      %p306 = scmp.ne.s32.totalorder %s295, %s296
      %p307 = scmp.eq.s32.totalorder %s25, 0
      %p308 = por %p306, %p307
      %p309 = scmp.ne.s32.totalorder %s295, %s296
      %p310 = scmp.eq.s32.totalorder %s26, 1
      %p311 = por %p309, %p310
      %p313 = scmp.ne.s32.totalorder %s296, %s312
      %p314 = scmp.eq.s32.totalorder %s26, 0
      %p315 = por %p313, %p314
      %p316 = scmp.le.s32.totalorder 1, %s20
      %p317 = scmp.lt.s32.totalorder %s20, 3
      %p318 = pnand %p316, %p317
      %p319 = pneg %p318
      // Predicated region
      $region9: #{slmums_forward.1} parent=5 // pred_check
        _
      $region10: #{slmums_forward.1} parent=5 // pred_check_branch
        %321 = sbr.rel (%p318) target = $region12
      $region11: #{slmums_forward.1} parent=5 // pred_region
        %s322 = ssub.s32 %s20, 1
        // Predicated region
        $region13: #{slmums_forward.1} parent=11 // pred_check
          %p323 = pneg %p67
        $region14: #{slmums_forward.1} parent=11 // pred_check_branch
          %325 = sbr.rel (%p323) target = $region16
        $region15: #{slmums_forward.1} parent=11 // pred_region
          _
        $region16: #{slmums_forward.1} parent=11 // pred_fallthru
          _
        // Predicated region
        $region17: #{slmums_forward.1} parent=11 // pred_check
          %p326 = pneg %p88
        $region18: #{slmums_forward.1} parent=11 // pred_check_branch
          %328 = sbr.rel (%p326) target = $region20
        $region19: #{slmums_forward.1} parent=11 // pred_region
          _
        $region20: #{slmums_forward.1} parent=11 // pred_fallthru
          _
        // Predicated region
        $region21: #{slmums_forward.1} parent=11 // pred_check
          %p329 = pneg %p109
        $region22: #{slmums_forward.1} parent=11 // pred_check_branch
          %331 = sbr.rel (%p329) target = $region24
        $region23: #{slmums_forward.1} parent=11 // pred_region
          _
        $region24: #{slmums_forward.1} parent=11 // pred_fallthru
          _
        // Predicated region
        $region25: #{slmums_forward.1} parent=11 // pred_check
          %p332 = pneg %p130
        $region26: #{slmums_forward.1} parent=11 // pred_check_branch
          %334 = sbr.rel (%p332) target = $region28
        $region27: #{slmums_forward.1} parent=11 // pred_region
          _
        $region28: #{slmums_forward.1} parent=11 // pred_fallthru
          _
        // Predicated region
        $region29: #{slmums_forward.1} parent=11 // pred_check
          %p335 = pneg %p151
        $region30: #{slmums_forward.1} parent=11 // pred_check_branch
          %337 = sbr.rel (%p335) target = $region32
        $region31: #{slmums_forward.1} parent=11 // pred_region
          _
        $region32: #{slmums_forward.1} parent=11 // pred_fallthru
          _
        // Predicated region
        $region33: #{slmums_forward.1} parent=11 // pred_check
          %p338 = pneg %p172
        $region34: #{slmums_forward.1} parent=11 // pred_check_branch
          %340 = sbr.rel (%p338) target = $region36
        $region35: #{slmums_forward.1} parent=11 // pred_region
          _
        $region36: #{slmums_forward.1} parent=11 // pred_fallthru
          _
        // Predicated region
        $region37: #{slmums_forward.1} parent=11 // pred_check
          %p341 = pneg %p193
        $region38: #{slmums_forward.1} parent=11 // pred_check_branch
          %343 = sbr.rel (%p341) target = $region40
        $region39: #{slmums_forward.1} parent=11 // pred_region
          _
        $region40: #{slmums_forward.1} parent=11 // pred_fallthru
          _
        // Predicated region
        $region41: #{slmums_forward.1} parent=11 // pred_check
          %p344 = pneg %p214
        $region42: #{slmums_forward.1} parent=11 // pred_check_branch
          %346 = sbr.rel (%p344) target = $region44
        $region43: #{slmums_forward.1} parent=11 // pred_region
          _
        $region44: #{slmums_forward.1} parent=11 // pred_fallthru
          _
        // Predicated region
        $region45: #{slmums_forward.1} parent=11 // pred_check
          %p347 = pneg %p235
        $region46: #{slmums_forward.1} parent=11 // pred_check_branch
          %349 = sbr.rel (%p347) target = $region48
        $region47: #{slmums_forward.1} parent=11 // pred_region
          _
        $region48: #{slmums_forward.1} parent=11 // pred_fallthru
          _
        // Predicated region
        $region49: #{slmums_forward.1} parent=11 // pred_check
          %p350 = pneg %p256
        $region50: #{slmums_forward.1} parent=11 // pred_check_branch
          %352 = sbr.rel (%p350) target = $region52
        $region51: #{slmums_forward.1} parent=11 // pred_region
          _
        $region52: #{slmums_forward.1} parent=11 // pred_fallthru
          _
      $region12: #{slmums_forward.1} parent=5 // pred_fallthru
        _
      %p353 = scmp.lt.s32.totalorder %s20, 2
      // Predicated region
      $region53: #{slmums_forward.1} parent=5 // pred_check
        %p354 = pneg %p353
      $region54: #{slmums_forward.1} parent=5 // pred_check_branch
        %356 = sbr.rel (%p354) target = $region56
      $region55: #{slmums_forward.1} parent=5 // pred_region
        // Predicated region
        $region57: #{slmums_forward.1} parent=55 // pred_check
          %p357 = pneg %p40
        $region58: #{slmums_forward.1} parent=55 // pred_check_branch
          %359 = sbr.rel (%p357) target = $region60
        $region59: #{slmums_forward.1} parent=55 // pred_region
          %s360 = sand.u32 %s30, 1
          %s361 = sand.u32 %s30, 1
          %s362 = smul.addr %s361, 128
          %s363 = scalar_lea.vmem [#allocation6], %s362
          %s364 = smul.u32 2, %s20
          %s365 = smul.addr %s364, 8
          %s366 = scalar_lea.vmem %s0, %s365
          // Predicated region
          $region61: #{slmums_forward.1} parent=59 // pred_check
            _
          $region62: #{slmums_forward.1} parent=59 // pred_check_branch
            %368 = sbr.rel (0) target = $region64
          $region63: #{slmums_forward.1} parent=59 // pred_region
            // Predicated region
            $region65: #{slmums_forward.1} parent=63 // pred_check
              _
            $region66: #{slmums_forward.1} parent=63 // pred_check_branch
              %370 = sbr.rel (0) target = $region68
            $region67: #{slmums_forward.1} parent=63 // pred_region
              // Predicated region
              $region80: #{slmums_forward.1} parent=67 // pred_check
                _
              $region81: #{slmums_forward.1} parent=67 // pred_check_branch
                %416 = sbr.rel (0) target = $region83
              $region82: #{slmums_forward.1} parent=67 // pred_region
                loop: start=0, step=1, limit=1
                $region84: #{slmums_forward.1} parent=82 // loop_pre_header
                  _
                $region85: #{slmums_forward.1} parent=82 // loop_header
                  %s418 = sphi 0, %s422
                  %p419 = scmp.ge.s32.totalorder %s418, 1
                  %s423 = sphi %s366, %s366
                  %s424 = sphi %s363, %s363
                $region86: #{slmums_forward.1} parent=82 // loop_header_branch
                  %421 = sbr.rel (%p419) target = $region90
                $region87: #{slmums_forward.1} parent=82 // loop_body
                  %v425 = vld [vmem:[%s423] sm:$0xff]
                  %426 = vst [vmem:[%s424] sm:$0xff] %v425
                  %v427 = vld [vmem:[%s423 + $0x8] sm:$0xff]
                  %428 = vst [vmem:[%s424 + $0x8] sm:$0xff] %v427
                  %v429 = vld [vmem:[%s423 + $0x20] sm:$0xff]
                  %430 = vst [vmem:[%s424 + $0x10] sm:$0xff] %v429
                  %v431 = vld [vmem:[%s423 + $0x28] sm:$0xff]
                  %432 = vst [vmem:[%s424 + $0x18] sm:$0xff] %v431
                  %v433 = vld [vmem:[%s423 + $0x40] sm:$0xff]
                  %434 = vst [vmem:[%s424 + $0x20] sm:$0xff] %v433
                  %v435 = vld [vmem:[%s423 + $0x48] sm:$0xff]
                  %436 = vst [vmem:[%s424 + $0x28] sm:$0xff] %v435
                  %v437 = vld [vmem:[%s423 + $0x60] sm:$0xff]
                  %438 = vst [vmem:[%s424 + $0x30] sm:$0xff] %v437
                  %v439 = vld [vmem:[%s423 + $0x68] sm:$0xff]
                  %440 = vst [vmem:[%s424 + $0x38] sm:$0xff] %v439
                  %v441 = vld [vmem:[%s423 + $0x80] sm:$0xff]
                  %442 = vst [vmem:[%s424 + $0x40] sm:$0xff] %v441
                  %v443 = vld [vmem:[%s423 + $0x88] sm:$0xff]
                  %444 = vst [vmem:[%s424 + $0x48] sm:$0xff] %v443
                  %v445 = vld [vmem:[%s423 + $0xa0] sm:$0xff]
                  %446 = vst [vmem:[%s424 + $0x50] sm:$0xff] %v445
                  %v447 = vld [vmem:[%s423 + $0xa8] sm:$0xff]
                  %448 = vst [vmem:[%s424 + $0x58] sm:$0xff] %v447
                  %v449 = vld [vmem:[%s423 + $0xc0] sm:$0xff]
                  %450 = vst [vmem:[%s424 + $0x60] sm:$0xff] %v449
                  %v451 = vld [vmem:[%s423 + $0xc8] sm:$0xff]
                  %452 = vst [vmem:[%s424 + $0x68] sm:$0xff] %v451
                  %v453 = vld [vmem:[%s423 + $0xe0] sm:$0xff]
                  %454 = vst [vmem:[%s424 + $0x70] sm:$0xff] %v453
                  %v455 = vld [vmem:[%s423 + $0xe8] sm:$0xff]
                  %456 = vst [vmem:[%s424 + $0x78] sm:$0xff] %v455
                $region88: #{slmums_forward.1} parent=82 // loop_footer
                  %s422 = sadd.s32 1, %s418
                $region89: #{slmums_forward.1} parent=82 // loop_footer_branch
                  %417 = sbr.rel target = $region85
                $region90: #{slmums_forward.1} parent=82 // loop_exit
                  _
              $region83: #{slmums_forward.1} parent=67 // pred_fallthru
                _
              // Predicated region
              $region91: #{slmums_forward.1} parent=67 // pred_check
                _
              $region92: #{slmums_forward.1} parent=67 // pred_check_branch
                %458 = sbr.rel target = $region94
              $region93: #{slmums_forward.1} parent=67 // pred_region
                _
              $region94: #{slmums_forward.1} parent=67 // pred_fallthru
                _
            $region68: #{slmums_forward.1} parent=63 // pred_fallthru
              _
            // Predicated region
            $region69: #{slmums_forward.1} parent=63 // pred_check
              _
            $region70: #{slmums_forward.1} parent=63 // pred_check_branch
              %372 = sbr.rel target = $region72
            $region71: #{slmums_forward.1} parent=63 // pred_region
              %s374 = ssub.s32 256, 1
              loop: start=0, step=1, limit=1
              $region73: #{slmums_forward.1} parent=71 // loop_pre_header
                _
              $region74: #{slmums_forward.1} parent=71 // loop_header
                %s376 = sphi 0, %s380
                %p377 = scmp.ge.s32.totalorder %s376, 1
                %s381 = sphi %s366, %s366
                %s382 = sphi %s363, %s363
              $region75: #{slmums_forward.1} parent=71 // loop_header_branch
                %379 = sbr.rel (%p377) target = $region79
              $region76: #{slmums_forward.1} parent=71 // loop_body
                %v383 = vld [vmem:[%s381] sm:%s374]
                %384 = vst [vmem:[%s382] sm:%s374] %v383
                %v385 = vld [vmem:[%s381 + $0x8] sm:%s374]
                %386 = vst [vmem:[%s382 + $0x8] sm:%s374] %v385
                %v387 = vld [vmem:[%s381 + $0x20] sm:%s374]
                %388 = vst [vmem:[%s382 + $0x10] sm:%s374] %v387
                %v389 = vld [vmem:[%s381 + $0x28] sm:%s374]
                %390 = vst [vmem:[%s382 + $0x18] sm:%s374] %v389
                %v391 = vld [vmem:[%s381 + $0x40] sm:%s374]
                %392 = vst [vmem:[%s382 + $0x20] sm:%s374] %v391
                %v393 = vld [vmem:[%s381 + $0x48] sm:%s374]
                %394 = vst [vmem:[%s382 + $0x28] sm:%s374] %v393
                %v395 = vld [vmem:[%s381 + $0x60] sm:%s374]
                %396 = vst [vmem:[%s382 + $0x30] sm:%s374] %v395
                %v397 = vld [vmem:[%s381 + $0x68] sm:%s374]
                %398 = vst [vmem:[%s382 + $0x38] sm:%s374] %v397
                %v399 = vld [vmem:[%s381 + $0x80] sm:%s374]
                %400 = vst [vmem:[%s382 + $0x40] sm:%s374] %v399
                %v401 = vld [vmem:[%s381 + $0x88] sm:%s374]
                %402 = vst [vmem:[%s382 + $0x48] sm:%s374] %v401
                %v403 = vld [vmem:[%s381 + $0xa0] sm:%s374]
                %404 = vst [vmem:[%s382 + $0x50] sm:%s374] %v403
                %v405 = vld [vmem:[%s381 + $0xa8] sm:%s374]
                %406 = vst [vmem:[%s382 + $0x58] sm:%s374] %v405
                %v407 = vld [vmem:[%s381 + $0xc0] sm:%s374]
                %408 = vst [vmem:[%s382 + $0x60] sm:%s374] %v407
                %v409 = vld [vmem:[%s381 + $0xc8] sm:%s374]
                %410 = vst [vmem:[%s382 + $0x68] sm:%s374] %v409
                %v411 = vld [vmem:[%s381 + $0xe0] sm:%s374]
                %412 = vst [vmem:[%s382 + $0x70] sm:%s374] %v411
                %v413 = vld [vmem:[%s381 + $0xe8] sm:%s374]
                %414 = vst [vmem:[%s382 + $0x78] sm:%s374] %v413
              $region77: #{slmums_forward.1} parent=71 // loop_footer
                %s380 = sadd.s32 1, %s376
              $region78: #{slmums_forward.1} parent=71 // loop_footer_branch
                %375 = sbr.rel target = $region74
              $region79: #{slmums_forward.1} parent=71 // loop_exit
                _
            $region72: #{slmums_forward.1} parent=63 // pred_fallthru
              _
          $region64: #{slmums_forward.1} parent=59 // pred_fallthru
            _
          %459 = vnop
        $region60: #{slmums_forward.1} parent=55 // pred_fallthru
          _
      $region56: #{slmums_forward.1} parent=5 // pred_fallthru
        _
      %p460 = scmp.le.s32.totalorder 1, %s20
      %p461 = scmp.lt.s32.totalorder %s20, 3
      %p462 = pnand %p460, %p461
      %p463 = pneg %p462
      // Predicated region
      $region95: #{slmums_forward.1} parent=5 // pred_check
        _
      $region96: #{slmums_forward.1} parent=5 // pred_check_branch
        %465 = sbr.rel (%p462) target = $region98
      $region97: #{slmums_forward.1} parent=5 // pred_region
        %s466 = ssub.s32 %s20, 1
        %s467 = sand.u32 %s33, 1
        %s468 = sand.u32 %s33, 1
        %s469 = smul.addr %s468, 128
        %s470 = scalar_lea.vmem [#allocation6], %s469
        // Predicated region
        $region99: #{slmums_forward.1} parent=97 // pred_check
          %p471 = pneg %p46
        $region100: #{slmums_forward.1} parent=97 // pred_check_branch
          %473 = sbr.rel (%p471) target = $region102
        $region101: #{slmums_forward.1} parent=97 // pred_region
          _
        $region102: #{slmums_forward.1} parent=97 // pred_fallthru
          _
        %s474 = sand.u32 %s33, 1
        %s475 = sand.u32 %s33, 1
        %s476 = smul.addr %s475, 128
        %s477 = scalar_lea.vmem [#allocation6], %s476
        %p478 = pneg %p46
        %p479 = pneg %p43
        %p480 = pneg %p67
        %p481 = pneg %p64
        %p482 = pneg %p88
        %p483 = pneg %p85
        %p484 = pneg %p109
        %p485 = pneg %p106
        %p486 = pneg %p130
        %p487 = pneg %p127
        %p488 = pneg %p151
        %p489 = pneg %p148
        %p490 = pneg %p172
        %p491 = pneg %p169
        %p492 = pneg %p193
        %p493 = pneg %p190
        %p494 = pneg %p214
        %p495 = pneg %p211
        %p496 = pneg %p235
        %p497 = pneg %p232
        %p498 = pneg %p256
        %p499 = pneg %p253
        %p500 = pneg %p282
        %p501 = pneg %p279
        %s502 = sand.u32 %s269, 1
        %s503 = sand.u32 %s269, 1
        %s504 = smul.addr %s503, 128
        %s505 = scalar_lea.vmem [#allocation7], %s504
        %p506 = pneg %p308
        %p507 = pneg %p305
        %p508 = scmp.lt.s32.totalorder %s25, 1
        %s509 = scalar_select %p508, %s25, 1
        %s510 = scalar_lea.vmem %s12, %s509
        %s511 = smul.u32 2, %s25
        %s512 = smul.u32 2, %s25
        %p513 = scmp.lt.s32.totalorder %s25, 1
        %s514 = scalar_select %p513, %s25, 1
        %s515 = scalar_lea.vmem %s12, %s514
        %v517 = vld [vmem:[%s1] sm:$0x1]
        %v519 = vlaneseq
        %v520 = vshrl.u32 %v519, 7
        %v521 = vsub.s32 0, %v520
        %v522 = vrot.slane %v517, %v521
        %v524 = vld [vmem:[%s2] sm:$0x1]
        %v526 = vlaneseq
        %v527 = vshrl.u32 %v526, 7
        %v528 = vsub.s32 0, %v527
        %v529 = vrot.slane %v524, %v528
        %v531 = vld [vmem:[%s3] sm:$0x1]
        %v533 = vlaneseq
        %v534 = vshrl.u32 %v533, 7
        %v535 = vsub.s32 0, %v534
        %v536 = vrot.slane %v531, %v535
        %s538 = sld [smem:[#allocation5]]
        %v539 = vlaneseq
        %v540 = vand.u32 %v539, 127
        %v541 = vld [vmem:[%s470] sm:$0xff]
        %v542 = vld [vmem:[%s470 + $0x8] sm:$0xff]
        %v543 = vmul.f32 %v541, %v522
        %v544 = vmul.f32 %v542, %v522
        %v545 = vadd.f32 %v543, %v529
        %v546 = vadd.f32 %v544, %v529
        %v547 = vmul.f32 %v545, 0.5
        %v548 = vmul.f32 %v546, 0.5
        %v549 = vadd.f32 %v547, 0.0
        %v550 = vadd.f32 %v548, 0.0
        %vm551 = vcmp.ge.f32.partialorder %v549, 0.5
        %vm552 = vcmp.ge.f32.partialorder %v550, 0.5
        %v553 = vsel %vm551, 1, 0
        %v554 = vsel %vm552, 1, 0
        %v555 = vcvt.s32.f32 %v553
        %v556 = vcvt.s32.f32 %v554
        %v557 = vsub.f32 1.0, %v555
        %v558 = vsub.f32 1.0, %v556
        %v559 = vmul.f32 %v549, %v557
        %v560 = vmul.f32 %v550, %v558
        %v561 = vpack.c.bf16 %v556, %v555
        %v563 = vunpack.c.l.b16 %v561
        %v564 = vunpack.c.h.b16 %v561
        %v565 = vpack.c.b16 %v563, %v563
        %v566 = vpack.c.b16 %v564, %v564
        %569 = vst [vmem:[#allocation2] sm:$0xf] %v565
        %570 = vst [vmem:[#allocation2 + $0x4] sm:$0xf] %v566
        %v571 = vadd.f32 %v555, 0.0
        %v572 = vadd.f32 %v556, 0.0
        %v573 = vmul.f32 %v555, %v536
        %v574 = vmul.f32 %v556, %v536
        %575 = vadd.xlane.f32.xlu0 %v573
        %v576 = vpop.xlane.xlu0 %575
        %577 = vadd.xlane.f32.xlu0 %v574
        %v578 = vpop.xlane.xlu0 %577
        %v579 = vstv %s538
        %v580 = vadd.f32 %v576, %v579
        %v581 = vadd.f32 %v578, %v579
        %v582 = vmul.f32 %v580, 0.5
        %v583 = vmul.f32 %v581, 0.5
        %v584 = vadd.f32 %v582, 0.0
        %v585 = vadd.f32 %v583, 0.0
        %vm586 = vcmp.ge.f32.partialorder %v584, 0.5
        %vm587 = vcmp.ge.f32.partialorder %v585, 0.5
        %v588 = vsel %vm586, 1, 0
        %v589 = vsel %vm587, 1, 0
        %v590 = vcvt.s32.f32 %v588
        %v591 = vcvt.s32.f32 %v589
        %v592 = vsub.f32 1.0, %v590
        %v593 = vsub.f32 1.0, %v591
        %v594 = vmul.f32 %v584, %v592
        %v595 = vmul.f32 %v585, %v593
        %vm596 = vcmp.eq.s32.totalorder %v540, 0
        %597 = vrot.lane.b32.xlu0 0.0, 1
        %v598 = vpop.permute.xlu0 %597
        %v599 = vsel %vm596, %v590, %v598
        %v600 = vsel %vm596, %v591, %v598
        %v601 = vpack.c.bf16 %v600, %v599
        %v603 = vunpack.c.l.b16 %v601
        %v604 = vunpack.c.h.b16 %v601
        %v605 = vpack.c.b16 %v603, %v603
        %v606 = vpack.c.b16 %v604, %v604
        %609 = vst [vmem:[#allocation3] sm:$0xf] %v605
        %610 = vst [vmem:[#allocation3 + $0x4] sm:$0xf] %v606
        %s611 = scalar_lea.vmem %s470, 16 [#allocation6]
        %v612 = vld [vmem:[%s611] sm:$0xff]
        %v613 = vld [vmem:[%s611 + $0x8] sm:$0xff]
        %v614 = vmul.f32 %v612, %v522
        %v615 = vmul.f32 %v613, %v522
        %v616 = vadd.f32 %v614, %v529
        %v617 = vadd.f32 %v615, %v529
        %v618 = vsub.f32 %v616, %v559
        %v619 = vsub.f32 %v617, %v560
        %v620 = vmul.f32 %v618, 0.5
        %v621 = vmul.f32 %v619, 0.5
        %v622 = vadd.f32 %v559, %v620
        %v623 = vadd.f32 %v560, %v621
        %vm624 = vcmp.ge.f32.partialorder %v622, 0.5
        %vm625 = vcmp.ge.f32.partialorder %v623, 0.5
        %v626 = vsel %vm624, 1, 0
        %v627 = vsel %vm625, 1, 0
        %v628 = vcvt.s32.f32 %v626
        %v629 = vcvt.s32.f32 %v627
        %v630 = vsub.f32 1.0, %v628
        %v631 = vsub.f32 1.0, %v629
        %v632 = vmul.f32 %v622, %v630
        %v633 = vmul.f32 %v623, %v631
        %v634 = vpack.c.bf16 %v629, %v628
        %v636 = vunpack.c.l.b16 %v634
        %v637 = vunpack.c.h.b16 %v634
        %v638 = vpack.c.b16 %v636, %v636
        %v639 = vpack.c.b16 %v637, %v637
        %s642 = scalar_lea.vmem [#allocation2], 8
        %643 = vst [vmem:[%s642] sm:$0xf] %v638
        %644 = vst [vmem:[%s642 + $0x4] sm:$0xf] %v639
        %v645 = vadd.f32 %v571, %v628
        %v646 = vadd.f32 %v572, %v629
        %v647 = vmul.f32 %v628, %v536
        %v648 = vmul.f32 %v629, %v536
        %649 = vadd.xlane.f32.xlu0 %v647
        %v650 = vpop.xlane.xlu0 %649
        %651 = vadd.xlane.f32.xlu0 %v648
        %v652 = vpop.xlane.xlu0 %651
        %v653 = vadd.f32 %v650, %v579
        %v654 = vadd.f32 %v652, %v579
        %v655 = vsub.f32 %v653, %v594
        %v656 = vsub.f32 %v654, %v595
        %v657 = vmul.f32 %v655, 0.5
        %v658 = vmul.f32 %v656, 0.5
        %v659 = vadd.f32 %v594, %v657
        %v660 = vadd.f32 %v595, %v658
        %vm661 = vcmp.ge.f32.partialorder %v659, 0.5
        %vm662 = vcmp.ge.f32.partialorder %v660, 0.5
        %v663 = vsel %vm661, 1, 0
        %v664 = vsel %vm662, 1, 0
        %v665 = vcvt.s32.f32 %v663
        %v666 = vcvt.s32.f32 %v664
        %v667 = vsub.f32 1.0, %v665
        %v668 = vsub.f32 1.0, %v666
        %v669 = vmul.f32 %v659, %v667
        %v670 = vmul.f32 %v660, %v668
        %671 = vrot.lane.b32.xlu0 %v599, 1
        %v672 = vpop.permute.xlu0 %671
        %673 = vrot.lane.b32.xlu0 %v600, 1
        %v674 = vpop.permute.xlu0 %673
        %v675 = vsel %vm596, %v665, %v672
        %v676 = vsel %vm596, %v666, %v674
        %v677 = vpack.c.bf16 %v676, %v675
        %v679 = vunpack.c.l.b16 %v677
        %v680 = vunpack.c.h.b16 %v677
        %v681 = vpack.c.b16 %v679, %v679
        %v682 = vpack.c.b16 %v680, %v680
        %s685 = scalar_lea.vmem [#allocation3], 8
        %686 = vst [vmem:[%s685] sm:$0xf] %v681
        %687 = vst [vmem:[%s685 + $0x4] sm:$0xf] %v682
        %s688 = scalar_lea.vmem %s470, 32 [#allocation6]
        %v689 = vld [vmem:[%s688] sm:$0xff]
        %v690 = vld [vmem:[%s688 + $0x8] sm:$0xff]
        %v691 = vmul.f32 %v689, %v522
        %v692 = vmul.f32 %v690, %v522
        %v693 = vadd.f32 %v691, %v529
        %v694 = vadd.f32 %v692, %v529
        %v695 = vsub.f32 %v693, %v632
        %v696 = vsub.f32 %v694, %v633
        %v697 = vmul.f32 %v695, 0.5
        %v698 = vmul.f32 %v696, 0.5
        %v699 = vadd.f32 %v632, %v697
        %v700 = vadd.f32 %v633, %v698
        %vm701 = vcmp.ge.f32.partialorder %v699, 0.5
        %vm702 = vcmp.ge.f32.partialorder %v700, 0.5
        %v703 = vsel %vm701, 1, 0
        %v704 = vsel %vm702, 1, 0
        %v705 = vcvt.s32.f32 %v703
        %v706 = vcvt.s32.f32 %v704
        %v707 = vsub.f32 1.0, %v705
        %v708 = vsub.f32 1.0, %v706
        %v709 = vmul.f32 %v699, %v707
        %v710 = vmul.f32 %v700, %v708
        %v711 = vpack.c.bf16 %v706, %v705
        %v713 = vunpack.c.l.b16 %v711
        %v714 = vunpack.c.h.b16 %v711
        %v715 = vpack.c.b16 %v713, %v713
        %v716 = vpack.c.b16 %v714, %v714
        %s719 = scalar_lea.vmem [#allocation2], 16
        %720 = vst [vmem:[%s719] sm:$0xf] %v715
        %721 = vst [vmem:[%s719 + $0x4] sm:$0xf] %v716
        %v722 = vadd.f32 %v645, %v705
        %v723 = vadd.f32 %v646, %v706
        %v724 = vmul.f32 %v705, %v536
        %v725 = vmul.f32 %v706, %v536
        %726 = vadd.xlane.f32.xlu0 %v724
        %v727 = vpop.xlane.xlu0 %726
        %728 = vadd.xlane.f32.xlu0 %v725
        %v729 = vpop.xlane.xlu0 %728
        %v730 = vadd.f32 %v727, %v579
        %v731 = vadd.f32 %v729, %v579
        %v732 = vsub.f32 %v730, %v669
        %v733 = vsub.f32 %v731, %v670
        %v734 = vmul.f32 %v732, 0.5
        %v735 = vmul.f32 %v733, 0.5
        %v736 = vadd.f32 %v669, %v734
        %v737 = vadd.f32 %v670, %v735
        %vm738 = vcmp.ge.f32.partialorder %v736, 0.5
        %vm739 = vcmp.ge.f32.partialorder %v737, 0.5
        %v740 = vsel %vm738, 1, 0
        %v741 = vsel %vm739, 1, 0
        %v742 = vcvt.s32.f32 %v740
        %v743 = vcvt.s32.f32 %v741
        %v744 = vsub.f32 1.0, %v742
        %v745 = vsub.f32 1.0, %v743
        %v746 = vmul.f32 %v736, %v744
        %v747 = vmul.f32 %v737, %v745
        %748 = vrot.lane.b32.xlu0 %v675, 1
        %v749 = vpop.permute.xlu0 %748
        %750 = vrot.lane.b32.xlu0 %v676, 1
        %v751 = vpop.permute.xlu0 %750
        %v752 = vsel %vm596, %v742, %v749
        %v753 = vsel %vm596, %v743, %v751
        %v754 = vpack.c.bf16 %v753, %v752
        %v756 = vunpack.c.l.b16 %v754
        %v757 = vunpack.c.h.b16 %v754
        %v758 = vpack.c.b16 %v756, %v756
        %v759 = vpack.c.b16 %v757, %v757
        %s762 = scalar_lea.vmem [#allocation3], 16
        %763 = vst [vmem:[%s762] sm:$0xf] %v758
        %764 = vst [vmem:[%s762 + $0x4] sm:$0xf] %v759
        %s765 = scalar_lea.vmem %s470, 48 [#allocation6]
        %v766 = vld [vmem:[%s765] sm:$0xff]
        %v767 = vld [vmem:[%s765 + $0x8] sm:$0xff]
        %v768 = vmul.f32 %v766, %v522
        %v769 = vmul.f32 %v767, %v522
        %v770 = vadd.f32 %v768, %v529
        %v771 = vadd.f32 %v769, %v529
        %v772 = vsub.f32 %v770, %v709
        %v773 = vsub.f32 %v771, %v710
        %v774 = vmul.f32 %v772, 0.5
        %v775 = vmul.f32 %v773, 0.5
        %v776 = vadd.f32 %v709, %v774
        %v777 = vadd.f32 %v710, %v775
        %vm778 = vcmp.ge.f32.partialorder %v776, 0.5
        %vm779 = vcmp.ge.f32.partialorder %v777, 0.5
        %v780 = vsel %vm778, 1, 0
        %v781 = vsel %vm779, 1, 0
        %v782 = vcvt.s32.f32 %v780
        %v783 = vcvt.s32.f32 %v781
        %v784 = vsub.f32 1.0, %v782
        %v785 = vsub.f32 1.0, %v783
        %v786 = vmul.f32 %v776, %v784
        %v787 = vmul.f32 %v777, %v785
        %v788 = vpack.c.bf16 %v783, %v782
        %v790 = vunpack.c.l.b16 %v788
        %v791 = vunpack.c.h.b16 %v788
        %v792 = vpack.c.b16 %v790, %v790
        %v793 = vpack.c.b16 %v791, %v791
        %s796 = scalar_lea.vmem [#allocation2], 24
        %797 = vst [vmem:[%s796] sm:$0xf] %v792
        %798 = vst [vmem:[%s796 + $0x4] sm:$0xf] %v793
        %v799 = vadd.f32 %v722, %v782
        %v800 = vadd.f32 %v723, %v783
        %v801 = vmul.f32 %v782, %v536
        %v802 = vmul.f32 %v783, %v536
        %803 = vadd.xlane.f32.xlu0 %v801
        %v804 = vpop.xlane.xlu0 %803
        %805 = vadd.xlane.f32.xlu0 %v802
        %v806 = vpop.xlane.xlu0 %805
        %v807 = vadd.f32 %v804, %v579
        %v808 = vadd.f32 %v806, %v579
        %v809 = vsub.f32 %v807, %v746
        %v810 = vsub.f32 %v808, %v747
        %v811 = vmul.f32 %v809, 0.5
        %v812 = vmul.f32 %v810, 0.5
        %v813 = vadd.f32 %v746, %v811
        %v814 = vadd.f32 %v747, %v812
        %vm815 = vcmp.ge.f32.partialorder %v813, 0.5
        %vm816 = vcmp.ge.f32.partialorder %v814, 0.5
        %v817 = vsel %vm815, 1, 0
        %v818 = vsel %vm816, 1, 0
        %v819 = vcvt.s32.f32 %v817
        %v820 = vcvt.s32.f32 %v818
        %v821 = vsub.f32 1.0, %v819
        %v822 = vsub.f32 1.0, %v820
        %v823 = vmul.f32 %v813, %v821
        %v824 = vmul.f32 %v814, %v822
        %825 = vrot.lane.b32.xlu0 %v752, 1
        %v826 = vpop.permute.xlu0 %825
        %827 = vrot.lane.b32.xlu0 %v753, 1
        %v828 = vpop.permute.xlu0 %827
        %v829 = vsel %vm596, %v819, %v826
        %v830 = vsel %vm596, %v820, %v828
        %v831 = vpack.c.bf16 %v830, %v829
        %v833 = vunpack.c.l.b16 %v831
        %v834 = vunpack.c.h.b16 %v831
        %v835 = vpack.c.b16 %v833, %v833
        %v836 = vpack.c.b16 %v834, %v834
        %s839 = scalar_lea.vmem [#allocation3], 24
        %840 = vst [vmem:[%s839] sm:$0xf] %v835
        %841 = vst [vmem:[%s839 + $0x4] sm:$0xf] %v836
        %s842 = scalar_lea.vmem %s470, 64 [#allocation6]
        %v843 = vld [vmem:[%s842] sm:$0xff]
        %v844 = vld [vmem:[%s842 + $0x8] sm:$0xff]
        %v845 = vmul.f32 %v843, %v522
        %v846 = vmul.f32 %v844, %v522
        %v847 = vadd.f32 %v845, %v529
        %v848 = vadd.f32 %v846, %v529
        %v849 = vsub.f32 %v847, %v786
        %v850 = vsub.f32 %v848, %v787
        %v851 = vmul.f32 %v849, 0.5
        %v852 = vmul.f32 %v850, 0.5
        %v853 = vadd.f32 %v786, %v851
        %v854 = vadd.f32 %v787, %v852
        %vm855 = vcmp.ge.f32.partialorder %v853, 0.5
        %vm856 = vcmp.ge.f32.partialorder %v854, 0.5
        %v857 = vsel %vm855, 1, 0
        %v858 = vsel %vm856, 1, 0
        %v859 = vcvt.s32.f32 %v857
        %v860 = vcvt.s32.f32 %v858
        %v861 = vsub.f32 1.0, %v859
        %v862 = vsub.f32 1.0, %v860
        %v863 = vmul.f32 %v853, %v861
        %v864 = vmul.f32 %v854, %v862
        %v865 = vpack.c.bf16 %v860, %v859
        %v867 = vunpack.c.l.b16 %v865
        %v868 = vunpack.c.h.b16 %v865
        %v869 = vpack.c.b16 %v867, %v867
        %v870 = vpack.c.b16 %v868, %v868
        %s873 = scalar_lea.vmem [#allocation2], 32
        %874 = vst [vmem:[%s873] sm:$0xf] %v869
        %875 = vst [vmem:[%s873 + $0x4] sm:$0xf] %v870
        %v876 = vadd.f32 %v799, %v859
        %v877 = vadd.f32 %v800, %v860
        %v878 = vmul.f32 %v859, %v536
        %v879 = vmul.f32 %v860, %v536
        %880 = vadd.xlane.f32.xlu0 %v878
        %v881 = vpop.xlane.xlu0 %880
        %882 = vadd.xlane.f32.xlu0 %v879
        %v883 = vpop.xlane.xlu0 %882
        %v884 = vadd.f32 %v881, %v579
        %v885 = vadd.f32 %v883, %v579
        %v886 = vsub.f32 %v884, %v823
        %v887 = vsub.f32 %v885, %v824
        %v888 = vmul.f32 %v886, 0.5
        %v889 = vmul.f32 %v887, 0.5
        %v890 = vadd.f32 %v823, %v888
        %v891 = vadd.f32 %v824, %v889
        %vm892 = vcmp.ge.f32.partialorder %v890, 0.5
        %vm893 = vcmp.ge.f32.partialorder %v891, 0.5
        %v894 = vsel %vm892, 1, 0
        %v895 = vsel %vm893, 1, 0
        %v896 = vcvt.s32.f32 %v894
        %v897 = vcvt.s32.f32 %v895
        %v898 = vsub.f32 1.0, %v896
        %v899 = vsub.f32 1.0, %v897
        %v900 = vmul.f32 %v890, %v898
        %v901 = vmul.f32 %v891, %v899
        %902 = vrot.lane.b32.xlu0 %v829, 1
        %v903 = vpop.permute.xlu0 %902
        %904 = vrot.lane.b32.xlu0 %v830, 1
        %v905 = vpop.permute.xlu0 %904
        %v906 = vsel %vm596, %v896, %v903
        %v907 = vsel %vm596, %v897, %v905
        %v908 = vpack.c.bf16 %v907, %v906
        %v910 = vunpack.c.l.b16 %v908
        %v911 = vunpack.c.h.b16 %v908
        %v912 = vpack.c.b16 %v910, %v910
        %v913 = vpack.c.b16 %v911, %v911
        %s916 = scalar_lea.vmem [#allocation3], 32
        %917 = vst [vmem:[%s916] sm:$0xf] %v912
        %918 = vst [vmem:[%s916 + $0x4] sm:$0xf] %v913
        %s919 = scalar_lea.vmem %s470, 80 [#allocation6]
        %v920 = vld [vmem:[%s919] sm:$0xff]
        %v921 = vld [vmem:[%s919 + $0x8] sm:$0xff]
        %v922 = vmul.f32 %v920, %v522
        %v923 = vmul.f32 %v921, %v522
        %v924 = vadd.f32 %v922, %v529
        %v925 = vadd.f32 %v923, %v529
        %v926 = vsub.f32 %v924, %v863
        %v927 = vsub.f32 %v925, %v864
        %v928 = vmul.f32 %v926, 0.5
        %v929 = vmul.f32 %v927, 0.5
        %v930 = vadd.f32 %v863, %v928
        %v931 = vadd.f32 %v864, %v929
        %vm932 = vcmp.ge.f32.partialorder %v930, 0.5
        %vm933 = vcmp.ge.f32.partialorder %v931, 0.5
        %v934 = vsel %vm932, 1, 0
        %v935 = vsel %vm933, 1, 0
        %v936 = vcvt.s32.f32 %v934
        %v937 = vcvt.s32.f32 %v935
        %v938 = vsub.f32 1.0, %v936
        %v939 = vsub.f32 1.0, %v937
        %v940 = vmul.f32 %v930, %v938
        %v941 = vmul.f32 %v931, %v939
        %v942 = vpack.c.bf16 %v937, %v936
        %v944 = vunpack.c.l.b16 %v942
        %v945 = vunpack.c.h.b16 %v942
        %v946 = vpack.c.b16 %v944, %v944
        %v947 = vpack.c.b16 %v945, %v945
        %s950 = scalar_lea.vmem [#allocation2], 40
        %951 = vst [vmem:[%s950] sm:$0xf] %v946
        %952 = vst [vmem:[%s950 + $0x4] sm:$0xf] %v947
        %v953 = vadd.f32 %v876, %v936
        %v954 = vadd.f32 %v877, %v937
        %v955 = vmul.f32 %v936, %v536
        %v956 = vmul.f32 %v937, %v536
        %957 = vadd.xlane.f32.xlu0 %v955
        %v958 = vpop.xlane.xlu0 %957
        %959 = vadd.xlane.f32.xlu0 %v956
        %v960 = vpop.xlane.xlu0 %959
        %v961 = vadd.f32 %v958, %v579
        %v962 = vadd.f32 %v960, %v579
        %v963 = vsub.f32 %v961, %v900
        %v964 = vsub.f32 %v962, %v901
        %v965 = vmul.f32 %v963, 0.5
        %v966 = vmul.f32 %v964, 0.5
        %v967 = vadd.f32 %v900, %v965
        %v968 = vadd.f32 %v901, %v966
        %vm969 = vcmp.ge.f32.partialorder %v967, 0.5
        %vm970 = vcmp.ge.f32.partialorder %v968, 0.5
        %v971 = vsel %vm969, 1, 0
        %v972 = vsel %vm970, 1, 0
        %v973 = vcvt.s32.f32 %v971
        %v974 = vcvt.s32.f32 %v972
        %v975 = vsub.f32 1.0, %v973
        %v976 = vsub.f32 1.0, %v974
        %v977 = vmul.f32 %v967, %v975
        %v978 = vmul.f32 %v968, %v976
        %979 = vrot.lane.b32.xlu0 %v906, 1
        %v980 = vpop.permute.xlu0 %979
        %981 = vrot.lane.b32.xlu0 %v907, 1
        %v982 = vpop.permute.xlu0 %981
        %v983 = vsel %vm596, %v973, %v980
        %v984 = vsel %vm596, %v974, %v982
        %v985 = vpack.c.bf16 %v984, %v983
        %v987 = vunpack.c.l.b16 %v985
        %v988 = vunpack.c.h.b16 %v985
        %v989 = vpack.c.b16 %v987, %v987
        %v990 = vpack.c.b16 %v988, %v988
        %s993 = scalar_lea.vmem [#allocation3], 40
        %994 = vst [vmem:[%s993] sm:$0xf] %v989
        %995 = vst [vmem:[%s993 + $0x4] sm:$0xf] %v990
        %s996 = scalar_lea.vmem %s470, 96 [#allocation6]
        %v997 = vld [vmem:[%s996] sm:$0xff]
        %v998 = vld [vmem:[%s996 + $0x8] sm:$0xff]
        %v999 = vmul.f32 %v997, %v522
        %v1000 = vmul.f32 %v998, %v522
        %v1001 = vadd.f32 %v999, %v529
        %v1002 = vadd.f32 %v1000, %v529
        %v1003 = vsub.f32 %v1001, %v940
        %v1004 = vsub.f32 %v1002, %v941
        %v1005 = vmul.f32 %v1003, 0.5
        %v1006 = vmul.f32 %v1004, 0.5
        %v1007 = vadd.f32 %v940, %v1005
        %v1008 = vadd.f32 %v941, %v1006
        %vm1009 = vcmp.ge.f32.partialorder %v1007, 0.5
        %vm1010 = vcmp.ge.f32.partialorder %v1008, 0.5
        %v1011 = vsel %vm1009, 1, 0
        %v1012 = vsel %vm1010, 1, 0
        %v1013 = vcvt.s32.f32 %v1011
        %v1014 = vcvt.s32.f32 %v1012
        %v1015 = vsub.f32 1.0, %v1013
        %v1016 = vsub.f32 1.0, %v1014
        %v1017 = vmul.f32 %v1007, %v1015
        %v1018 = vmul.f32 %v1008, %v1016
        %v1019 = vpack.c.bf16 %v1014, %v1013
        %v1021 = vunpack.c.l.b16 %v1019
        %v1022 = vunpack.c.h.b16 %v1019
        %v1023 = vpack.c.b16 %v1021, %v1021
        %v1024 = vpack.c.b16 %v1022, %v1022
        %s1027 = scalar_lea.vmem [#allocation2], 48
        %1028 = vst [vmem:[%s1027] sm:$0xf] %v1023
        %1029 = vst [vmem:[%s1027 + $0x4] sm:$0xf] %v1024
        %v1030 = vadd.f32 %v953, %v1013
        %v1031 = vadd.f32 %v954, %v1014
        %v1032 = vmul.f32 %v1013, %v536
        %v1033 = vmul.f32 %v1014, %v536
        %1034 = vadd.xlane.f32.xlu0 %v1032
        %v1035 = vpop.xlane.xlu0 %1034
        %1036 = vadd.xlane.f32.xlu0 %v1033
        %v1037 = vpop.xlane.xlu0 %1036
        %v1038 = vadd.f32 %v1035, %v579
        %v1039 = vadd.f32 %v1037, %v579
        %v1040 = vsub.f32 %v1038, %v977
        %v1041 = vsub.f32 %v1039, %v978
        %v1042 = vmul.f32 %v1040, 0.5
        %v1043 = vmul.f32 %v1041, 0.5
        %v1044 = vadd.f32 %v977, %v1042
        %v1045 = vadd.f32 %v978, %v1043
        %vm1046 = vcmp.ge.f32.partialorder %v1044, 0.5
        %vm1047 = vcmp.ge.f32.partialorder %v1045, 0.5
        %v1048 = vsel %vm1046, 1, 0
        %v1049 = vsel %vm1047, 1, 0
        %v1050 = vcvt.s32.f32 %v1048
        %v1051 = vcvt.s32.f32 %v1049
        %v1052 = vsub.f32 1.0, %v1050
        %v1053 = vsub.f32 1.0, %v1051
        %v1054 = vmul.f32 %v1044, %v1052
        %v1055 = vmul.f32 %v1045, %v1053
        %1056 = vrot.lane.b32.xlu0 %v983, 1
        %v1057 = vpop.permute.xlu0 %1056
        %1058 = vrot.lane.b32.xlu0 %v984, 1
        %v1059 = vpop.permute.xlu0 %1058
        %v1060 = vsel %vm596, %v1050, %v1057
        %v1061 = vsel %vm596, %v1051, %v1059
        %v1062 = vpack.c.bf16 %v1061, %v1060
        %v1064 = vunpack.c.l.b16 %v1062
        %v1065 = vunpack.c.h.b16 %v1062
        %v1066 = vpack.c.b16 %v1064, %v1064
        %v1067 = vpack.c.b16 %v1065, %v1065
        %s1070 = scalar_lea.vmem [#allocation3], 48
        %1071 = vst [vmem:[%s1070] sm:$0xf] %v1066
        %1072 = vst [vmem:[%s1070 + $0x4] sm:$0xf] %v1067
        %s1073 = scalar_lea.vmem %s470, 112 [#allocation6]
        %v1074 = vld [vmem:[%s1073] sm:$0xff]
        %v1075 = vld [vmem:[%s1073 + $0x8] sm:$0xff]
        %v1076 = vmul.f32 %v1074, %v522
        %v1077 = vmul.f32 %v1075, %v522
        %v1078 = vadd.f32 %v1076, %v529
        %v1079 = vadd.f32 %v1077, %v529
        %v1080 = vsub.f32 %v1078, %v1017
        %v1081 = vsub.f32 %v1079, %v1018
        %v1082 = vmul.f32 %v1080, 0.5
        %v1083 = vmul.f32 %v1081, 0.5
        %v1084 = vadd.f32 %v1017, %v1082
        %v1085 = vadd.f32 %v1018, %v1083
        %vm1086 = vcmp.ge.f32.partialorder %v1084, 0.5
        %vm1087 = vcmp.ge.f32.partialorder %v1085, 0.5
        %v1088 = vsel %vm1086, 1, 0
        %v1089 = vsel %vm1087, 1, 0
        %v1090 = vcvt.s32.f32 %v1088
        %v1091 = vcvt.s32.f32 %v1089
        %v1092 = vpack.c.bf16 %v1091, %v1090
        %v1094 = vunpack.c.l.b16 %v1092
        %v1095 = vunpack.c.h.b16 %v1092
        %v1096 = vpack.c.b16 %v1094, %v1094
        %v1097 = vpack.c.b16 %v1095, %v1095
        %s1100 = scalar_lea.vmem [#allocation2], 56
        %1101 = vst [vmem:[%s1100] sm:$0xf] %v1096
        %1102 = vst [vmem:[%s1100 + $0x4] sm:$0xf] %v1097
        %v1103 = vadd.f32 %v1030, %v1090
        %v1104 = vadd.f32 %v1031, %v1091
        %v1105 = vmul.f32 %v1090, %v536
        %v1106 = vmul.f32 %v1091, %v536
        %1107 = vadd.xlane.f32.xlu0 %v1105
        %v1108 = vpop.xlane.xlu0 %1107
        %1109 = vadd.xlane.f32.xlu0 %v1106
        %v1110 = vpop.xlane.xlu0 %1109
        %v1111 = vadd.f32 %v1108, %v579
        %v1112 = vadd.f32 %v1110, %v579
        %v1113 = vsub.f32 %v1111, %v1054
        %v1114 = vsub.f32 %v1112, %v1055
        %v1115 = vmul.f32 %v1113, 0.5
        %v1116 = vmul.f32 %v1114, 0.5
        %v1117 = vadd.f32 %v1054, %v1115
        %v1118 = vadd.f32 %v1055, %v1116
        %vm1119 = vcmp.ge.f32.partialorder %v1117, 0.5
        %vm1120 = vcmp.ge.f32.partialorder %v1118, 0.5
        %v1121 = vsel %vm1119, 1, 0
        %v1122 = vsel %vm1120, 1, 0
        %v1123 = vcvt.s32.f32 %v1121
        %v1124 = vcvt.s32.f32 %v1122
        %1125 = vrot.lane.b32.xlu0 %v1060, 1
        %v1126 = vpop.permute.xlu0 %1125
        %1127 = vrot.lane.b32.xlu0 %v1061, 1
        %v1128 = vpop.permute.xlu0 %1127
        %v1129 = vsel %vm596, %v1123, %v1126
        %v1130 = vsel %vm596, %v1124, %v1128
        %v1131 = vpack.c.bf16 %v1130, %v1129
        %v1133 = vunpack.c.l.b16 %v1131
        %v1134 = vunpack.c.h.b16 %v1131
        %v1135 = vpack.c.b16 %v1133, %v1133
        %v1136 = vpack.c.b16 %v1134, %v1134
        %s1139 = scalar_lea.vmem [#allocation3], 56
        %1140 = vst [vmem:[%s1139] sm:$0xf] %v1135
        %1141 = vst [vmem:[%s1139 + $0x4] sm:$0xf] %v1136
        %v1142 = vadd.f32 %v1103, %v1104
        %1143 = vadd.xlane.f32.xlu0 %v1142
        %v1144 = vpop.xlane.xlu0 %1143
        %v1145 = vrot.slane %v1144, 4
        %v1146 = vadd.f32 %v1144, %v1145
        %v1147 = vrot.slane %v1146, 2
        %v1148 = vadd.f32 %v1146, %v1147
        %v1149 = vrot.slane %v1148, 1
        %v1150 = vadd.f32 %v1148, %v1149
        %s1151 = vtos %v1150
        %v1152 = vstv %s1151
        %1153 = vst [vmem:[%s515] sm:$0x1] %v1152
        %v1154 = vld [vmem:[#allocation2] sm:$0xf]
        %v1155 = vld [vmem:[#allocation2 + $0x4] sm:$0xf]
        %v1156 = vld [vmem:[#allocation2 + $0x8] sm:$0xf]
        %v1157 = vld [vmem:[#allocation2 + $0xc] sm:$0xf]
        %v1158 = vld [vmem:[#allocation2 + $0x10] sm:$0xf]
        %v1159 = vld [vmem:[#allocation2 + $0x14] sm:$0xf]
        %v1160 = vld [vmem:[#allocation2 + $0x18] sm:$0xf]
        %v1161 = vld [vmem:[#allocation2 + $0x1c] sm:$0xf]
        %v1162 = vld [vmem:[#allocation2 + $0x20] sm:$0xf]
        %v1163 = vld [vmem:[#allocation2 + $0x24] sm:$0xf]
        %v1164 = vld [vmem:[#allocation2 + $0x28] sm:$0xf]
        %v1165 = vld [vmem:[#allocation2 + $0x2c] sm:$0xf]
        %v1166 = vld [vmem:[#allocation2 + $0x30] sm:$0xf]
        %v1167 = vld [vmem:[#allocation2 + $0x34] sm:$0xf]
        %v1168 = vld [vmem:[#allocation2 + $0x38] sm:$0xf]
        %v1169 = vld [vmem:[#allocation2 + $0x3c] sm:$0xf]
        %v1170 = vld [vmem:[#allocation3] sm:$0xf]
        %v1171 = vld [vmem:[#allocation3 + $0x4] sm:$0xf]
        %v1172 = vld [vmem:[#allocation3 + $0x8] sm:$0xf]
        %v1173 = vld [vmem:[#allocation3 + $0xc] sm:$0xf]
        %v1174 = vld [vmem:[#allocation3 + $0x10] sm:$0xf]
        %v1175 = vld [vmem:[#allocation3 + $0x14] sm:$0xf]
        %v1176 = vld [vmem:[#allocation3 + $0x18] sm:$0xf]
        %v1177 = vld [vmem:[#allocation3 + $0x1c] sm:$0xf]
        %v1178 = vld [vmem:[#allocation3 + $0x20] sm:$0xf]
        %v1179 = vld [vmem:[#allocation3 + $0x24] sm:$0xf]
        %v1180 = vld [vmem:[#allocation3 + $0x28] sm:$0xf]
        %v1181 = vld [vmem:[#allocation3 + $0x2c] sm:$0xf]
        %v1182 = vld [vmem:[#allocation3 + $0x30] sm:$0xf]
        %v1183 = vld [vmem:[#allocation3 + $0x34] sm:$0xf]
        %v1184 = vld [vmem:[#allocation3 + $0x38] sm:$0xf]
        %v1185 = vld [vmem:[#allocation3 + $0x3c] sm:$0xf]
        %v1186 = vld [vmem:[%s5] sm:$0xf]
        %v1187 = vld [vmem:[%s5 + $0x4] sm:$0xf]
        %v1188 = vld [vmem:[%s5 + $0x8] sm:$0xf]
        %v1189 = vld [vmem:[%s5 + $0xc] sm:$0xf]
        %v1190 = vld [vmem:[%s5 + $0x10] sm:$0xf]
        %v1191 = vld [vmem:[%s5 + $0x14] sm:$0xf]
        %v1192 = vld [vmem:[%s5 + $0x18] sm:$0xf]
        %v1193 = vld [vmem:[%s5 + $0x1c] sm:$0xf]
        %v1194 = vld [vmem:[%s5 + $0x20] sm:$0xf]
        %v1195 = vld [vmem:[%s5 + $0x24] sm:$0xf]
        %v1196 = vld [vmem:[%s5 + $0x28] sm:$0xf]
        %v1197 = vld [vmem:[%s5 + $0x2c] sm:$0xf]
        %v1198 = vld [vmem:[%s5 + $0x30] sm:$0xf]
        %v1199 = vld [vmem:[%s5 + $0x34] sm:$0xf]
        %v1200 = vld [vmem:[%s5 + $0x38] sm:$0xf]
        %v1201 = vld [vmem:[%s5 + $0x3c] sm:$0xf]
        %v1218 = vunpack.c.l.b16 %v1170
        %v1219 = vunpack.c.l.b16 %v1171
        %v1220 = vunpack.c.l.b16 %v1172
        %v1221 = vunpack.c.l.b16 %v1173
        %v1222 = vunpack.c.l.b16 %v1174
        %v1223 = vunpack.c.l.b16 %v1175
        %v1224 = vunpack.c.l.b16 %v1176
        %v1225 = vunpack.c.l.b16 %v1177
        %v1226 = vunpack.c.l.b16 %v1178
        %v1227 = vunpack.c.l.b16 %v1179
        %v1228 = vunpack.c.l.b16 %v1180
        %v1229 = vunpack.c.l.b16 %v1181
        %v1230 = vunpack.c.l.b16 %v1182
        %v1231 = vunpack.c.l.b16 %v1183
        %v1232 = vunpack.c.l.b16 %v1184
        %v1233 = vunpack.c.l.b16 %v1185
        %v1234 = vpack.c.b16 %v1219, %v1218
        %v1235 = vpack.c.b16 %v1221, %v1220
        %v1236 = vpack.c.b16 %v1223, %v1222
        %v1237 = vpack.c.b16 %v1225, %v1224
        %v1238 = vpack.c.b16 %v1227, %v1226
        %v1239 = vpack.c.b16 %v1229, %v1228
        %v1240 = vpack.c.b16 %v1231, %v1230
        %v1241 = vpack.c.b16 %v1233, %v1232
        %v1266 = vunpack.c.l.b16 %v1186
        %v1267 = vunpack.c.l.b16 %v1187
        %v1268 = vunpack.c.l.b16 %v1188
        %v1269 = vunpack.c.l.b16 %v1189
        %v1270 = vunpack.c.l.b16 %v1190
        %v1271 = vunpack.c.l.b16 %v1191
        %v1272 = vunpack.c.l.b16 %v1192
        %v1273 = vunpack.c.l.b16 %v1193
        %v1274 = vunpack.c.l.b16 %v1194
        %v1275 = vunpack.c.l.b16 %v1195
        %v1276 = vunpack.c.l.b16 %v1196
        %v1277 = vunpack.c.l.b16 %v1197
        %v1278 = vunpack.c.l.b16 %v1198
        %v1279 = vunpack.c.l.b16 %v1199
        %v1280 = vunpack.c.l.b16 %v1200
        %v1281 = vunpack.c.l.b16 %v1201
        %v1282 = vpack.c.b16 %v1267, %v1266
        %v1283 = vpack.c.b16 %v1269, %v1268
        %v1284 = vpack.c.b16 %v1271, %v1270
        %v1285 = vpack.c.b16 %v1273, %v1272
        %v1286 = vpack.c.b16 %v1275, %v1274
        %v1287 = vpack.c.b16 %v1277, %v1276
        %v1288 = vpack.c.b16 %v1279, %v1278
        %v1289 = vpack.c.b16 %v1281, %v1280
        %1298 = vmatprep.subr.bf16.mxu0 0
        %1299 = vmatpush1.bf16.msra.mxu0 %v1289
        %1300 = vmatprep.subr.bf16.mxu0 0
        %1301 = vmatpush1.bf16.msra.mxu0 %v1288
        %1302 = vmatprep.subr.bf16.mxu0 0
        %1303 = vmatpush1.bf16.msra.mxu0 %v1287
        %1304 = vmatprep.subr.bf16.mxu0 0
        %1305 = vmatpush1.bf16.msra.mxu0 %v1286
        %1306 = vmatprep.subr.bf16.mxu0 0
        %1307 = vmatpush1.bf16.msra.mxu0 %v1285
        %1308 = vmatprep.subr.bf16.mxu0 0
        %1309 = vmatpush1.bf16.msra.mxu0 %v1284
        %1310 = vmatprep.subr.bf16.mxu0 0
        %1311 = vmatpush1.bf16.msra.mxu0 %v1283
        %1312 = vmatprep.subr.bf16.mxu0 0
        %1313 = vmatpush1.bf16.msra.mxu0 %v1282
        %1314 = vmatprep.subr.bf16.mxu0 0
        %1315 = vmatpush2.bf16.msra.mxu0 0
        %1316 = vmatprep.subr.bf16.mxu0 0
        %1317 = vmatpush2.bf16.msra.mxu0 0
        %1318 = vmatprep.subr.bf16.mxu0 0
        %1319 = vmatpush2.bf16.msra.mxu0 0
        %1320 = vmatprep.subr.bf16.mxu0 0
        %1321 = vmatpush2.bf16.msra.mxu0 0
        %1322 = vmatprep.subr.bf16.mxu0 0
        %1323 = vmatpush2.bf16.msra.mxu0 0
        %1324 = vmatprep.subr.bf16.mxu0 0
        %1325 = vmatpush2.bf16.msra.mxu0 0
        %1326 = vmatprep.subr.bf16.mxu0 0
        %1327 = vmatpush2.bf16.msra.mxu0 0
        %1328 = vmatprep.subr.bf16.mxu0 0
        %1329 = vmatpush2.bf16.msra.mxu0 0
        %1330 = vmatprep.mubr.bf16.mxu0 0
        %1331 = vmatmul.mubr.bf16.gmra.mxu0 %v1234
        %v1332 = vpop.f32.mrf.mxu0
        %v1333 = vadd.f32 0.0, %v1332
        %v1334 = vpop.f32.mrf.mxu0
        %v1335 = vpop.f32.mrf.mxu0
        %v1336 = vadd.f32 0.0, %v1335
        %v1337 = vpop.f32.mrf.mxu0
        %1338 = vmatprep.mubr.bf16.mxu0 0
        %1339 = vmatmul.mubr.bf16.gmra.mxu0 %v1235
        %v1340 = vpop.f32.mrf.mxu0
        %v1341 = vadd.f32 0.0, %v1340
        %v1342 = vpop.f32.mrf.mxu0
        %v1343 = vpop.f32.mrf.mxu0
        %v1344 = vadd.f32 0.0, %v1343
        %v1345 = vpop.f32.mrf.mxu0
        %1346 = vmatprep.mubr.bf16.mxu0 0
        %1347 = vmatmul.mubr.bf16.gmra.mxu0 %v1236
        %v1348 = vpop.f32.mrf.mxu0
        %v1349 = vadd.f32 0.0, %v1348
        %v1350 = vpop.f32.mrf.mxu0
        %v1351 = vpop.f32.mrf.mxu0
        %v1352 = vadd.f32 0.0, %v1351
        %v1353 = vpop.f32.mrf.mxu0
        %1354 = vmatprep.mubr.bf16.mxu0 0
        %1355 = vmatmul.mubr.bf16.gmra.mxu0 %v1237
        %v1356 = vpop.f32.mrf.mxu0
        %v1357 = vadd.f32 0.0, %v1356
        %v1358 = vpop.f32.mrf.mxu0
        %v1359 = vpop.f32.mrf.mxu0
        %v1360 = vadd.f32 0.0, %v1359
        %v1361 = vpop.f32.mrf.mxu0
        %1362 = vmatprep.mubr.bf16.mxu0 0
        %1363 = vmatmul.mubr.bf16.gmra.mxu0 %v1238
        %v1364 = vpop.f32.mrf.mxu0
        %v1365 = vadd.f32 0.0, %v1364
        %v1366 = vpop.f32.mrf.mxu0
        %v1367 = vpop.f32.mrf.mxu0
        %v1368 = vadd.f32 0.0, %v1367
        %v1369 = vpop.f32.mrf.mxu0
        %1370 = vmatprep.mubr.bf16.mxu0 0
        %1371 = vmatmul.mubr.bf16.gmra.mxu0 %v1239
        %v1372 = vpop.f32.mrf.mxu0
        %v1373 = vadd.f32 0.0, %v1372
        %v1374 = vpop.f32.mrf.mxu0
        %v1375 = vpop.f32.mrf.mxu0
        %v1376 = vadd.f32 0.0, %v1375
        %v1377 = vpop.f32.mrf.mxu0
        %1378 = vmatprep.mubr.bf16.mxu0 0
        %1379 = vmatmul.mubr.bf16.gmra.mxu0 %v1240
        %v1380 = vpop.f32.mrf.mxu0
        %v1381 = vadd.f32 0.0, %v1380
        %v1382 = vpop.f32.mrf.mxu0
        %v1383 = vpop.f32.mrf.mxu0
        %v1384 = vadd.f32 0.0, %v1383
        %v1385 = vpop.f32.mrf.mxu0
        %1386 = vmatprep.mubr.bf16.mxu0 0
        %1387 = vmatmul.mubr.bf16.gmra.mxu0 %v1241
        %v1388 = vpop.f32.mrf.mxu0
        %v1389 = vadd.f32 0.0, %v1388
        %v1390 = vpop.f32.mrf.mxu0
        %v1391 = vpop.f32.mrf.mxu0
        %v1392 = vadd.f32 0.0, %v1391
        %v1393 = vpop.f32.mrf.mxu0
        %1394 = vdwg.mxu0
        %v1395 = vld [vmem:[%s6] sm:$0xf]
        %v1396 = vld [vmem:[%s6 + $0x4] sm:$0xf]
        %v1397 = vld [vmem:[%s6 + $0x8] sm:$0xf]
        %v1398 = vld [vmem:[%s6 + $0xc] sm:$0xf]
        %v1399 = vld [vmem:[%s6 + $0x10] sm:$0xf]
        %v1400 = vld [vmem:[%s6 + $0x14] sm:$0xf]
        %v1401 = vld [vmem:[%s6 + $0x18] sm:$0xf]
        %v1402 = vld [vmem:[%s6 + $0x1c] sm:$0xf]
        %v1403 = vld [vmem:[%s6 + $0x20] sm:$0xf]
        %v1404 = vld [vmem:[%s6 + $0x24] sm:$0xf]
        %v1405 = vld [vmem:[%s6 + $0x28] sm:$0xf]
        %v1406 = vld [vmem:[%s6 + $0x2c] sm:$0xf]
        %v1407 = vld [vmem:[%s6 + $0x30] sm:$0xf]
        %v1408 = vld [vmem:[%s6 + $0x34] sm:$0xf]
        %v1409 = vld [vmem:[%s6 + $0x38] sm:$0xf]
        %v1410 = vld [vmem:[%s6 + $0x3c] sm:$0xf]
        %v1411 = vpack.c.bf16 %v1336, %v1333
        %v1412 = vpack.c.bf16 %v1344, %v1341
        %v1413 = vpack.c.bf16 %v1352, %v1349
        %v1414 = vpack.c.bf16 %v1360, %v1357
        %v1415 = vpack.c.bf16 %v1368, %v1365
        %v1416 = vpack.c.bf16 %v1376, %v1373
        %v1417 = vpack.c.bf16 %v1384, %v1381
        %v1418 = vpack.c.bf16 %v1392, %v1389
        %v1419 = vld [vmem:[%s7] sm:$0xf]
        %v1420 = vld [vmem:[%s7 + $0x4] sm:$0xf]
        %v1421 = vld [vmem:[%s7 + $0x8] sm:$0xf]
        %v1422 = vld [vmem:[%s7 + $0xc] sm:$0xf]
        %v1423 = vld [vmem:[%s7 + $0x10] sm:$0xf]
        %v1424 = vld [vmem:[%s7 + $0x14] sm:$0xf]
        %v1425 = vld [vmem:[%s7 + $0x18] sm:$0xf]
        %v1426 = vld [vmem:[%s7 + $0x1c] sm:$0xf]
        %v1427 = vld [vmem:[%s7 + $0x20] sm:$0xf]
        %v1428 = vld [vmem:[%s7 + $0x24] sm:$0xf]
        %v1429 = vld [vmem:[%s7 + $0x28] sm:$0xf]
        %v1430 = vld [vmem:[%s7 + $0x2c] sm:$0xf]
        %v1431 = vld [vmem:[%s7 + $0x30] sm:$0xf]
        %v1432 = vld [vmem:[%s7 + $0x34] sm:$0xf]
        %v1433 = vld [vmem:[%s7 + $0x38] sm:$0xf]
        %v1434 = vld [vmem:[%s7 + $0x3c] sm:$0xf]
        %v1451 = vunpack.c.l.b16 %v1419
        %v1452 = vunpack.c.l.b16 %v1420
        %v1453 = vunpack.c.l.b16 %v1421
        %v1454 = vunpack.c.l.b16 %v1422
        %v1455 = vunpack.c.l.b16 %v1423
        %v1456 = vunpack.c.l.b16 %v1424
        %v1457 = vunpack.c.l.b16 %v1425
        %v1458 = vunpack.c.l.b16 %v1426
        %v1459 = vunpack.c.l.b16 %v1427
        %v1460 = vunpack.c.l.b16 %v1428
        %v1461 = vunpack.c.l.b16 %v1429
        %v1462 = vunpack.c.l.b16 %v1430
        %v1463 = vunpack.c.l.b16 %v1431
        %v1464 = vunpack.c.l.b16 %v1432
        %v1465 = vunpack.c.l.b16 %v1433
        %v1466 = vunpack.c.l.b16 %v1434
        %v1467 = vpack.c.b16 %v1452, %v1451
        %v1468 = vpack.c.b16 %v1454, %v1453
        %v1469 = vpack.c.b16 %v1456, %v1455
        %v1470 = vpack.c.b16 %v1458, %v1457
        %v1471 = vpack.c.b16 %v1460, %v1459
        %v1472 = vpack.c.b16 %v1462, %v1461
        %v1473 = vpack.c.b16 %v1464, %v1463
        %v1474 = vpack.c.b16 %v1466, %v1465
        %1483 = vmatprep.subr.bf16.mxu0 0
        %1484 = vmatpush1.bf16.msra.mxu0 %v1474
        %1485 = vmatprep.subr.bf16.mxu0 0
        %1486 = vmatpush1.bf16.msra.mxu0 %v1473
        %1487 = vmatprep.subr.bf16.mxu0 0
        %1488 = vmatpush1.bf16.msra.mxu0 %v1472
        %1489 = vmatprep.subr.bf16.mxu0 0
        %1490 = vmatpush1.bf16.msra.mxu0 %v1471
        %1491 = vmatprep.subr.bf16.mxu0 0
        %1492 = vmatpush1.bf16.msra.mxu0 %v1470
        %1493 = vmatprep.subr.bf16.mxu0 0
        %1494 = vmatpush1.bf16.msra.mxu0 %v1469
        %1495 = vmatprep.subr.bf16.mxu0 0
        %1496 = vmatpush1.bf16.msra.mxu0 %v1468
        %1497 = vmatprep.subr.bf16.mxu0 0
        %1498 = vmatpush1.bf16.msra.mxu0 %v1467
        %1499 = vmatprep.subr.bf16.mxu0 0
        %1500 = vmatpush2.bf16.msra.mxu0 0
        %1501 = vmatprep.subr.bf16.mxu0 0
        %1502 = vmatpush2.bf16.msra.mxu0 0
        %1503 = vmatprep.subr.bf16.mxu0 0
        %1504 = vmatpush2.bf16.msra.mxu0 0
        %1505 = vmatprep.subr.bf16.mxu0 0
        %1506 = vmatpush2.bf16.msra.mxu0 0
        %1507 = vmatprep.subr.bf16.mxu0 0
        %1508 = vmatpush2.bf16.msra.mxu0 0
        %1509 = vmatprep.subr.bf16.mxu0 0
        %1510 = vmatpush2.bf16.msra.mxu0 0
        %1511 = vmatprep.subr.bf16.mxu0 0
        %1512 = vmatpush2.bf16.msra.mxu0 0
        %1513 = vmatprep.subr.bf16.mxu0 0
        %1514 = vmatpush2.bf16.msra.mxu0 0
        %1515 = vmatprep.mubr.bf16.mxu0 0
        %1516 = vmatmul.mubr.bf16.gmra.mxu0 %v1411
        %v1517 = vpop.f32.mrf.mxu0
        %v1518 = vadd.f32 0.0, %v1517
        %v1519 = vpop.f32.mrf.mxu0
        %v1520 = vpop.f32.mrf.mxu0
        %v1521 = vadd.f32 0.0, %v1520
        %v1522 = vpop.f32.mrf.mxu0
        %1523 = vmatprep.mubr.bf16.mxu0 0
        %1524 = vmatmul.mubr.bf16.gmra.mxu0 %v1412
        %v1525 = vpop.f32.mrf.mxu0
        %v1526 = vadd.f32 0.0, %v1525
        %v1527 = vpop.f32.mrf.mxu0
        %v1528 = vpop.f32.mrf.mxu0
        %v1529 = vadd.f32 0.0, %v1528
        %v1530 = vpop.f32.mrf.mxu0
        %1531 = vmatprep.mubr.bf16.mxu0 0
        %1532 = vmatmul.mubr.bf16.gmra.mxu0 %v1413
        %v1533 = vpop.f32.mrf.mxu0
        %v1534 = vadd.f32 0.0, %v1533
        %v1535 = vpop.f32.mrf.mxu0
        %v1536 = vpop.f32.mrf.mxu0
        %v1537 = vadd.f32 0.0, %v1536
        %v1538 = vpop.f32.mrf.mxu0
        %1539 = vmatprep.mubr.bf16.mxu0 0
        %1540 = vmatmul.mubr.bf16.gmra.mxu0 %v1414
        %v1541 = vpop.f32.mrf.mxu0
        %v1542 = vadd.f32 0.0, %v1541
        %v1543 = vpop.f32.mrf.mxu0
        %v1544 = vpop.f32.mrf.mxu0
        %v1545 = vadd.f32 0.0, %v1544
        %v1546 = vpop.f32.mrf.mxu0
        %1547 = vmatprep.mubr.bf16.mxu0 0
        %1548 = vmatmul.mubr.bf16.gmra.mxu0 %v1415
        %v1549 = vpop.f32.mrf.mxu0
        %v1550 = vadd.f32 0.0, %v1549
        %v1551 = vpop.f32.mrf.mxu0
        %v1552 = vpop.f32.mrf.mxu0
        %v1553 = vadd.f32 0.0, %v1552
        %v1554 = vpop.f32.mrf.mxu0
        %1555 = vmatprep.mubr.bf16.mxu0 0
        %1556 = vmatmul.mubr.bf16.gmra.mxu0 %v1416
        %v1557 = vpop.f32.mrf.mxu0
        %v1558 = vadd.f32 0.0, %v1557
        %v1559 = vpop.f32.mrf.mxu0
        %v1560 = vpop.f32.mrf.mxu0
        %v1561 = vadd.f32 0.0, %v1560
        %v1562 = vpop.f32.mrf.mxu0
        %1563 = vmatprep.mubr.bf16.mxu0 0
        %1564 = vmatmul.mubr.bf16.gmra.mxu0 %v1417
        %v1565 = vpop.f32.mrf.mxu0
        %v1566 = vadd.f32 0.0, %v1565
        %v1567 = vpop.f32.mrf.mxu0
        %v1568 = vpop.f32.mrf.mxu0
        %v1569 = vadd.f32 0.0, %v1568
        %v1570 = vpop.f32.mrf.mxu0
        %1571 = vmatprep.mubr.bf16.mxu0 0
        %1572 = vmatmul.mubr.bf16.gmra.mxu0 %v1418
        %v1573 = vpop.f32.mrf.mxu0
        %v1574 = vadd.f32 0.0, %v1573
        %v1575 = vpop.f32.mrf.mxu0
        %v1576 = vpop.f32.mrf.mxu0
        %v1577 = vadd.f32 0.0, %v1576
        %v1578 = vpop.f32.mrf.mxu0
        %1579 = vdwg.mxu0
        %v1596 = vunpack.c.l.b16 %v1154
        %v1597 = vunpack.c.l.b16 %v1155
        %v1598 = vunpack.c.l.b16 %v1156
        %v1599 = vunpack.c.l.b16 %v1157
        %v1600 = vunpack.c.l.b16 %v1158
        %v1601 = vunpack.c.l.b16 %v1159
        %v1602 = vunpack.c.l.b16 %v1160
        %v1603 = vunpack.c.l.b16 %v1161
        %v1604 = vunpack.c.l.b16 %v1162
        %v1605 = vunpack.c.l.b16 %v1163
        %v1606 = vunpack.c.l.b16 %v1164
        %v1607 = vunpack.c.l.b16 %v1165
        %v1608 = vunpack.c.l.b16 %v1166
        %v1609 = vunpack.c.l.b16 %v1167
        %v1610 = vunpack.c.l.b16 %v1168
        %v1611 = vunpack.c.l.b16 %v1169
        %v1612 = vpack.c.b16 %v1597, %v1596
        %v1613 = vpack.c.b16 %v1599, %v1598
        %v1614 = vpack.c.b16 %v1601, %v1600
        %v1615 = vpack.c.b16 %v1603, %v1602
        %v1616 = vpack.c.b16 %v1605, %v1604
        %v1617 = vpack.c.b16 %v1607, %v1606
        %v1618 = vpack.c.b16 %v1609, %v1608
        %v1619 = vpack.c.b16 %v1611, %v1610
        %v1644 = vunpack.c.l.b16 %v1395
        %v1645 = vunpack.c.l.b16 %v1396
        %v1646 = vunpack.c.l.b16 %v1397
        %v1647 = vunpack.c.l.b16 %v1398
        %v1648 = vunpack.c.l.b16 %v1399
        %v1649 = vunpack.c.l.b16 %v1400
        %v1650 = vunpack.c.l.b16 %v1401
        %v1651 = vunpack.c.l.b16 %v1402
        %v1652 = vunpack.c.l.b16 %v1403
        %v1653 = vunpack.c.l.b16 %v1404
        %v1654 = vunpack.c.l.b16 %v1405
        %v1655 = vunpack.c.l.b16 %v1406
        %v1656 = vunpack.c.l.b16 %v1407
        %v1657 = vunpack.c.l.b16 %v1408
        %v1658 = vunpack.c.l.b16 %v1409
        %v1659 = vunpack.c.l.b16 %v1410
        %v1660 = vpack.c.b16 %v1645, %v1644
        %v1661 = vpack.c.b16 %v1647, %v1646
        %v1662 = vpack.c.b16 %v1649, %v1648
        %v1663 = vpack.c.b16 %v1651, %v1650
        %v1664 = vpack.c.b16 %v1653, %v1652
        %v1665 = vpack.c.b16 %v1655, %v1654
        %v1666 = vpack.c.b16 %v1657, %v1656
        %v1667 = vpack.c.b16 %v1659, %v1658
        %1676 = vmatprep.subr.bf16.mxu0 0
        %1677 = vmatpush1.bf16.msra.mxu0 %v1667
        %1678 = vmatprep.subr.bf16.mxu0 0
        %1679 = vmatpush1.bf16.msra.mxu0 %v1666
        %1680 = vmatprep.subr.bf16.mxu0 0
        %1681 = vmatpush1.bf16.msra.mxu0 %v1665
        %1682 = vmatprep.subr.bf16.mxu0 0
        %1683 = vmatpush1.bf16.msra.mxu0 %v1664
        %1684 = vmatprep.subr.bf16.mxu0 0
        %1685 = vmatpush1.bf16.msra.mxu0 %v1663
        %1686 = vmatprep.subr.bf16.mxu0 0
        %1687 = vmatpush1.bf16.msra.mxu0 %v1662
        %1688 = vmatprep.subr.bf16.mxu0 0
        %1689 = vmatpush1.bf16.msra.mxu0 %v1661
        %1690 = vmatprep.subr.bf16.mxu0 0
        %1691 = vmatpush1.bf16.msra.mxu0 %v1660
        %1692 = vmatprep.subr.bf16.mxu0 0
        %1693 = vmatpush2.bf16.msra.mxu0 0
        %1694 = vmatprep.subr.bf16.mxu0 0
        %1695 = vmatpush2.bf16.msra.mxu0 0
        %1696 = vmatprep.subr.bf16.mxu0 0
        %1697 = vmatpush2.bf16.msra.mxu0 0
        %1698 = vmatprep.subr.bf16.mxu0 0
        %1699 = vmatpush2.bf16.msra.mxu0 0
        %1700 = vmatprep.subr.bf16.mxu0 0
        %1701 = vmatpush2.bf16.msra.mxu0 0
        %1702 = vmatprep.subr.bf16.mxu0 0
        %1703 = vmatpush2.bf16.msra.mxu0 0
        %1704 = vmatprep.subr.bf16.mxu0 0
        %1705 = vmatpush2.bf16.msra.mxu0 0
        %1706 = vmatprep.subr.bf16.mxu0 0
        %1707 = vmatpush2.bf16.msra.mxu0 0
        %1708 = vmatprep.mubr.bf16.mxu0 0
        %1709 = vmatmul.mubr.bf16.gmra.mxu0 %v1612
        %v1710 = vpop.f32.mrf.mxu0
        %v1711 = vadd.f32 %v1518, %v1710
        %v1712 = vpop.f32.mrf.mxu0
        %v1713 = vpop.f32.mrf.mxu0
        %v1714 = vadd.f32 %v1521, %v1713
        %v1715 = vpop.f32.mrf.mxu0
        %1716 = vmatprep.mubr.bf16.mxu0 0
        %1717 = vmatmul.mubr.bf16.gmra.mxu0 %v1613
        %v1718 = vpop.f32.mrf.mxu0
        %v1719 = vadd.f32 %v1526, %v1718
        %v1720 = vpop.f32.mrf.mxu0
        %v1721 = vpop.f32.mrf.mxu0
        %v1722 = vadd.f32 %v1529, %v1721
        %v1723 = vpop.f32.mrf.mxu0
        %1724 = vmatprep.mubr.bf16.mxu0 0
        %1725 = vmatmul.mubr.bf16.gmra.mxu0 %v1614
        %v1726 = vpop.f32.mrf.mxu0
        %v1727 = vadd.f32 %v1534, %v1726
        %v1728 = vpop.f32.mrf.mxu0
        %v1729 = vpop.f32.mrf.mxu0
        %v1730 = vadd.f32 %v1537, %v1729
        %v1731 = vpop.f32.mrf.mxu0
        %1732 = vmatprep.mubr.bf16.mxu0 0
        %1733 = vmatmul.mubr.bf16.gmra.mxu0 %v1615
        %v1734 = vpop.f32.mrf.mxu0
        %v1735 = vadd.f32 %v1542, %v1734
        %v1736 = vpop.f32.mrf.mxu0
        %v1737 = vpop.f32.mrf.mxu0
        %v1738 = vadd.f32 %v1545, %v1737
        %v1739 = vpop.f32.mrf.mxu0
        %1740 = vmatprep.mubr.bf16.mxu0 0
        %1741 = vmatmul.mubr.bf16.gmra.mxu0 %v1616
        %v1742 = vpop.f32.mrf.mxu0
        %v1743 = vadd.f32 %v1550, %v1742
        %v1744 = vpop.f32.mrf.mxu0
        %v1745 = vpop.f32.mrf.mxu0
        %v1746 = vadd.f32 %v1553, %v1745
        %v1747 = vpop.f32.mrf.mxu0
        %1748 = vmatprep.mubr.bf16.mxu0 0
        %1749 = vmatmul.mubr.bf16.gmra.mxu0 %v1617
        %v1750 = vpop.f32.mrf.mxu0
        %v1751 = vadd.f32 %v1558, %v1750
        %v1752 = vpop.f32.mrf.mxu0
        %v1753 = vpop.f32.mrf.mxu0
        %v1754 = vadd.f32 %v1561, %v1753
        %v1755 = vpop.f32.mrf.mxu0
        %1756 = vmatprep.mubr.bf16.mxu0 0
        %1757 = vmatmul.mubr.bf16.gmra.mxu0 %v1618
        %v1758 = vpop.f32.mrf.mxu0
        %v1759 = vadd.f32 %v1566, %v1758
        %v1760 = vpop.f32.mrf.mxu0
        %v1761 = vpop.f32.mrf.mxu0
        %v1762 = vadd.f32 %v1569, %v1761
        %v1763 = vpop.f32.mrf.mxu0
        %1764 = vmatprep.mubr.bf16.mxu0 0
        %1765 = vmatmul.mubr.bf16.gmra.mxu0 %v1619
        %v1766 = vpop.f32.mrf.mxu0
        %v1767 = vadd.f32 %v1574, %v1766
        %v1768 = vpop.f32.mrf.mxu0
        %v1769 = vpop.f32.mrf.mxu0
        %v1770 = vadd.f32 %v1577, %v1769
        %v1771 = vpop.f32.mrf.mxu0
        %1772 = vdwg.mxu0
        %v1773 = vld [vmem:[%s8] sm:$0x1]
        %v1775 = vlaneseq
        %v1776 = vshrl.u32 %v1775, 7
        %v1777 = vsub.s32 0, %v1776
        %v1778 = vrot.slane %v1773, %v1777
        %v1780 = vadd.f32 %v1711, %v1778
        %v1781 = vadd.f32 %v1714, %v1778
        %v1782 = vadd.f32 %v1719, %v1778
        %v1783 = vadd.f32 %v1722, %v1778
        %v1784 = vadd.f32 %v1727, %v1778
        %v1785 = vadd.f32 %v1730, %v1778
        %v1786 = vadd.f32 %v1735, %v1778
        %v1787 = vadd.f32 %v1738, %v1778
        %v1788 = vadd.f32 %v1743, %v1778
        %v1789 = vadd.f32 %v1746, %v1778
        %v1790 = vadd.f32 %v1751, %v1778
        %v1791 = vadd.f32 %v1754, %v1778
        %v1792 = vadd.f32 %v1759, %v1778
        %v1793 = vadd.f32 %v1762, %v1778
        %v1794 = vadd.f32 %v1767, %v1778
        %v1795 = vadd.f32 %v1770, %v1778
        %1796 = vst [vmem:[#allocation4] sm:$0xff] %v1780
        %1797 = vst [vmem:[#allocation4 + $0x8] sm:$0xff] %v1781
        %1798 = vst [vmem:[#allocation4 + $0x10] sm:$0xff] %v1782
        %1799 = vst [vmem:[#allocation4 + $0x18] sm:$0xff] %v1783
        %1800 = vst [vmem:[#allocation4 + $0x20] sm:$0xff] %v1784
        %1801 = vst [vmem:[#allocation4 + $0x28] sm:$0xff] %v1785
        %1802 = vst [vmem:[#allocation4 + $0x30] sm:$0xff] %v1786
        %1803 = vst [vmem:[#allocation4 + $0x38] sm:$0xff] %v1787
        %1804 = vst [vmem:[#allocation4 + $0x40] sm:$0xff] %v1788
        %1805 = vst [vmem:[#allocation4 + $0x48] sm:$0xff] %v1789
        %1806 = vst [vmem:[#allocation4 + $0x50] sm:$0xff] %v1790
        %1807 = vst [vmem:[#allocation4 + $0x58] sm:$0xff] %v1791
        %1808 = vst [vmem:[#allocation4 + $0x60] sm:$0xff] %v1792
        %1809 = vst [vmem:[#allocation4 + $0x68] sm:$0xff] %v1793
        %1810 = vst [vmem:[#allocation4 + $0x70] sm:$0xff] %v1794
        %1811 = vst [vmem:[#allocation4 + $0x78] sm:$0xff] %v1795
        %v1812 = vld [vmem:[#allocation4] sm:$0xff]
        %v1813 = vld [vmem:[#allocation4 + $0x8] sm:$0xff]
        %v1814 = vmul.f32 %v1812, 0.5
        %v1815 = vmul.f32 %v1813, 0.5
        %v1816 = vadd.f32 %v1814, 0.0
        %v1817 = vadd.f32 %v1815, 0.0
        %vm1818 = vcmp.ge.f32.partialorder %v1816, 0.5
        %vm1819 = vcmp.ge.f32.partialorder %v1817, 0.5
        %v1820 = vsel %vm1818, 1, 0
        %v1821 = vsel %vm1819, 1, 0
        %v1822 = vcvt.s32.f32 %v1820
        %v1823 = vcvt.s32.f32 %v1821
        %v1824 = vsub.f32 1.0, %v1822
        %v1825 = vsub.f32 1.0, %v1823
        %v1826 = vmul.f32 %v1816, %v1824
        %v1827 = vmul.f32 %v1817, %v1825
        %v1828 = vpack.c.bf16 %v1823, %v1822
        %v1830 = vunpack.c.l.b16 %v1828
        %v1831 = vunpack.c.h.b16 %v1828
        %v1832 = vpack.c.b16 %v1830, %v1830
        %v1833 = vpack.c.b16 %v1831, %v1831
        %1836 = vst [vmem:[#allocation2] sm:$0xf] %v1832
        %1837 = vst [vmem:[#allocation2 + $0x4] sm:$0xf] %v1833
        %s1838 = scalar_lea.vmem [#allocation4], 16
        %v1839 = vld [vmem:[%s1838] sm:$0xff]
        %v1840 = vld [vmem:[%s1838 + $0x8] sm:$0xff]
        %v1841 = vsub.f32 %v1839, %v1826
        %v1842 = vsub.f32 %v1840, %v1827
        %v1843 = vmul.f32 %v1841, 0.5
        %v1844 = vmul.f32 %v1842, 0.5
        %v1845 = vadd.f32 %v1826, %v1843
        %v1846 = vadd.f32 %v1827, %v1844
        %vm1847 = vcmp.ge.f32.partialorder %v1845, 0.5
        %vm1848 = vcmp.ge.f32.partialorder %v1846, 0.5
        %v1849 = vsel %vm1847, 1, 0
        %v1850 = vsel %vm1848, 1, 0
        %v1851 = vcvt.s32.f32 %v1849
        %v1852 = vcvt.s32.f32 %v1850
        %v1853 = vsub.f32 1.0, %v1851
        %v1854 = vsub.f32 1.0, %v1852
        %v1855 = vmul.f32 %v1845, %v1853
        %v1856 = vmul.f32 %v1846, %v1854
        %v1857 = vpack.c.bf16 %v1852, %v1851
        %v1859 = vunpack.c.l.b16 %v1857
        %v1860 = vunpack.c.h.b16 %v1857
        %v1861 = vpack.c.b16 %v1859, %v1859
        %v1862 = vpack.c.b16 %v1860, %v1860
        %1865 = vst [vmem:[%s642] sm:$0xf] %v1861
        %1866 = vst [vmem:[%s642 + $0x4] sm:$0xf] %v1862
        %s1867 = scalar_lea.vmem [#allocation4], 32
        %v1868 = vld [vmem:[%s1867] sm:$0xff]
        %v1869 = vld [vmem:[%s1867 + $0x8] sm:$0xff]
        %v1870 = vsub.f32 %v1868, %v1855
        %v1871 = vsub.f32 %v1869, %v1856
        %v1872 = vmul.f32 %v1870, 0.5
        %v1873 = vmul.f32 %v1871, 0.5
        %v1874 = vadd.f32 %v1855, %v1872
        %v1875 = vadd.f32 %v1856, %v1873
        %vm1876 = vcmp.ge.f32.partialorder %v1874, 0.5
        %vm1877 = vcmp.ge.f32.partialorder %v1875, 0.5
        %v1878 = vsel %vm1876, 1, 0
        %v1879 = vsel %vm1877, 1, 0
        %v1880 = vcvt.s32.f32 %v1878
        %v1881 = vcvt.s32.f32 %v1879
        %v1882 = vsub.f32 1.0, %v1880
        %v1883 = vsub.f32 1.0, %v1881
        %v1884 = vmul.f32 %v1874, %v1882
        %v1885 = vmul.f32 %v1875, %v1883
        %v1886 = vpack.c.bf16 %v1881, %v1880
        %v1888 = vunpack.c.l.b16 %v1886
        %v1889 = vunpack.c.h.b16 %v1886
        %v1890 = vpack.c.b16 %v1888, %v1888
        %v1891 = vpack.c.b16 %v1889, %v1889
        %1894 = vst [vmem:[%s719] sm:$0xf] %v1890
        %1895 = vst [vmem:[%s719 + $0x4] sm:$0xf] %v1891
        %s1896 = scalar_lea.vmem [#allocation4], 48
        %v1897 = vld [vmem:[%s1896] sm:$0xff]
        %v1898 = vld [vmem:[%s1896 + $0x8] sm:$0xff]
        %v1899 = vsub.f32 %v1897, %v1884
        %v1900 = vsub.f32 %v1898, %v1885
        %v1901 = vmul.f32 %v1899, 0.5
        %v1902 = vmul.f32 %v1900, 0.5
        %v1903 = vadd.f32 %v1884, %v1901
        %v1904 = vadd.f32 %v1885, %v1902
        %vm1905 = vcmp.ge.f32.partialorder %v1903, 0.5
        %vm1906 = vcmp.ge.f32.partialorder %v1904, 0.5
        %v1907 = vsel %vm1905, 1, 0
        %v1908 = vsel %vm1906, 1, 0
        %v1909 = vcvt.s32.f32 %v1907
        %v1910 = vcvt.s32.f32 %v1908
        %v1911 = vsub.f32 1.0, %v1909
        %v1912 = vsub.f32 1.0, %v1910
        %v1913 = vmul.f32 %v1903, %v1911
        %v1914 = vmul.f32 %v1904, %v1912
        %v1915 = vpack.c.bf16 %v1910, %v1909
        %v1917 = vunpack.c.l.b16 %v1915
        %v1918 = vunpack.c.h.b16 %v1915
        %v1919 = vpack.c.b16 %v1917, %v1917
        %v1920 = vpack.c.b16 %v1918, %v1918
        %1923 = vst [vmem:[%s796] sm:$0xf] %v1919
        %1924 = vst [vmem:[%s796 + $0x4] sm:$0xf] %v1920
        %s1925 = scalar_lea.vmem [#allocation4], 64
        %v1926 = vld [vmem:[%s1925] sm:$0xff]
        %v1927 = vld [vmem:[%s1925 + $0x8] sm:$0xff]
        %v1928 = vsub.f32 %v1926, %v1913
        %v1929 = vsub.f32 %v1927, %v1914
        %v1930 = vmul.f32 %v1928, 0.5
        %v1931 = vmul.f32 %v1929, 0.5
        %v1932 = vadd.f32 %v1913, %v1930
        %v1933 = vadd.f32 %v1914, %v1931
        %vm1934 = vcmp.ge.f32.partialorder %v1932, 0.5
        %vm1935 = vcmp.ge.f32.partialorder %v1933, 0.5
        %v1936 = vsel %vm1934, 1, 0
        %v1937 = vsel %vm1935, 1, 0
        %v1938 = vcvt.s32.f32 %v1936
        %v1939 = vcvt.s32.f32 %v1937
        %v1940 = vsub.f32 1.0, %v1938
        %v1941 = vsub.f32 1.0, %v1939
        %v1942 = vmul.f32 %v1932, %v1940
        %v1943 = vmul.f32 %v1933, %v1941
        %v1944 = vpack.c.bf16 %v1939, %v1938
        %v1946 = vunpack.c.l.b16 %v1944
        %v1947 = vunpack.c.h.b16 %v1944
        %v1948 = vpack.c.b16 %v1946, %v1946
        %v1949 = vpack.c.b16 %v1947, %v1947
        %1952 = vst [vmem:[%s873] sm:$0xf] %v1948
        %1953 = vst [vmem:[%s873 + $0x4] sm:$0xf] %v1949
        %s1954 = scalar_lea.vmem [#allocation4], 80
        %v1955 = vld [vmem:[%s1954] sm:$0xff]
        %v1956 = vld [vmem:[%s1954 + $0x8] sm:$0xff]
        %v1957 = vsub.f32 %v1955, %v1942
        %v1958 = vsub.f32 %v1956, %v1943
        %v1959 = vmul.f32 %v1957, 0.5
        %v1960 = vmul.f32 %v1958, 0.5
        %v1961 = vadd.f32 %v1942, %v1959
        %v1962 = vadd.f32 %v1943, %v1960
        %vm1963 = vcmp.ge.f32.partialorder %v1961, 0.5
        %vm1964 = vcmp.ge.f32.partialorder %v1962, 0.5
        %v1965 = vsel %vm1963, 1, 0
        %v1966 = vsel %vm1964, 1, 0
        %v1967 = vcvt.s32.f32 %v1965
        %v1968 = vcvt.s32.f32 %v1966
        %v1969 = vsub.f32 1.0, %v1967
        %v1970 = vsub.f32 1.0, %v1968
        %v1971 = vmul.f32 %v1961, %v1969
        %v1972 = vmul.f32 %v1962, %v1970
        %v1973 = vpack.c.bf16 %v1968, %v1967
        %v1975 = vunpack.c.l.b16 %v1973
        %v1976 = vunpack.c.h.b16 %v1973
        %v1977 = vpack.c.b16 %v1975, %v1975
        %v1978 = vpack.c.b16 %v1976, %v1976
        %1981 = vst [vmem:[%s950] sm:$0xf] %v1977
        %1982 = vst [vmem:[%s950 + $0x4] sm:$0xf] %v1978
        %s1983 = scalar_lea.vmem [#allocation4], 96
        %v1984 = vld [vmem:[%s1983] sm:$0xff]
        %v1985 = vld [vmem:[%s1983 + $0x8] sm:$0xff]
        %v1986 = vsub.f32 %v1984, %v1971
        %v1987 = vsub.f32 %v1985, %v1972
        %v1988 = vmul.f32 %v1986, 0.5
        %v1989 = vmul.f32 %v1987, 0.5
        %v1990 = vadd.f32 %v1971, %v1988
        %v1991 = vadd.f32 %v1972, %v1989
        %vm1992 = vcmp.ge.f32.partialorder %v1990, 0.5
        %vm1993 = vcmp.ge.f32.partialorder %v1991, 0.5
        %v1994 = vsel %vm1992, 1, 0
        %v1995 = vsel %vm1993, 1, 0
        %v1996 = vcvt.s32.f32 %v1994
        %v1997 = vcvt.s32.f32 %v1995
        %v1998 = vsub.f32 1.0, %v1996
        %v1999 = vsub.f32 1.0, %v1997
        %v2000 = vmul.f32 %v1990, %v1998
        %v2001 = vmul.f32 %v1991, %v1999
        %v2002 = vpack.c.bf16 %v1997, %v1996
        %v2004 = vunpack.c.l.b16 %v2002
        %v2005 = vunpack.c.h.b16 %v2002
        %v2006 = vpack.c.b16 %v2004, %v2004
        %v2007 = vpack.c.b16 %v2005, %v2005
        %2010 = vst [vmem:[%s1027] sm:$0xf] %v2006
        %2011 = vst [vmem:[%s1027 + $0x4] sm:$0xf] %v2007
        %s2012 = scalar_lea.vmem [#allocation4], 112
        %v2013 = vld [vmem:[%s2012] sm:$0xff]
        %v2014 = vld [vmem:[%s2012 + $0x8] sm:$0xff]
        %v2015 = vsub.f32 %v2013, %v2000
        %v2016 = vsub.f32 %v2014, %v2001
        %v2017 = vmul.f32 %v2015, 0.5
        %v2018 = vmul.f32 %v2016, 0.5
        %v2019 = vadd.f32 %v2000, %v2017
        %v2020 = vadd.f32 %v2001, %v2018
        %vm2021 = vcmp.ge.f32.partialorder %v2019, 0.5
        %vm2022 = vcmp.ge.f32.partialorder %v2020, 0.5
        %v2023 = vsel %vm2021, 1, 0
        %v2024 = vsel %vm2022, 1, 0
        %v2025 = vcvt.s32.f32 %v2023
        %v2026 = vcvt.s32.f32 %v2024
        %v2027 = vpack.c.bf16 %v2026, %v2025
        %v2029 = vunpack.c.l.b16 %v2027
        %v2030 = vunpack.c.h.b16 %v2027
        %v2031 = vpack.c.b16 %v2029, %v2029
        %v2032 = vpack.c.b16 %v2030, %v2030
        %2035 = vst [vmem:[%s1100] sm:$0xf] %v2031
        %2036 = vst [vmem:[%s1100 + $0x4] sm:$0xf] %v2032
        %v2037 = vld [vmem:[#allocation2] sm:$0xf]
        %v2038 = vld [vmem:[#allocation2 + $0x4] sm:$0xf]
        %v2039 = vld [vmem:[#allocation2 + $0x8] sm:$0xf]
        %v2040 = vld [vmem:[#allocation2 + $0xc] sm:$0xf]
        %v2041 = vld [vmem:[#allocation2 + $0x10] sm:$0xf]
        %v2042 = vld [vmem:[#allocation2 + $0x14] sm:$0xf]
        %v2043 = vld [vmem:[#allocation2 + $0x18] sm:$0xf]
        %v2044 = vld [vmem:[#allocation2 + $0x1c] sm:$0xf]
        %v2045 = vld [vmem:[#allocation2 + $0x20] sm:$0xf]
        %v2046 = vld [vmem:[#allocation2 + $0x24] sm:$0xf]
        %v2047 = vld [vmem:[#allocation2 + $0x28] sm:$0xf]
        %v2048 = vld [vmem:[#allocation2 + $0x2c] sm:$0xf]
        %v2049 = vld [vmem:[#allocation2 + $0x30] sm:$0xf]
        %v2050 = vld [vmem:[#allocation2 + $0x34] sm:$0xf]
        %v2051 = vld [vmem:[#allocation2 + $0x38] sm:$0xf]
        %v2052 = vld [vmem:[#allocation2 + $0x3c] sm:$0xf]
        %v2053 = vld [vmem:[%s9] sm:$0xf]
        %v2054 = vld [vmem:[%s9 + $0x4] sm:$0xf]
        %v2055 = vld [vmem:[%s9 + $0x8] sm:$0xf]
        %v2056 = vld [vmem:[%s9 + $0xc] sm:$0xf]
        %v2057 = vld [vmem:[%s9 + $0x10] sm:$0xf]
        %v2058 = vld [vmem:[%s9 + $0x14] sm:$0xf]
        %v2059 = vld [vmem:[%s9 + $0x18] sm:$0xf]
        %v2060 = vld [vmem:[%s9 + $0x1c] sm:$0xf]
        %v2061 = vld [vmem:[%s9 + $0x20] sm:$0xf]
        %v2062 = vld [vmem:[%s9 + $0x24] sm:$0xf]
        %v2063 = vld [vmem:[%s9 + $0x28] sm:$0xf]
        %v2064 = vld [vmem:[%s9 + $0x2c] sm:$0xf]
        %v2065 = vld [vmem:[%s9 + $0x30] sm:$0xf]
        %v2066 = vld [vmem:[%s9 + $0x34] sm:$0xf]
        %v2067 = vld [vmem:[%s9 + $0x38] sm:$0xf]
        %v2068 = vld [vmem:[%s9 + $0x3c] sm:$0xf]
        %v2069 = vld [vmem:[%s10] sm:$0x1]
        %v2071 = vlaneseq
        %v2072 = vshrl.u32 %v2071, 7
        %v2073 = vsub.s32 0, %v2072
        %v2074 = vrot.slane %v2069, %v2073
        %v2092 = vunpack.c.l.b16 %v2037
        %v2093 = vunpack.c.l.b16 %v2038
        %v2094 = vunpack.c.l.b16 %v2039
        %v2095 = vunpack.c.l.b16 %v2040
        %v2096 = vunpack.c.l.b16 %v2041
        %v2097 = vunpack.c.l.b16 %v2042
        %v2098 = vunpack.c.l.b16 %v2043
        %v2099 = vunpack.c.l.b16 %v2044
        %v2100 = vunpack.c.l.b16 %v2045
        %v2101 = vunpack.c.l.b16 %v2046
        %v2102 = vunpack.c.l.b16 %v2047
        %v2103 = vunpack.c.l.b16 %v2048
        %v2104 = vunpack.c.l.b16 %v2049
        %v2105 = vunpack.c.l.b16 %v2050
        %v2106 = vunpack.c.l.b16 %v2051
        %v2107 = vunpack.c.l.b16 %v2052
        %v2108 = vpack.c.b16 %v2093, %v2092
        %v2109 = vpack.c.b16 %v2095, %v2094
        %v2110 = vpack.c.b16 %v2097, %v2096
        %v2111 = vpack.c.b16 %v2099, %v2098
        %v2112 = vpack.c.b16 %v2101, %v2100
        %v2113 = vpack.c.b16 %v2103, %v2102
        %v2114 = vpack.c.b16 %v2105, %v2104
        %v2115 = vpack.c.b16 %v2107, %v2106
        %v2140 = vunpack.c.l.b16 %v2053
        %v2141 = vunpack.c.l.b16 %v2054
        %v2142 = vunpack.c.l.b16 %v2055
        %v2143 = vunpack.c.l.b16 %v2056
        %v2144 = vunpack.c.l.b16 %v2057
        %v2145 = vunpack.c.l.b16 %v2058
        %v2146 = vunpack.c.l.b16 %v2059
        %v2147 = vunpack.c.l.b16 %v2060
        %v2148 = vunpack.c.l.b16 %v2061
        %v2149 = vunpack.c.l.b16 %v2062
        %v2150 = vunpack.c.l.b16 %v2063
        %v2151 = vunpack.c.l.b16 %v2064
        %v2152 = vunpack.c.l.b16 %v2065
        %v2153 = vunpack.c.l.b16 %v2066
        %v2154 = vunpack.c.l.b16 %v2067
        %v2155 = vunpack.c.l.b16 %v2068
        %v2156 = vpack.c.b16 %v2141, %v2140
        %v2157 = vpack.c.b16 %v2143, %v2142
        %v2158 = vpack.c.b16 %v2145, %v2144
        %v2159 = vpack.c.b16 %v2147, %v2146
        %v2160 = vpack.c.b16 %v2149, %v2148
        %v2161 = vpack.c.b16 %v2151, %v2150
        %v2162 = vpack.c.b16 %v2153, %v2152
        %v2163 = vpack.c.b16 %v2155, %v2154
        %2172 = vmatprep.subr.bf16.mxu0 0
        %2173 = vmatpush1.bf16.msra.mxu0 %v2163
        %2174 = vmatprep.subr.bf16.mxu0 0
        %2175 = vmatpush1.bf16.msra.mxu0 %v2162
        %2176 = vmatprep.subr.bf16.mxu0 0
        %2177 = vmatpush1.bf16.msra.mxu0 %v2161
        %2178 = vmatprep.subr.bf16.mxu0 0
        %2179 = vmatpush1.bf16.msra.mxu0 %v2160
        %2180 = vmatprep.subr.bf16.mxu0 0
        %2181 = vmatpush1.bf16.msra.mxu0 %v2159
        %2182 = vmatprep.subr.bf16.mxu0 0
        %2183 = vmatpush1.bf16.msra.mxu0 %v2158
        %2184 = vmatprep.subr.bf16.mxu0 0
        %2185 = vmatpush1.bf16.msra.mxu0 %v2157
        %2186 = vmatprep.subr.bf16.mxu0 0
        %2187 = vmatpush1.bf16.msra.mxu0 %v2156
        %2188 = vmatprep.subr.bf16.mxu0 0
        %2189 = vmatpush2.bf16.msra.mxu0 0
        %2190 = vmatprep.subr.bf16.mxu0 0
        %2191 = vmatpush2.bf16.msra.mxu0 0
        %2192 = vmatprep.subr.bf16.mxu0 0
        %2193 = vmatpush2.bf16.msra.mxu0 0
        %2194 = vmatprep.subr.bf16.mxu0 0
        %2195 = vmatpush2.bf16.msra.mxu0 0
        %2196 = vmatprep.subr.bf16.mxu0 0
        %2197 = vmatpush2.bf16.msra.mxu0 0
        %2198 = vmatprep.subr.bf16.mxu0 0
        %2199 = vmatpush2.bf16.msra.mxu0 0
        %2200 = vmatprep.subr.bf16.mxu0 0
        %2201 = vmatpush2.bf16.msra.mxu0 0
        %2202 = vmatprep.subr.bf16.mxu0 0
        %2203 = vmatpush2.bf16.msra.mxu0 0
        %2204 = vmatprep.mubr.bf16.mxu0 0
        %2205 = vmatmul.mubr.bf16.gmra.mxu0 %v2108
        %v2206 = vpop.f32.mrf.mxu0
        %v2207 = vadd.f32 %v2074, %v2206
        %v2208 = vpop.f32.mrf.mxu0
        %v2209 = vpop.f32.mrf.mxu0
        %v2210 = vadd.f32 %v2074, %v2209
        %v2211 = vpop.f32.mrf.mxu0
        %2212 = vmatprep.mubr.bf16.mxu0 0
        %2213 = vmatmul.mubr.bf16.gmra.mxu0 %v2109
        %v2214 = vpop.f32.mrf.mxu0
        %v2215 = vadd.f32 %v2074, %v2214
        %v2216 = vpop.f32.mrf.mxu0
        %v2217 = vpop.f32.mrf.mxu0
        %v2218 = vadd.f32 %v2074, %v2217
        %v2219 = vpop.f32.mrf.mxu0
        %2220 = vmatprep.mubr.bf16.mxu0 0
        %2221 = vmatmul.mubr.bf16.gmra.mxu0 %v2110
        %v2222 = vpop.f32.mrf.mxu0
        %v2223 = vadd.f32 %v2074, %v2222
        %v2224 = vpop.f32.mrf.mxu0
        %v2225 = vpop.f32.mrf.mxu0
        %v2226 = vadd.f32 %v2074, %v2225
        %v2227 = vpop.f32.mrf.mxu0
        %2228 = vmatprep.mubr.bf16.mxu0 0
        %2229 = vmatmul.mubr.bf16.gmra.mxu0 %v2111
        %v2230 = vpop.f32.mrf.mxu0
        %v2231 = vadd.f32 %v2074, %v2230
        %v2232 = vpop.f32.mrf.mxu0
        %v2233 = vpop.f32.mrf.mxu0
        %v2234 = vadd.f32 %v2074, %v2233
        %v2235 = vpop.f32.mrf.mxu0
        %2236 = vmatprep.mubr.bf16.mxu0 0
        %2237 = vmatmul.mubr.bf16.gmra.mxu0 %v2112
        %v2238 = vpop.f32.mrf.mxu0
        %v2239 = vadd.f32 %v2074, %v2238
        %v2240 = vpop.f32.mrf.mxu0
        %v2241 = vpop.f32.mrf.mxu0
        %v2242 = vadd.f32 %v2074, %v2241
        %v2243 = vpop.f32.mrf.mxu0
        %2244 = vmatprep.mubr.bf16.mxu0 0
        %2245 = vmatmul.mubr.bf16.gmra.mxu0 %v2113
        %v2246 = vpop.f32.mrf.mxu0
        %v2247 = vadd.f32 %v2074, %v2246
        %v2248 = vpop.f32.mrf.mxu0
        %v2249 = vpop.f32.mrf.mxu0
        %v2250 = vadd.f32 %v2074, %v2249
        %v2251 = vpop.f32.mrf.mxu0
        %2252 = vmatprep.mubr.bf16.mxu0 0
        %2253 = vmatmul.mubr.bf16.gmra.mxu0 %v2114
        %v2254 = vpop.f32.mrf.mxu0
        %v2255 = vadd.f32 %v2074, %v2254
        %v2256 = vpop.f32.mrf.mxu0
        %v2257 = vpop.f32.mrf.mxu0
        %v2258 = vadd.f32 %v2074, %v2257
        %v2259 = vpop.f32.mrf.mxu0
        %2260 = vmatprep.mubr.bf16.mxu0 0
        %2261 = vmatmul.mubr.bf16.gmra.mxu0 %v2115
        %v2262 = vpop.f32.mrf.mxu0
        %v2263 = vadd.f32 %v2074, %v2262
        %v2264 = vpop.f32.mrf.mxu0
        %v2265 = vpop.f32.mrf.mxu0
        %v2266 = vadd.f32 %v2074, %v2265
        %v2267 = vpop.f32.mrf.mxu0
        %2268 = vdwg.mxu0
        %2269 = vst [vmem:[%s505] sm:$0xff] %v2207
        %2270 = vst [vmem:[%s505 + $0x8] sm:$0xff] %v2210
        %2271 = vst [vmem:[%s505 + $0x10] sm:$0xff] %v2215
        %2272 = vst [vmem:[%s505 + $0x18] sm:$0xff] %v2218
        %2273 = vst [vmem:[%s505 + $0x20] sm:$0xff] %v2223
        %2274 = vst [vmem:[%s505 + $0x28] sm:$0xff] %v2226
        %2275 = vst [vmem:[%s505 + $0x30] sm:$0xff] %v2231
        %2276 = vst [vmem:[%s505 + $0x38] sm:$0xff] %v2234
        %2277 = vst [vmem:[%s505 + $0x40] sm:$0xff] %v2239
        %2278 = vst [vmem:[%s505 + $0x48] sm:$0xff] %v2242
        %2279 = vst [vmem:[%s505 + $0x50] sm:$0xff] %v2247
        %2280 = vst [vmem:[%s505 + $0x58] sm:$0xff] %v2250
        %2281 = vst [vmem:[%s505 + $0x60] sm:$0xff] %v2255
        %2282 = vst [vmem:[%s505 + $0x68] sm:$0xff] %v2258
        %2283 = vst [vmem:[%s505 + $0x70] sm:$0xff] %v2263
        %2284 = vst [vmem:[%s505 + $0x78] sm:$0xff] %v2266
        %s2285 = sand.u32 %s269, 1
        %s2286 = sand.u32 %s269, 1
        %s2287 = smul.addr %s2286, 128
        %s2288 = scalar_lea.vmem [#allocation7], %s2287
        %p2289 = scmp.lt.s32.totalorder %s25, 1
        %s2290 = scalar_select %p2289, %s25, 1
        %s2291 = scalar_lea.vmem %s12, %s2290
        // Predicated region
        $region103: #{slmums_forward.1} parent=97 // pred_check
          %p2292 = pneg %p279
        $region104: #{slmums_forward.1} parent=97 // pred_check_branch
          %2294 = sbr.rel (%p2292) target = $region106
        $region105: #{slmums_forward.1} parent=97 // pred_region
          %s2295 = smul.u32 2, %s25
          %s2296 = smul.addr %s2295, 8
          %s2297 = scalar_lea.vmem %s11, %s2296
          // Predicated region
          $region107: #{slmums_forward.1} parent=105 // pred_check
            _
          $region108: #{slmums_forward.1} parent=105 // pred_check_branch
            %2299 = sbr.rel (0) target = $region110
          $region109: #{slmums_forward.1} parent=105 // pred_region
            // Predicated region
            $region111: #{slmums_forward.1} parent=109 // pred_check
              _
            $region112: #{slmums_forward.1} parent=109 // pred_check_branch
              %2301 = sbr.rel (0) target = $region114
            $region113: #{slmums_forward.1} parent=109 // pred_region
              // Predicated region
              $region126: #{slmums_forward.1} parent=113 // pred_check
                _
              $region127: #{slmums_forward.1} parent=113 // pred_check_branch
                %2347 = sbr.rel (0) target = $region129
              $region128: #{slmums_forward.1} parent=113 // pred_region
                loop: start=0, step=1, limit=1
                $region130: #{slmums_forward.1} parent=128 // loop_pre_header
                  _
                $region131: #{slmums_forward.1} parent=128 // loop_header
                  %s2349 = sphi 0, %s2353
                  %p2350 = scmp.ge.s32.totalorder %s2349, 1
                  %s2354 = sphi %s2288, %s2288
                  %s2355 = sphi %s2297, %s2297
                $region132: #{slmums_forward.1} parent=128 // loop_header_branch
                  %2352 = sbr.rel (%p2350) target = $region136
                $region133: #{slmums_forward.1} parent=128 // loop_body
                  %v2356 = vld [vmem:[%s2354] sm:$0xff]
                  %2357 = vst [vmem:[%s2355] sm:$0xff] %v2356
                  %v2358 = vld [vmem:[%s2354 + $0x8] sm:$0xff]
                  %2359 = vst [vmem:[%s2355 + $0x8] sm:$0xff] %v2358
                  %v2360 = vld [vmem:[%s2354 + $0x10] sm:$0xff]
                  %2361 = vst [vmem:[%s2355 + $0x20] sm:$0xff] %v2360
                  %v2362 = vld [vmem:[%s2354 + $0x18] sm:$0xff]
                  %2363 = vst [vmem:[%s2355 + $0x28] sm:$0xff] %v2362
                  %v2364 = vld [vmem:[%s2354 + $0x20] sm:$0xff]
                  %2365 = vst [vmem:[%s2355 + $0x40] sm:$0xff] %v2364
                  %v2366 = vld [vmem:[%s2354 + $0x28] sm:$0xff]
                  %2367 = vst [vmem:[%s2355 + $0x48] sm:$0xff] %v2366
                  %v2368 = vld [vmem:[%s2354 + $0x30] sm:$0xff]
                  %2369 = vst [vmem:[%s2355 + $0x60] sm:$0xff] %v2368
                  %v2370 = vld [vmem:[%s2354 + $0x38] sm:$0xff]
                  %2371 = vst [vmem:[%s2355 + $0x68] sm:$0xff] %v2370
                  %v2372 = vld [vmem:[%s2354 + $0x40] sm:$0xff]
                  %2373 = vst [vmem:[%s2355 + $0x80] sm:$0xff] %v2372
                  %v2374 = vld [vmem:[%s2354 + $0x48] sm:$0xff]
                  %2375 = vst [vmem:[%s2355 + $0x88] sm:$0xff] %v2374
                  %v2376 = vld [vmem:[%s2354 + $0x50] sm:$0xff]
                  %2377 = vst [vmem:[%s2355 + $0xa0] sm:$0xff] %v2376
                  %v2378 = vld [vmem:[%s2354 + $0x58] sm:$0xff]
                  %2379 = vst [vmem:[%s2355 + $0xa8] sm:$0xff] %v2378
                  %v2380 = vld [vmem:[%s2354 + $0x60] sm:$0xff]
                  %2381 = vst [vmem:[%s2355 + $0xc0] sm:$0xff] %v2380
                  %v2382 = vld [vmem:[%s2354 + $0x68] sm:$0xff]
                  %2383 = vst [vmem:[%s2355 + $0xc8] sm:$0xff] %v2382
                  %v2384 = vld [vmem:[%s2354 + $0x70] sm:$0xff]
                  %2385 = vst [vmem:[%s2355 + $0xe0] sm:$0xff] %v2384
                  %v2386 = vld [vmem:[%s2354 + $0x78] sm:$0xff]
                  %2387 = vst [vmem:[%s2355 + $0xe8] sm:$0xff] %v2386
                $region134: #{slmums_forward.1} parent=128 // loop_footer
                  %s2353 = sadd.s32 1, %s2349
                $region135: #{slmums_forward.1} parent=128 // loop_footer_branch
                  %2348 = sbr.rel target = $region131
                $region136: #{slmums_forward.1} parent=128 // loop_exit
                  _
              $region129: #{slmums_forward.1} parent=113 // pred_fallthru
                _
              // Predicated region
              $region137: #{slmums_forward.1} parent=113 // pred_check
                _
              $region138: #{slmums_forward.1} parent=113 // pred_check_branch
                %2389 = sbr.rel target = $region140
              $region139: #{slmums_forward.1} parent=113 // pred_region
                _
              $region140: #{slmums_forward.1} parent=113 // pred_fallthru
                _
            $region114: #{slmums_forward.1} parent=109 // pred_fallthru
              _
            // Predicated region
            $region115: #{slmums_forward.1} parent=109 // pred_check
              _
            $region116: #{slmums_forward.1} parent=109 // pred_check_branch
              %2303 = sbr.rel target = $region118
            $region117: #{slmums_forward.1} parent=109 // pred_region
              %s2305 = ssub.s32 256, 1
              loop: start=0, step=1, limit=1
              $region119: #{slmums_forward.1} parent=117 // loop_pre_header
                _
              $region120: #{slmums_forward.1} parent=117 // loop_header
                %s2307 = sphi 0, %s2311
                %p2308 = scmp.ge.s32.totalorder %s2307, 1
                %s2312 = sphi %s2288, %s2288
                %s2313 = sphi %s2297, %s2297
              $region121: #{slmums_forward.1} parent=117 // loop_header_branch
                %2310 = sbr.rel (%p2308) target = $region125
              $region122: #{slmums_forward.1} parent=117 // loop_body
                %v2314 = vld [vmem:[%s2312] sm:%s2305]
                %2315 = vst [vmem:[%s2313] sm:%s2305] %v2314
                %v2316 = vld [vmem:[%s2312 + $0x8] sm:%s2305]
                %2317 = vst [vmem:[%s2313 + $0x8] sm:%s2305] %v2316
                %v2318 = vld [vmem:[%s2312 + $0x10] sm:%s2305]
                %2319 = vst [vmem:[%s2313 + $0x20] sm:%s2305] %v2318
                %v2320 = vld [vmem:[%s2312 + $0x18] sm:%s2305]
                %2321 = vst [vmem:[%s2313 + $0x28] sm:%s2305] %v2320
                %v2322 = vld [vmem:[%s2312 + $0x20] sm:%s2305]
                %2323 = vst [vmem:[%s2313 + $0x40] sm:%s2305] %v2322
                %v2324 = vld [vmem:[%s2312 + $0x28] sm:%s2305]
                %2325 = vst [vmem:[%s2313 + $0x48] sm:%s2305] %v2324
                %v2326 = vld [vmem:[%s2312 + $0x30] sm:%s2305]
                %2327 = vst [vmem:[%s2313 + $0x60] sm:%s2305] %v2326
                %v2328 = vld [vmem:[%s2312 + $0x38] sm:%s2305]
                %2329 = vst [vmem:[%s2313 + $0x68] sm:%s2305] %v2328
                %v2330 = vld [vmem:[%s2312 + $0x40] sm:%s2305]
                %2331 = vst [vmem:[%s2313 + $0x80] sm:%s2305] %v2330
                %v2332 = vld [vmem:[%s2312 + $0x48] sm:%s2305]
                %2333 = vst [vmem:[%s2313 + $0x88] sm:%s2305] %v2332
                %v2334 = vld [vmem:[%s2312 + $0x50] sm:%s2305]
                %2335 = vst [vmem:[%s2313 + $0xa0] sm:%s2305] %v2334
                %v2336 = vld [vmem:[%s2312 + $0x58] sm:%s2305]
                %2337 = vst [vmem:[%s2313 + $0xa8] sm:%s2305] %v2336
                %v2338 = vld [vmem:[%s2312 + $0x60] sm:%s2305]
                %2339 = vst [vmem:[%s2313 + $0xc0] sm:%s2305] %v2338
                %v2340 = vld [vmem:[%s2312 + $0x68] sm:%s2305]
                %2341 = vst [vmem:[%s2313 + $0xc8] sm:%s2305] %v2340
                %v2342 = vld [vmem:[%s2312 + $0x70] sm:%s2305]
                %2343 = vst [vmem:[%s2313 + $0xe0] sm:%s2305] %v2342
                %v2344 = vld [vmem:[%s2312 + $0x78] sm:%s2305]
                %2345 = vst [vmem:[%s2313 + $0xe8] sm:%s2305] %v2344
              $region123: #{slmums_forward.1} parent=117 // loop_footer
                %s2311 = sadd.s32 1, %s2307
              $region124: #{slmums_forward.1} parent=117 // loop_footer_branch
                %2306 = sbr.rel target = $region120
              $region125: #{slmums_forward.1} parent=117 // loop_exit
                _
            $region118: #{slmums_forward.1} parent=109 // pred_fallthru
              _
          $region110: #{slmums_forward.1} parent=105 // pred_fallthru
            _
          %2390 = vnop
        $region106: #{slmums_forward.1} parent=97 // pred_fallthru
          _
        // Predicated region
        $region141: #{slmums_forward.1} parent=97 // pred_check
          %p2391 = pneg %p305
        $region142: #{slmums_forward.1} parent=97 // pred_check_branch
          %2393 = sbr.rel (%p2391) target = $region144
        $region143: #{slmums_forward.1} parent=97 // pred_region
          _
        $region144: #{slmums_forward.1} parent=97 // pred_fallthru
          _
      $region98: #{slmums_forward.1} parent=5 // pred_fallthru
        _
      %p2394 = scmp.le.s32.totalorder 2, %s20
      // Predicated region
      $region145: #{slmums_forward.1} parent=5 // pred_check
        %p2395 = pneg %p2394
      $region146: #{slmums_forward.1} parent=5 // pred_check_branch
        %2397 = sbr.rel (%p2395) target = $region148
      $region147: #{slmums_forward.1} parent=5 // pred_region
        %s2398 = ssub.s32 %s20, 2
        // Predicated region
        $region149: #{slmums_forward.1} parent=147 // pred_check
          %p2399 = pneg %p285
        $region150: #{slmums_forward.1} parent=147 // pred_check_branch
          %2401 = sbr.rel (%p2399) target = $region152
        $region151: #{slmums_forward.1} parent=147 // pred_region
          %s2402 = sand.u32 %s270, 1
          %s2403 = sand.u32 %s270, 1
          %s2404 = smul.addr %s2403, 128
          %s2405 = scalar_lea.vmem [#allocation7], %s2404
        $region152: #{slmums_forward.1} parent=147 // pred_fallthru
          _
        // Predicated region
        $region153: #{slmums_forward.1} parent=147 // pred_check
          %p2406 = pneg %p311
        $region154: #{slmums_forward.1} parent=147 // pred_check_branch
          %2408 = sbr.rel (%p2406) target = $region156
        $region155: #{slmums_forward.1} parent=147 // pred_region
          %p2409 = scmp.lt.s32.totalorder %s26, 1
          %s2410 = scalar_select %p2409, %s26, 1
          %s2411 = scalar_lea.vmem %s12, %s2410
        $region156: #{slmums_forward.1} parent=147 // pred_fallthru
          _
      $region148: #{slmums_forward.1} parent=5 // pred_fallthru
        _
    $region6: #{slmums_forward.1} parent=1 // loop_footer
      %s24 = sadd.s32 1, %s20
    $region7: #{slmums_forward.1} parent=1 // loop_footer_branch
      %19 = sbr.rel target = $region3
    $region8: #{slmums_forward.1} parent=1 // loop_exit
      _

</llo_original>
